<compile_context>
chip_gen: v7x
topology: tpu7x:2x2x1
jax: 0.10.0
libtpu: 0.0.40
codegen_flags: <defaults>
</compile_context>

<pallas_src>
import functools
import math

import jax
import jax.numpy as jnp
from jax import lax
from jax.experimental import pallas as pl
from jax.experimental.pallas import tpu as pltpu

# ----- bert-tiny config -----------------------------------------------------
VOCAB = 30522
MAX_POS = 512
TYPE_VOCAB = 2
HIDDEN = 128
N_LAYERS = 2
N_HEADS = 2
HEAD_DIM = HIDDEN // N_HEADS          # 64
INTERMEDIATE = 512
LN_EPS = 1e-12
NUM_FEATURES = 64
FC_PAD = 128                          # pad final FC to a full 128-lane output
QKV_PAD = 6 * HIDDEN                  # head-padded fused QKV width (Q|K|V, 2x128 each)

PER_LAYER_REFS = 12
LAYER_KEYS = ("wqkv", "bqkv", "wo", "bo", "ln1_g", "ln1_b",
              "w1", "b1", "w2", "b2", "ln2_g", "ln2_b")


# ----- in-kernel helpers (operate on values, all math in f32) ----------------
def _layernorm(x, g, b):
    mean = jnp.mean(x, axis=-1, keepdims=True)
    xc = x - mean
    var = jnp.mean(xc * xc, axis=-1, keepdims=True)
    return xc * lax.rsqrt(var + LN_EPS) * g + b


def _gelu_tanh(x):
    # TODO(synk): HF bert-tiny uses exact erf-GELU; tanh approximation gives ~1e-3 drift.
    c = math.sqrt(2.0 / math.pi)
    return 0.5 * x * (1.0 + jnp.tanh(c * (x + 0.044715 * x * x * x)))


def _bf16(x):
    return x.astype(jnp.bfloat16)


# ----- the single fused kernel ------------------------------------------------
def _fused_kernel(*refs, TB, S):
    # refs = [emb, mask_bias, emb_ln_g, emb_ln_b, <layer0 x12>, <layer1 x12>, fc_w, fc_b, out]
    out_ref = refs[-1]                     # (TB, FC_PAD) f32
    H = HIDDEN
    M = TB * S

    emb = refs[0][...]                     # (M, H) f32
    # Additive key mask, broadcast ONCE and reused by every layer/head
    # (padded query rows are not masked -- only CLS row is consumed downstream).
    attn_bias = jnp.broadcast_to(refs[1][...].reshape(TB, 1, S), (TB, S, S))

    h = _layernorm(emb, refs[2][...], refs[3][...])          # embedding LayerNorm

    for l in range(N_LAYERS):
        p = 4 + l * PER_LAYER_REFS
        wqkv = refs[p + 0][...]   # (H, 6H) bf16, head-padded layout (see pack_params)
        bqkv = refs[p + 1][...]   # (1, 6H) f32
        wo = refs[p + 2][...]     # (H, H)  bf16
        bo = refs[p + 3][...]     # (1, H)  f32
        ln1g = refs[p + 4][...]
        ln1b = refs[p + 5][...]
        w1 = refs[p + 6][...]     # (H, I)  bf16
        b1 = refs[p + 7][...]     # (1, I)  f32
        w2 = refs[p + 8][...]     # (I, H)  bf16
        b2 = refs[p + 9][...]     # (1, H)  f32
        ln2g = refs[p + 10][...]
        ln2b = refs[p + 11][...]

        # Fused Q|K|V projection: one (M,128) x (128,768) matmul.
        # The 1/sqrt(head_dim) score scale is already folded into the Q columns.
        qkv = jnp.dot(_bf16(h), wqkv, preferred_element_type=jnp.float32) + bqkv
        qkv = _bf16(qkv.reshape(TB, S, QKV_PAD))   # cast ONCE; head slices below are
                                                   # 128-lane aligned -> free views

        # Batched attention (batch dim = TB rows of this block). Each head's V is
        # padded so its 64 real lanes sit in the half it occupies in the final
        # 128-wide context -> summing the two head contexts IS the concatenation.
        ctx = None
        for hd in range(N_HEADS):
            q = qkv[:, :, hd * H:(hd + 1) * H]                       # (TB,S,128)
            k = qkv[:, :, 2 * H + hd * H:2 * H + (hd + 1) * H]       # (TB,S,128)
            v = qkv[:, :, 4 * H + hd * H:4 * H + (hd + 1) * H]       # (TB,S,128)
            s = jnp.einsum("bqd,bkd->bqk", q, k,
                           preferred_element_type=jnp.float32) + attn_bias
            m = jnp.max(s, axis=-1, keepdims=True)
            e = jnp.exp(s - m)
            inv = pl.reciprocal(jnp.sum(e, axis=-1, keepdims=True), approx=True)
            c = jnp.einsum("bqk,bkd->bqd", _bf16(e * inv), v,
                           preferred_element_type=jnp.float32)       # (TB,S,128)
            ctx = c if ctx is None else ctx + c        # heads occupy disjoint lanes
        ctx = ctx.reshape(M, H)                        # lane-dense, no scratch

        attn = jnp.dot(_bf16(ctx), wo, preferred_element_type=jnp.float32) + bo
        h1 = _layernorm(attn + h, ln1g, ln1b)          # residual + LN

        ff = jnp.dot(_bf16(h1), w1, preferred_element_type=jnp.float32) + b1
        ff = _gelu_tanh(ff)
        ff = jnp.dot(_bf16(ff), w2, preferred_element_type=jnp.float32) + b2
        h = _layernorm(ff + h1, ln2g, ln2b)

    # Batched CLS pooling (+ identity dropout) + final FC:
    # ONE (TB,128)x(128,128) matmul and ONE unmasked lane-dense store.
    # TODO(synk): training-mode dropout (random mask + 1/(1-p) scale) not implemented.
    fc_w = refs[4 + N_LAYERS * PER_LAYER_REFS][...]          # (H, FC_PAD) bf16
    fc_b = refs[4 + N_LAYERS * PER_LAYER_REFS + 1][...]      # (1, FC_PAD) f32
    cls = h.reshape(TB, S, H)[:, 0, :]                       # (TB, H)
    out_ref[...] = jnp.dot(_bf16(cls), fc_w,
                           preferred_element_type=jnp.float32) + fc_b


# ----- model forward (one pallas_call per forward) -----------------------------
def light_lyric_processor(packed, input_ids, attention_mask):
    B, S = input_ids.shape

    # Batch-block tiling: TB*S rows per grid step.  For production, pick TB so that
    # TB*S >= 256-512 (v6e/v7x MXU fill) and TB is a multiple of 8; the batch axis
    # is "parallel" so v7x's two TensorCores split it.
    TB = B if B <= 8 else 8
    n_blocks = -(-B // TB)
    B_pad = n_blocks * TB

    # Embedding lookups are gather glue, not the hot path -> plain JAX.
    emb = (packed["word_emb"][input_ids]
           + packed["pos_emb"][:S][None, :, :]
           + packed["type_emb"][0][None, None, :])
    emb2 = emb.reshape(B * S, HIDDEN).astype(jnp.float32)
    # BERT extended attention mask: (1 - mask) * -10000 added to the logits.
    bias = (1.0 - attention_mask.astype(jnp.float32)) * -10000.0   # (B, S)

    if B_pad != B:
        emb2 = jnp.pad(emb2, ((0, (B_pad - B) * S), (0, 0)))
        bias = jnp.pad(bias, ((0, B_pad - B), (0, 0)))

    weights = [packed["emb_ln_g"], packed["emb_ln_b"]]
    for lp in packed["layers"]:
        weights += [lp[k] for k in LAYER_KEYS]
    weights += [packed["fc_w"], packed["fc_b"]]

    flat = [emb2, bias] + weights
    in_specs = [pl.BlockSpec((TB * S, HIDDEN), lambda i: (i, 0)),
                pl.BlockSpec((TB, S), lambda i: (i, 0))]
    # Constant index_map -> weights stay VMEM-resident across grid steps (no re-DMA).
    in_specs += [pl.BlockSpec(w.shape, lambda i: (0, 0)) for w in weights]

    # Advisory cost estimate so XLA schedules the embedding gather around the kernel.
    M = B_pad * S
    flops = N_LAYERS * (
        2 * M * HIDDEN * QKV_PAD
        + 2 * 2 * B_pad * N_HEADS * S * S * HIDDEN
        + 2 * M * HIDDEN * HIDDEN
        + 2 * 2 * M * HIDDEN * INTERMEDIATE
    ) + 2 * B_pad * HIDDEN * FC_PAD
    transcendentals = N_LAYERS * (B_pad * N_HEADS * S * S      # exp
                                  + M * INTERMEDIATE           # tanh (gelu)
                                  + 2 * M                      # rsqrt (2 LNs)
                                  + B_pad * N_HEADS * S)       # reciprocal
    weight_bytes = sum(int(w.size) * w.dtype.itemsize for w in weights)
    bytes_accessed = int(emb2.size) * 4 + int(bias.size) * 4 + weight_bytes \
        + B_pad * FC_PAD * 4

    out = pl.pallas_call(
        functools.partial(_fused_kernel, TB=TB, S=S),
        out_shape=jax.ShapeDtypeStruct((B_pad, FC_PAD), jnp.float32),
        grid=(n_blocks,),
        in_specs=in_specs,
        out_specs=pl.BlockSpec((TB, FC_PAD), lambda i: (i, 0)),
        compiler_params=pltpu.CompilerParams(
            dimension_semantics=("parallel",)),
        cost_estimate=pl.CostEstimate(flops=int(flops),
                                      transcendentals=int(transcendentals),
                                      bytes_accessed=int(bytes_accessed)),
    )(*flat)
    return out[:B, :NUM_FEATURES]


# ----- deterministic parameter init (torch-like layout) ------------------------
def init_params(key):
    keys = iter(jax.random.split(key, 8 + N_LAYERS * 16))

    def nrm(shape, std=0.02):
        return std * jax.random.normal(next(keys), shape, dtype=jnp.float32)

    params = {
        "word_emb": nrm((VOCAB, HIDDEN)),
        "pos_emb": nrm((MAX_POS, HIDDEN)),
        "type_emb": nrm((TYPE_VOCAB, HIDDEN)),
        "emb_ln_g": jnp.ones((HIDDEN,), jnp.float32),
        "emb_ln_b": jnp.zeros((HIDDEN,), jnp.float32),
        "fc_w": nrm((HIDDEN, NUM_FEATURES)),
        "fc_b": jnp.zeros((NUM_FEATURES,), jnp.float32),
        "layers": [],
    }
    for _ in range(N_LAYERS):
        params["layers"].append({
            "wq": nrm((HIDDEN, HIDDEN)), "bq": jnp.zeros((HIDDEN,), jnp.float32),
            "wk": nrm((HIDDEN, HIDDEN)), "bk": jnp.zeros((HIDDEN,), jnp.float32),
            "wv": nrm((HIDDEN, HIDDEN)), "bv": jnp.zeros((HIDDEN,), jnp.float32),
            "wo": nrm((HIDDEN, HIDDEN)), "bo": jnp.zeros((HIDDEN,), jnp.float32),
            "ln1_g": jnp.ones((HIDDEN,), jnp.float32),
            "ln1_b": jnp.zeros((HIDDEN,), jnp.float32),
            "w1": nrm((HIDDEN, INTERMEDIATE)),
            "b1": jnp.zeros((INTERMEDIATE,), jnp.float32),
            "w2": nrm((INTERMEDIATE, HIDDEN)),
            "b2": jnp.zeros((HIDDEN,), jnp.float32),
            "ln2_g": jnp.ones((HIDDEN,), jnp.float32),
            "ln2_b": jnp.zeros((HIDDEN,), jnp.float32),
        })
    return params


# ----- pack params into the fused-kernel layout --------------------------------
def pack_params(p):
    def row(v):
        return v.reshape(1, -1).astype(jnp.float32)

    packed = {
        "word_emb": p["word_emb"],
        "pos_emb": p["pos_emb"],
        "type_emb": p["type_emb"],
        "emb_ln_g": row(p["emb_ln_g"]),
        "emb_ln_b": row(p["emb_ln_b"]),
        "layers": [],
    }

    # Head-padded fused QKV layout (all 128-lane aligned):
    #   cols [hd*128,        hd*128+64)         : Q head hd  (pre-scaled by 1/8)
    #   cols [256 + hd*128,  256 + hd*128+64)   : K head hd
    #   cols [512 + hd*192,  512 + hd*192+64)   : V head hd  (head 0 low half of its
    #                                             segment, head 1 high half, so the
    #                                             summed head contexts concatenate)
    scale = 1.0 / math.sqrt(HEAD_DIM)   # exactly 0.125 -> bit-identical fold in bf16
    for lp in p["layers"]:
        wqkv = jnp.zeros((HIDDEN, QKV_PAD), jnp.float32)
        bqkv = jnp.zeros((QKV_PAD,), jnp.float32)
        for hd in range(N_HEADS):
            c = hd * HEAD_DIM
            qo = hd * HIDDEN
            wqkv = wqkv.at[:, qo:qo + HEAD_DIM].set(lp["wq"][:, c:c + HEAD_DIM] * scale)
            bqkv = bqkv.at[qo:qo + HEAD_DIM].set(lp["bq"][c:c + HEAD_DIM] * scale)
            ko = 2 * HIDDEN + hd * HIDDEN
            wqkv = wqkv.at[:, ko:ko + HEAD_DIM].set(lp["wk"][:, c:c + HEAD_DIM])
            bqkv = bqkv.at[ko:ko + HEAD_DIM].set(lp["bk"][c:c + HEAD_DIM])
            vo = 4 * HIDDEN + hd * HIDDEN + hd * HEAD_DIM
            wqkv = wqkv.at[:, vo:vo + HEAD_DIM].set(lp["wv"][:, c:c + HEAD_DIM])
            bqkv = bqkv.at[vo:vo + HEAD_DIM].set(lp["bv"][c:c + HEAD_DIM])

        packed["layers"].append({
            "wqkv": wqkv.astype(jnp.bfloat16),
            "bqkv": bqkv.reshape(1, -1),
            "wo": lp["wo"].astype(jnp.bfloat16), "bo": row(lp["bo"]),
            "ln1_g": row(lp["ln1_g"]), "ln1_b": row(lp["ln1_b"]),
            "w1": lp["w1"].astype(jnp.bfloat16), "b1": row(lp["b1"]),
            "w2": lp["w2"].astype(jnp.bfloat16), "b2": row(lp["b2"]),
            "ln2_g": row(lp["ln2_g"]), "ln2_b": row(lp["ln2_b"]),
        })

    fc_w = jnp.zeros((HIDDEN, FC_PAD), jnp.float32).at[:, :NUM_FEATURES].set(p["fc_w"])
    fc_b = jnp.zeros((FC_PAD,), jnp.float32).at[:NUM_FEATURES].set(p["fc_b"])
    packed["fc_w"] = fc_w.astype(jnp.bfloat16)
    packed["fc_b"] = fc_b.reshape(1, -1)
    return packed


if __name__ == "__main__":
    key = jax.random.PRNGKey(0)
    pkey, ikey = jax.random.split(key)

    params = init_params(pkey)
    packed = pack_params(params)

    B, S = 2, 8
    input_ids = jax.random.randint(ikey, (B, S), 0, VOCAB, dtype=jnp.int32)
    attention_mask = jnp.ones((B, S), dtype=jnp.int32)
    attention_mask = attention_mask.at[1, -2:].set(0)   # some padded positions

    forward = jax.jit(light_lyric_processor)
    out = forward(packed, input_ids, attention_mask)
    out = jax.block_until_ready(out)
    assert out.shape == (B, NUM_FEATURES) and out.dtype == jnp.float32
    assert bool(jnp.all(jnp.isfinite(out)))
    print("KERNEL_OK")
</pallas_src>

<mosaic_0001>
module attributes {stable_mosaic.version = 11 : i64} {
  func.func @_fused_kernel(%arg0: i32, %arg1: memref<16x128xf32, #tpu.memory_space<vmem>>, %arg2: memref<2x8xf32, #tpu.memory_space<vmem>>, %arg3: memref<1x128xf32, #tpu.memory_space<vmem>>, %arg4: memref<1x128xf32, #tpu.memory_space<vmem>>, %arg5: memref<128x768xbf16, #tpu.memory_space<vmem>>, %arg6: memref<1x768xf32, #tpu.memory_space<vmem>>, %arg7: memref<128x128xbf16, #tpu.memory_space<vmem>>, %arg8: memref<1x128xf32, #tpu.memory_space<vmem>>, %arg9: memref<1x128xf32, #tpu.memory_space<vmem>>, %arg10: memref<1x128xf32, #tpu.memory_space<vmem>>, %arg11: memref<128x512xbf16, #tpu.memory_space<vmem>>, %arg12: memref<1x512xf32, #tpu.memory_space<vmem>>, %arg13: memref<512x128xbf16, #tpu.memory_space<vmem>>, %arg14: memref<1x128xf32, #tpu.memory_space<vmem>>, %arg15: memref<1x128xf32, #tpu.memory_space<vmem>>, %arg16: memref<1x128xf32, #tpu.memory_space<vmem>>, %arg17: memref<128x768xbf16, #tpu.memory_space<vmem>>, %arg18: memref<1x768xf32, #tpu.memory_space<vmem>>, %arg19: memref<128x128xbf16, #tpu.memory_space<vmem>>, %arg20: memref<1x128xf32, #tpu.memory_space<vmem>>, %arg21: memref<1x128xf32, #tpu.memory_space<vmem>>, %arg22: memref<1x128xf32, #tpu.memory_space<vmem>>, %arg23: memref<128x512xbf16, #tpu.memory_space<vmem>>, %arg24: memref<1x512xf32, #tpu.memory_space<vmem>>, %arg25: memref<512x128xbf16, #tpu.memory_space<vmem>>, %arg26: memref<1x128xf32, #tpu.memory_space<vmem>>, %arg27: memref<1x128xf32, #tpu.memory_space<vmem>>, %arg28: memref<1x128xf32, #tpu.memory_space<vmem>>, %arg29: memref<128x128xbf16, #tpu.memory_space<vmem>>, %arg30: memref<1x128xf32, #tpu.memory_space<vmem>>, %arg31: memref<2x128xf32, #tpu.memory_space<vmem>>) attributes {dimension_semantics = [#tpu.dimension_semantics<parallel>], iteration_bounds = array<i64: 1>, scalar_prefetch = 0 : i64, scratch_operands = 0 : i64, tpu.core_type = #tpu.core_type<tc>, window_params = [{transform_indices = @transform_0, window_bounds = array<i64: 16, 128>}, {transform_indices = @transform_1, window_bounds = array<i64: 2, 8>}, {pipeline_mode = #tpu.pipeline_mode<synchronous>, transform_indices = @transform_2, window_bounds = array<i64: 1, 128>}, {pipeline_mode = #tpu.pipeline_mode<synchronous>, transform_indices = @transform_3, window_bounds = array<i64: 1, 128>}, {pipeline_mode = #tpu.pipeline_mode<synchronous>, transform_indices = @transform_4, window_bounds = array<i64: 128, 768>}, {pipeline_mode = #tpu.pipeline_mode<synchronous>, transform_indices = @transform_5, window_bounds = array<i64: 1, 768>}, {pipeline_mode = #tpu.pipeline_mode<synchronous>, transform_indices = @transform_6, window_bounds = array<i64: 128, 128>}, {pipeline_mode = #tpu.pipeline_mode<synchronous>, transform_indices = @transform_7, window_bounds = array<i64: 1, 128>}, {pipeline_mode = #tpu.pipeline_mode<synchronous>, transform_indices = @transform_8, window_bounds = array<i64: 1, 128>}, {pipeline_mode = #tpu.pipeline_mode<synchronous>, transform_indices = @transform_9, window_bounds = array<i64: 1, 128>}, {pipeline_mode = #tpu.pipeline_mode<synchronous>, transform_indices = @transform_10, window_bounds = array<i64: 128, 512>}, {pipeline_mode = #tpu.pipeline_mode<synchronous>, transform_indices = @transform_11, window_bounds = array<i64: 1, 512>}, {pipeline_mode = #tpu.pipeline_mode<synchronous>, transform_indices = @transform_12, window_bounds = array<i64: 512, 128>}, {pipeline_mode = #tpu.pipeline_mode<synchronous>, transform_indices = @transform_13, window_bounds = array<i64: 1, 128>}, {pipeline_mode = #tpu.pipeline_mode<synchronous>, transform_indices = @transform_14, window_bounds = array<i64: 1, 128>}, {pipeline_mode = #tpu.pipeline_mode<synchronous>, transform_indices = @transform_15, window_bounds = array<i64: 1, 128>}, {pipeline_mode = #tpu.pipeline_mode<synchronous>, transform_indices = @transform_16, window_bounds = array<i64: 128, 768>}, {pipeline_mode = #tpu.pipeline_mode<synchronous>, transform_indices = @transform_17, window_bounds = array<i64: 1, 768>}, {pipeline_mode = #tpu.pipeline_mode<synchronous>, transform_indices = @transform_18, window_bounds = array<i64: 128, 128>}, {pipeline_mode = #tpu.pipeline_mode<synchronous>, transform_indices = @transform_19, window_bounds = array<i64: 1, 128>}, {pipeline_mode = #tpu.pipeline_mode<synchronous>, transform_indices = @transform_20, window_bounds = array<i64: 1, 128>}, {pipeline_mode = #tpu.pipeline_mode<synchronous>, transform_indices = @transform_21, window_bounds = array<i64: 1, 128>}, {pipeline_mode = #tpu.pipeline_mode<synchronous>, transform_indices = @transform_22, window_bounds = array<i64: 128, 512>}, {pipeline_mode = #tpu.pipeline_mode<synchronous>, transform_indices = @transform_23, window_bounds = array<i64: 1, 512>}, {pipeline_mode = #tpu.pipeline_mode<synchronous>, transform_indices = @transform_24, window_bounds = array<i64: 512, 128>}, {pipeline_mode = #tpu.pipeline_mode<synchronous>, transform_indices = @transform_25, window_bounds = array<i64: 1, 128>}, {pipeline_mode = #tpu.pipeline_mode<synchronous>, transform_indices = @transform_26, window_bounds = array<i64: 1, 128>}, {pipeline_mode = #tpu.pipeline_mode<synchronous>, transform_indices = @transform_27, window_bounds = array<i64: 1, 128>}, {pipeline_mode = #tpu.pipeline_mode<synchronous>, transform_indices = @transform_28, window_bounds = array<i64: 128, 128>}, {pipeline_mode = #tpu.pipeline_mode<synchronous>, transform_indices = @transform_29, window_bounds = array<i64: 1, 128>}, {transform_indices = @transform_30, window_bounds = array<i64: 2, 128>}]} {
    %c0 = arith.constant 0 : index
    %c0_0 = arith.constant 0 : index
    %0 = vector.load %arg1[%c0, %c0_0] : memref<16x128xf32, #tpu.memory_space<vmem>>, vector<16x128xf32>
    %c0_1 = arith.constant 0 : index
    %c0_2 = arith.constant 0 : index
    %1 = vector.load %arg2[%c0_1, %c0_2] : memref<2x8xf32, #tpu.memory_space<vmem>>, vector<2x8xf32>
    %2 = vector.shape_cast %1 : vector<2x8xf32> to vector<2x1x8xf32>
    %3 = vector.shape_cast %2 : vector<2x1x8xf32> to vector<2x1x8xf32>
    %4 = vector.broadcast %3 : vector<2x1x8xf32> to vector<2x8x8xf32>
    %c0_3 = arith.constant 0 : index
    %c0_4 = arith.constant 0 : index
    %5 = vector.load %arg3[%c0_3, %c0_4] : memref<1x128xf32, #tpu.memory_space<vmem>>, vector<1x128xf32>
    %c0_5 = arith.constant 0 : index
    %c0_6 = arith.constant 0 : index
    %6 = vector.load %arg4[%c0_5, %c0_6] : memref<1x128xf32, #tpu.memory_space<vmem>>, vector<1x128xf32>
    %cst = arith.constant dense<0.000000e+00> : vector<16xf32>
    %7 = vector.multi_reduction <add>, %0, %cst [1] : vector<16x128xf32> to vector<16xf32>
    %8 = vector.shape_cast %7 : vector<16xf32> to vector<16x1xf32>
    %cst_7 = arith.constant 1.280000e+02 : f32
    %9 = vector.broadcast %cst_7 : f32 to vector<16x1xf32>
    %10 = arith.divf %8, %9 : vector<16x1xf32>
    %11 = vector.broadcast %10 : vector<16x1xf32> to vector<16x128xf32>
    %12 = arith.subf %0, %11 : vector<16x128xf32>
    %13 = arith.mulf %12, %12 : vector<16x128xf32>
    %cst_8 = arith.constant dense<0.000000e+00> : vector<16xf32>
    %14 = vector.multi_reduction <add>, %13, %cst_8 [1] : vector<16x128xf32> to vector<16xf32>
    %15 = vector.shape_cast %14 : vector<16xf32> to vector<16x1xf32>
    %cst_9 = arith.constant 1.280000e+02 : f32
    %16 = vector.broadcast %cst_9 : f32 to vector<16x1xf32>
    %17 = arith.divf %15, %16 : vector<16x1xf32>
    %cst_10 = arith.constant 9.99999996E-13 : f32
    %18 = vector.broadcast %cst_10 : f32 to vector<16x1xf32>
    %19 = arith.addf %17, %18 : vector<16x1xf32>
    %20 = math.rsqrt %19 : vector<16x1xf32>
    %21 = vector.broadcast %20 : vector<16x1xf32> to vector<16x128xf32>
    %22 = arith.mulf %12, %21 : vector<16x128xf32>
    %23 = vector.broadcast %5 : vector<1x128xf32> to vector<16x128xf32>
    %24 = arith.mulf %22, %23 : vector<16x128xf32>
    %25 = vector.broadcast %6 : vector<1x128xf32> to vector<16x128xf32>
    %26 = arith.addf %24, %25 : vector<16x128xf32>
    %c0_11 = arith.constant 0 : index
    %c0_12 = arith.constant 0 : index
    %27 = vector.load %arg5[%c0_11, %c0_12] : memref<128x768xbf16, #tpu.memory_space<vmem>>, vector<128x768xbf16>
    %c0_13 = arith.constant 0 : index
    %c0_14 = arith.constant 0 : index
    %28 = vector.load %arg6[%c0_13, %c0_14] : memref<1x768xf32, #tpu.memory_space<vmem>>, vector<1x768xf32>
    %c0_15 = arith.constant 0 : index
    %c0_16 = arith.constant 0 : index
    %29 = vector.load %arg7[%c0_15, %c0_16] : memref<128x128xbf16, #tpu.memory_space<vmem>>, vector<128x128xbf16>
    %c0_17 = arith.constant 0 : index
    %c0_18 = arith.constant 0 : index
    %30 = vector.load %arg8[%c0_17, %c0_18] : memref<1x128xf32, #tpu.memory_space<vmem>>, vector<1x128xf32>
    %c0_19 = arith.constant 0 : index
    %c0_20 = arith.constant 0 : index
    %31 = vector.load %arg9[%c0_19, %c0_20] : memref<1x128xf32, #tpu.memory_space<vmem>>, vector<1x128xf32>
    %c0_21 = arith.constant 0 : index
    %c0_22 = arith.constant 0 : index
    %32 = vector.load %arg10[%c0_21, %c0_22] : memref<1x128xf32, #tpu.memory_space<vmem>>, vector<1x128xf32>
    %c0_23 = arith.constant 0 : index
    %c0_24 = arith.constant 0 : index
    %33 = vector.load %arg11[%c0_23, %c0_24] : memref<128x512xbf16, #tpu.memory_space<vmem>>, vector<128x512xbf16>
    %c0_25 = arith.constant 0 : index
    %c0_26 = arith.constant 0 : index
    %34 = vector.load %arg12[%c0_25, %c0_26] : memref<1x512xf32, #tpu.memory_space<vmem>>, vector<1x512xf32>
    %c0_27 = arith.constant 0 : index
    %c0_28 = arith.constant 0 : index
    %35 = vector.load %arg13[%c0_27, %c0_28] : memref<512x128xbf16, #tpu.memory_space<vmem>>, vector<512x128xbf16>
    %c0_29 = arith.constant 0 : index
    %c0_30 = arith.constant 0 : index
    %36 = vector.load %arg14[%c0_29, %c0_30] : memref<1x128xf32, #tpu.memory_space<vmem>>, vector<1x128xf32>
    %c0_31 = arith.constant 0 : index
    %c0_32 = arith.constant 0 : index
    %37 = vector.load %arg15[%c0_31, %c0_32] : memref<1x128xf32, #tpu.memory_space<vmem>>, vector<1x128xf32>
    %c0_33 = arith.constant 0 : index
    %c0_34 = arith.constant 0 : index
    %38 = vector.load %arg16[%c0_33, %c0_34] : memref<1x128xf32, #tpu.memory_space<vmem>>, vector<1x128xf32>
    %39 = arith.truncf %26 : vector<16x128xf32> to vector<16x128xbf16>
    %cst_35 = arith.constant dense<0.000000e+00> : vector<16x768xf32>
    %40 = tpu.matmul %39, %27, %cst_35 {dimension_numbers = #tpu.dot_dimension_numbers<[1], [0], [0], [1], [0, 0, 1, 1], [], []>} : vector<16x128xbf16>, vector<128x768xbf16>, vector<16x768xf32> -> vector<16x768xf32>
    %41 = vector.broadcast %28 : vector<1x768xf32> to vector<16x768xf32>
    %42 = arith.addf %40, %41 : vector<16x768xf32>
    %43 = vector.shape_cast %42 : vector<16x768xf32> to vector<2x8x768xf32>
    %44 = arith.truncf %43 : vector<2x8x768xf32> to vector<2x8x768xbf16>
    %45 = vector.extract_strided_slice %44 {offsets = [0, 0, 0], sizes = [2, 8, 128], strides = [1, 1, 1]} : vector<2x8x768xbf16> to vector<2x8x128xbf16>
    %46 = vector.extract_strided_slice %44 {offsets = [0, 0, 256], sizes = [2, 8, 128], strides = [1, 1, 1]} : vector<2x8x768xbf16> to vector<2x8x128xbf16>
    %47 = vector.extract_strided_slice %44 {offsets = [0, 0, 512], sizes = [2, 8, 128], strides = [1, 1, 1]} : vector<2x8x768xbf16> to vector<2x8x128xbf16>
    "tpu.trace_start"() <{level = 10 : i32, message = "bqd,bkd->bqk"}> : () -> ()
    %cst_36 = arith.constant dense<0.000000e+00> : vector<2x8x8xf32>
    %48 = tpu.matmul %45, %46, %cst_36 {dimension_numbers = #tpu.dot_dimension_numbers<[2], [2], [1], [1], [0, 0, 0, 1, 1, 1], [0], [0]>} : vector<2x8x128xbf16>, vector<2x8x128xbf16>, vector<2x8x8xf32> -> vector<2x8x8xf32>
    "tpu.trace_stop"() : () -> ()
    %49 = arith.addf %48, %4 : vector<2x8x8xf32>
    %cst_37 = arith.constant dense<0xFF800000> : vector<2x8xf32>
    %50 = vector.multi_reduction <maximumf>, %49, %cst_37 [2] : vector<2x8x8xf32> to vector<2x8xf32>
    %51 = vector.shape_cast %50 : vector<2x8xf32> to vector<2x8x1xf32>
    %52 = vector.broadcast %51 : vector<2x8x1xf32> to vector<2x8x8xf32>
    %53 = arith.subf %49, %52 : vector<2x8x8xf32>
    %54 = math.exp %53 : vector<2x8x8xf32>
    %cst_38 = arith.constant dense<0.000000e+00> : vector<2x8xf32>
    %55 = vector.multi_reduction <add>, %54, %cst_38 [2] : vector<2x8x8xf32> to vector<2x8xf32>
    %56 = vector.shape_cast %55 : vector<2x8xf32> to vector<2x8x1xf32>
    %57 = tpu.reciprocal %56 {approx = true} : vector<2x8x1xf32> -> vector<2x8x1xf32>
    %58 = vector.broadcast %57 : vector<2x8x1xf32> to vector<2x8x8xf32>
    %59 = arith.mulf %54, %58 : vector<2x8x8xf32>
    %60 = arith.truncf %59 : vector<2x8x8xf32> to vector<2x8x8xbf16>
    "tpu.trace_start"() <{level = 10 : i32, message = "bqk,bkd->bqd"}> : () -> ()
    %cst_39 = arith.constant dense<0.000000e+00> : vector<2x8x128xf32>
    %61 = tpu.matmul %60, %47, %cst_39 {dimension_numbers = #tpu.dot_dimension_numbers<[2], [1], [1], [2], [0, 0, 0, 1, 1, 2], [0], [0]>} : vector<2x8x8xbf16>, vector<2x8x128xbf16>, vector<2x8x128xf32> -> vector<2x8x128xf32>
    "tpu.trace_stop"() : () -> ()
    %62 = vector.extract_strided_slice %44 {offsets = [0, 0, 128], sizes = [2, 8, 128], strides = [1, 1, 1]} : vector<2x8x768xbf16> to vector<2x8x128xbf16>
    %63 = vector.extract_strided_slice %44 {offsets = [0, 0, 384], sizes = [2, 8, 128], strides = [1, 1, 1]} : vector<2x8x768xbf16> to vector<2x8x128xbf16>
    %64 = vector.extract_strided_slice %44 {offsets = [0, 0, 640], sizes = [2, 8, 128], strides = [1, 1, 1]} : vector<2x8x768xbf16> to vector<2x8x128xbf16>
    "tpu.trace_start"() <{level = 10 : i32, message = "bqd,bkd->bqk"}> : () -> ()
    %cst_40 = arith.constant dense<0.000000e+00> : vector<2x8x8xf32>
    %65 = tpu.matmul %62, %63, %cst_40 {dimension_numbers = #tpu.dot_dimension_numbers<[2], [2], [1], [1], [0, 0, 0, 1, 1, 1], [0], [0]>} : vector<2x8x128xbf16>, vector<2x8x128xbf16>, vector<2x8x8xf32> -> vector<2x8x8xf32>
    "tpu.trace_stop"() : () -> ()
    %66 = arith.addf %65, %4 : vector<2x8x8xf32>
    %cst_41 = arith.constant dense<0xFF800000> : vector<2x8xf32>
    %67 = vector.multi_reduction <maximumf>, %66, %cst_41 [2] : vector<2x8x8xf32> to vector<2x8xf32>
    %68 = vector.shape_cast %67 : vector<2x8xf32> to vector<2x8x1xf32>
    %69 = vector.broadcast %68 : vector<2x8x1xf32> to vector<2x8x8xf32>
    %70 = arith.subf %66, %69 : vector<2x8x8xf32>
    %71 = math.exp %70 : vector<2x8x8xf32>
    %cst_42 = arith.constant dense<0.000000e+00> : vector<2x8xf32>
    %72 = vector.multi_reduction <add>, %71, %cst_42 [2] : vector<2x8x8xf32> to vector<2x8xf32>
    %73 = vector.shape_cast %72 : vector<2x8xf32> to vector<2x8x1xf32>
    %74 = tpu.reciprocal %73 {approx = true} : vector<2x8x1xf32> -> vector<2x8x1xf32>
    %75 = vector.broadcast %74 : vector<2x8x1xf32> to vector<2x8x8xf32>
    %76 = arith.mulf %71, %75 : vector<2x8x8xf32>
    %77 = arith.truncf %76 : vector<2x8x8xf32> to vector<2x8x8xbf16>
    "tpu.trace_start"() <{level = 10 : i32, message = "bqk,bkd->bqd"}> : () -> ()
    %cst_43 = arith.constant dense<0.000000e+00> : vector<2x8x128xf32>
    %78 = tpu.matmul %77, %64, %cst_43 {dimension_numbers = #tpu.dot_dimension_numbers<[2], [1], [1], [2], [0, 0, 0, 1, 1, 2], [0], [0]>} : vector<2x8x8xbf16>, vector<2x8x128xbf16>, vector<2x8x128xf32> -> vector<2x8x128xf32>
    "tpu.trace_stop"() : () -> ()
    %79 = arith.addf %61, %78 : vector<2x8x128xf32>
    %80 = vector.shape_cast %79 : vector<2x8x128xf32> to vector<16x128xf32>
    %81 = arith.truncf %80 : vector<16x128xf32> to vector<16x128xbf16>
    %cst_44 = arith.constant dense<0.000000e+00> : vector<16x128xf32>
    %82 = tpu.matmul %81, %29, %cst_44 {dimension_numbers = #tpu.dot_dimension_numbers<[1], [0], [0], [1], [0, 0, 1, 1], [], []>} : vector<16x128xbf16>, vector<128x128xbf16>, vector<16x128xf32> -> vector<16x128xf32>
    %83 = vector.broadcast %30 : vector<1x128xf32> to vector<16x128xf32>
    %84 = arith.addf %82, %83 : vector<16x128xf32>
    %85 = arith.addf %84, %26 : vector<16x128xf32>
    %cst_45 = arith.constant dense<0.000000e+00> : vector<16xf32>
    %86 = vector.multi_reduction <add>, %85, %cst_45 [1] : vector<16x128xf32> to vector<16xf32>
    %87 = vector.shape_cast %86 : vector<16xf32> to vector<16x1xf32>
    %cst_46 = arith.constant 1.280000e+02 : f32
    %88 = vector.broadcast %cst_46 : f32 to vector<16x1xf32>
    %89 = arith.divf %87, %88 : vector<16x1xf32>
    %90 = vector.broadcast %89 : vector<16x1xf32> to vector<16x128xf32>
    %91 = arith.subf %85, %90 : vector<16x128xf32>
    %92 = arith.mulf %91, %91 : vector<16x128xf32>
    %cst_47 = arith.constant dense<0.000000e+00> : vector<16xf32>
    %93 = vector.multi_reduction <add>, %92, %cst_47 [1] : vector<16x128xf32> to vector<16xf32>
    %94 = vector.shape_cast %93 : vector<16xf32> to vector<16x1xf32>
    %cst_48 = arith.constant 1.280000e+02 : f32
    %95 = vector.broadcast %cst_48 : f32 to vector<16x1xf32>
    %96 = arith.divf %94, %95 : vector<16x1xf32>
    %cst_49 = arith.constant 9.99999996E-13 : f32
    %97 = vector.broadcast %cst_49 : f32 to vector<16x1xf32>
    %98 = arith.addf %96, %97 : vector<16x1xf32>
    %99 = math.rsqrt %98 : vector<16x1xf32>
    %100 = vector.broadcast %99 : vector<16x1xf32> to vector<16x128xf32>
    %101 = arith.mulf %91, %100 : vector<16x128xf32>
    %102 = vector.broadcast %31 : vector<1x128xf32> to vector<16x128xf32>
    %103 = arith.mulf %101, %102 : vector<16x128xf32>
    %104 = vector.broadcast %32 : vector<1x128xf32> to vector<16x128xf32>
    %105 = arith.addf %103, %104 : vector<16x128xf32>
    %106 = arith.truncf %105 : vector<16x128xf32> to vector<16x128xbf16>
    %cst_50 = arith.constant dense<0.000000e+00> : vector<16x512xf32>
    %107 = tpu.matmul %106, %33, %cst_50 {dimension_numbers = #tpu.dot_dimension_numbers<[1], [0], [0], [1], [0, 0, 1, 1], [], []>} : vector<16x128xbf16>, vector<128x512xbf16>, vector<16x512xf32> -> vector<16x512xf32>
    %108 = vector.broadcast %34 : vector<1x512xf32> to vector<16x512xf32>
    %109 = arith.addf %107, %108 : vector<16x512xf32>
    %cst_51 = arith.constant 5.000000e-01 : f32
    %110 = vector.broadcast %cst_51 : f32 to vector<16x512xf32>
    %111 = arith.mulf %110, %109 : vector<16x512xf32>
    %cst_52 = arith.constant 4.471500e-02 : f32
    %112 = vector.broadcast %cst_52 : f32 to vector<16x512xf32>
    %113 = arith.mulf %112, %109 : vector<16x512xf32>
    %114 = arith.mulf %113, %109 : vector<16x512xf32>
    %115 = arith.mulf %114, %109 : vector<16x512xf32>
    %116 = arith.addf %109, %115 : vector<16x512xf32>
    %cst_53 = arith.constant 0.797884583 : f32
    %117 = vector.broadcast %cst_53 : f32 to vector<16x512xf32>
    %118 = arith.mulf %117, %116 : vector<16x512xf32>
    %119 = math.tanh %118 : vector<16x512xf32>
    %cst_54 = arith.constant 1.000000e+00 : f32
    %120 = vector.broadcast %cst_54 : f32 to vector<16x512xf32>
    %121 = arith.addf %120, %119 : vector<16x512xf32>
    %122 = arith.mulf %111, %121 : vector<16x512xf32>
    %123 = arith.truncf %122 : vector<16x512xf32> to vector<16x512xbf16>
    %cst_55 = arith.constant dense<0.000000e+00> : vector<16x128xf32>
    %124 = tpu.matmul %123, %35, %cst_55 {dimension_numbers = #tpu.dot_dimension_numbers<[1], [0], [0], [1], [0, 0, 1, 1], [], []>} : vector<16x512xbf16>, vector<512x128xbf16>, vector<16x128xf32> -> vector<16x128xf32>
    %125 = vector.broadcast %36 : vector<1x128xf32> to vector<16x128xf32>
    %126 = arith.addf %124, %125 : vector<16x128xf32>
    %127 = arith.addf %126, %105 : vector<16x128xf32>
    %cst_56 = arith.constant dense<0.000000e+00> : vector<16xf32>
    %128 = vector.multi_reduction <add>, %127, %cst_56 [1] : vector<16x128xf32> to vector<16xf32>
    %129 = vector.shape_cast %128 : vector<16xf32> to vector<16x1xf32>
    %cst_57 = arith.constant 1.280000e+02 : f32
    %130 = vector.broadcast %cst_57 : f32 to vector<16x1xf32>
    %131 = arith.divf %129, %130 : vector<16x1xf32>
    %132 = vector.broadcast %131 : vector<16x1xf32> to vector<16x128xf32>
    %133 = arith.subf %127, %132 : vector<16x128xf32>
    %134 = arith.mulf %133, %133 : vector<16x128xf32>
    %cst_58 = arith.constant dense<0.000000e+00> : vector<16xf32>
    %135 = vector.multi_reduction <add>, %134, %cst_58 [1] : vector<16x128xf32> to vector<16xf32>
    %136 = vector.shape_cast %135 : vector<16xf32> to vector<16x1xf32>
    %cst_59 = arith.constant 1.280000e+02 : f32
    %137 = vector.broadcast %cst_59 : f32 to vector<16x1xf32>
    %138 = arith.divf %136, %137 : vector<16x1xf32>
    %cst_60 = arith.constant 9.99999996E-13 : f32
    %139 = vector.broadcast %cst_60 : f32 to vector<16x1xf32>
    %140 = arith.addf %138, %139 : vector<16x1xf32>
    %141 = math.rsqrt %140 : vector<16x1xf32>
    %142 = vector.broadcast %141 : vector<16x1xf32> to vector<16x128xf32>
    %143 = arith.mulf %133, %142 : vector<16x128xf32>
    %144 = vector.broadcast %37 : vector<1x128xf32> to vector<16x128xf32>
    %145 = arith.mulf %143, %144 : vector<16x128xf32>
    %146 = vector.broadcast %38 : vector<1x128xf32> to vector<16x128xf32>
    %147 = arith.addf %145, %146 : vector<16x128xf32>
    %c0_61 = arith.constant 0 : index
    %c0_62 = arith.constant 0 : index
    %148 = vector.load %arg17[%c0_61, %c0_62] : memref<128x768xbf16, #tpu.memory_space<vmem>>, vector<128x768xbf16>
    %c0_63 = arith.constant 0 : index
    %c0_64 = arith.constant 0 : index
    %149 = vector.load %arg18[%c0_63, %c0_64] : memref<1x768xf32, #tpu.memory_space<vmem>>, vector<1x768xf32>
    %c0_65 = arith.constant 0 : index
    %c0_66 = arith.constant 0 : index
    %150 = vector.load %arg19[%c0_65, %c0_66] : memref<128x128xbf16, #tpu.memory_space<vmem>>, vector<128x128xbf16>
    %c0_67 = arith.constant 0 : index
    %c0_68 = arith.constant 0 : index
    %151 = vector.load %arg20[%c0_67, %c0_68] : memref<1x128xf32, #tpu.memory_space<vmem>>, vector<1x128xf32>
    %c0_69 = arith.constant 0 : index
    %c0_70 = arith.constant 0 : index
    %152 = vector.load %arg21[%c0_69, %c0_70] : memref<1x128xf32, #tpu.memory_space<vmem>>, vector<1x128xf32>
    %c0_71 = arith.constant 0 : index
    %c0_72 = arith.constant 0 : index
    %153 = vector.load %arg22[%c0_71, %c0_72] : memref<1x128xf32, #tpu.memory_space<vmem>>, vector<1x128xf32>
    %c0_73 = arith.constant 0 : index
    %c0_74 = arith.constant 0 : index
    %154 = vector.load %arg23[%c0_73, %c0_74] : memref<128x512xbf16, #tpu.memory_space<vmem>>, vector<128x512xbf16>
    %c0_75 = arith.constant 0 : index
    %c0_76 = arith.constant 0 : index
    %155 = vector.load %arg24[%c0_75, %c0_76] : memref<1x512xf32, #tpu.memory_space<vmem>>, vector<1x512xf32>
    %c0_77 = arith.constant 0 : index
    %c0_78 = arith.constant 0 : index
    %156 = vector.load %arg25[%c0_77, %c0_78] : memref<512x128xbf16, #tpu.memory_space<vmem>>, vector<512x128xbf16>
    %c0_79 = arith.constant 0 : index
    %c0_80 = arith.constant 0 : index
    %157 = vector.load %arg26[%c0_79, %c0_80] : memref<1x128xf32, #tpu.memory_space<vmem>>, vector<1x128xf32>
    %c0_81 = arith.constant 0 : index
    %c0_82 = arith.constant 0 : index
    %158 = vector.load %arg27[%c0_81, %c0_82] : memref<1x128xf32, #tpu.memory_space<vmem>>, vector<1x128xf32>
    %c0_83 = arith.constant 0 : index
    %c0_84 = arith.constant 0 : index
    %159 = vector.load %arg28[%c0_83, %c0_84] : memref<1x128xf32, #tpu.memory_space<vmem>>, vector<1x128xf32>
    %160 = arith.truncf %147 : vector<16x128xf32> to vector<16x128xbf16>
    %cst_85 = arith.constant dense<0.000000e+00> : vector<16x768xf32>
    %161 = tpu.matmul %160, %148, %cst_85 {dimension_numbers = #tpu.dot_dimension_numbers<[1], [0], [0], [1], [0, 0, 1, 1], [], []>} : vector<16x128xbf16>, vector<128x768xbf16>, vector<16x768xf32> -> vector<16x768xf32>
    %162 = vector.broadcast %149 : vector<1x768xf32> to vector<16x768xf32>
    %163 = arith.addf %161, %162 : vector<16x768xf32>
    %164 = vector.shape_cast %163 : vector<16x768xf32> to vector<2x8x768xf32>
    %165 = arith.truncf %164 : vector<2x8x768xf32> to vector<2x8x768xbf16>
    %166 = vector.extract_strided_slice %165 {offsets = [0, 0, 0], sizes = [2, 8, 128], strides = [1, 1, 1]} : vector<2x8x768xbf16> to vector<2x8x128xbf16>
    %167 = vector.extract_strided_slice %165 {offsets = [0, 0, 256], sizes = [2, 8, 128], strides = [1, 1, 1]} : vector<2x8x768xbf16> to vector<2x8x128xbf16>
    %168 = vector.extract_strided_slice %165 {offsets = [0, 0, 512], sizes = [2, 8, 128], strides = [1, 1, 1]} : vector<2x8x768xbf16> to vector<2x8x128xbf16>
    "tpu.trace_start"() <{level = 10 : i32, message = "bqd,bkd->bqk"}> : () -> ()
    %cst_86 = arith.constant dense<0.000000e+00> : vector<2x8x8xf32>
    %169 = tpu.matmul %166, %167, %cst_86 {dimension_numbers = #tpu.dot_dimension_numbers<[2], [2], [1], [1], [0, 0, 0, 1, 1, 1], [0], [0]>} : vector<2x8x128xbf16>, vector<2x8x128xbf16>, vector<2x8x8xf32> -> vector<2x8x8xf32>
    "tpu.trace_stop"() : () -> ()
    %170 = arith.addf %169, %4 : vector<2x8x8xf32>
    %cst_87 = arith.constant dense<0xFF800000> : vector<2x8xf32>
    %171 = vector.multi_reduction <maximumf>, %170, %cst_87 [2] : vector<2x8x8xf32> to vector<2x8xf32>
    %172 = vector.shape_cast %171 : vector<2x8xf32> to vector<2x8x1xf32>
    %173 = vector.broadcast %172 : vector<2x8x1xf32> to vector<2x8x8xf32>
    %174 = arith.subf %170, %173 : vector<2x8x8xf32>
    %175 = math.exp %174 : vector<2x8x8xf32>
    %cst_88 = arith.constant dense<0.000000e+00> : vector<2x8xf32>
    %176 = vector.multi_reduction <add>, %175, %cst_88 [2] : vector<2x8x8xf32> to vector<2x8xf32>
    %177 = vector.shape_cast %176 : vector<2x8xf32> to vector<2x8x1xf32>
    %178 = tpu.reciprocal %177 {approx = true} : vector<2x8x1xf32> -> vector<2x8x1xf32>
    %179 = vector.broadcast %178 : vector<2x8x1xf32> to vector<2x8x8xf32>
    %180 = arith.mulf %175, %179 : vector<2x8x8xf32>
    %181 = arith.truncf %180 : vector<2x8x8xf32> to vector<2x8x8xbf16>
    "tpu.trace_start"() <{level = 10 : i32, message = "bqk,bkd->bqd"}> : () -> ()
    %cst_89 = arith.constant dense<0.000000e+00> : vector<2x8x128xf32>
    %182 = tpu.matmul %181, %168, %cst_89 {dimension_numbers = #tpu.dot_dimension_numbers<[2], [1], [1], [2], [0, 0, 0, 1, 1, 2], [0], [0]>} : vector<2x8x8xbf16>, vector<2x8x128xbf16>, vector<2x8x128xf32> -> vector<2x8x128xf32>
    "tpu.trace_stop"() : () -> ()
    %183 = vector.extract_strided_slice %165 {offsets = [0, 0, 128], sizes = [2, 8, 128], strides = [1, 1, 1]} : vector<2x8x768xbf16> to vector<2x8x128xbf16>
    %184 = vector.extract_strided_slice %165 {offsets = [0, 0, 384], sizes = [2, 8, 128], strides = [1, 1, 1]} : vector<2x8x768xbf16> to vector<2x8x128xbf16>
    %185 = vector.extract_strided_slice %165 {offsets = [0, 0, 640], sizes = [2, 8, 128], strides = [1, 1, 1]} : vector<2x8x768xbf16> to vector<2x8x128xbf16>
    "tpu.trace_start"() <{level = 10 : i32, message = "bqd,bkd->bqk"}> : () -> ()
    %cst_90 = arith.constant dense<0.000000e+00> : vector<2x8x8xf32>
    %186 = tpu.matmul %183, %184, %cst_90 {dimension_numbers = #tpu.dot_dimension_numbers<[2], [2], [1], [1], [0, 0, 0, 1, 1, 1], [0], [0]>} : vector<2x8x128xbf16>, vector<2x8x128xbf16>, vector<2x8x8xf32> -> vector<2x8x8xf32>
    "tpu.trace_stop"() : () -> ()
    %187 = arith.addf %186, %4 : vector<2x8x8xf32>
    %cst_91 = arith.constant dense<0xFF800000> : vector<2x8xf32>
    %188 = vector.multi_reduction <maximumf>, %187, %cst_91 [2] : vector<2x8x8xf32> to vector<2x8xf32>
    %189 = vector.shape_cast %188 : vector<2x8xf32> to vector<2x8x1xf32>
    %190 = vector.broadcast %189 : vector<2x8x1xf32> to vector<2x8x8xf32>
    %191 = arith.subf %187, %190 : vector<2x8x8xf32>
    %192 = math.exp %191 : vector<2x8x8xf32>
    %cst_92 = arith.constant dense<0.000000e+00> : vector<2x8xf32>
    %193 = vector.multi_reduction <add>, %192, %cst_92 [2] : vector<2x8x8xf32> to vector<2x8xf32>
    %194 = vector.shape_cast %193 : vector<2x8xf32> to vector<2x8x1xf32>
    %195 = tpu.reciprocal %194 {approx = true} : vector<2x8x1xf32> -> vector<2x8x1xf32>
    %196 = vector.broadcast %195 : vector<2x8x1xf32> to vector<2x8x8xf32>
    %197 = arith.mulf %192, %196 : vector<2x8x8xf32>
    %198 = arith.truncf %197 : vector<2x8x8xf32> to vector<2x8x8xbf16>
    "tpu.trace_start"() <{level = 10 : i32, message = "bqk,bkd->bqd"}> : () -> ()
    %cst_93 = arith.constant dense<0.000000e+00> : vector<2x8x128xf32>
    %199 = tpu.matmul %198, %185, %cst_93 {dimension_numbers = #tpu.dot_dimension_numbers<[2], [1], [1], [2], [0, 0, 0, 1, 1, 2], [0], [0]>} : vector<2x8x8xbf16>, vector<2x8x128xbf16>, vector<2x8x128xf32> -> vector<2x8x128xf32>
    "tpu.trace_stop"() : () -> ()
    %200 = arith.addf %182, %199 : vector<2x8x128xf32>
    %201 = vector.shape_cast %200 : vector<2x8x128xf32> to vector<16x128xf32>
    %202 = arith.truncf %201 : vector<16x128xf32> to vector<16x128xbf16>
    %cst_94 = arith.constant dense<0.000000e+00> : vector<16x128xf32>
    %203 = tpu.matmul %202, %150, %cst_94 {dimension_numbers = #tpu.dot_dimension_numbers<[1], [0], [0], [1], [0, 0, 1, 1], [], []>} : vector<16x128xbf16>, vector<128x128xbf16>, vector<16x128xf32> -> vector<16x128xf32>
    %204 = vector.broadcast %151 : vector<1x128xf32> to vector<16x128xf32>
    %205 = arith.addf %203, %204 : vector<16x128xf32>
    %206 = arith.addf %205, %147 : vector<16x128xf32>
    %cst_95 = arith.constant dense<0.000000e+00> : vector<16xf32>
    %207 = vector.multi_reduction <add>, %206, %cst_95 [1] : vector<16x128xf32> to vector<16xf32>
    %208 = vector.shape_cast %207 : vector<16xf32> to vector<16x1xf32>
    %cst_96 = arith.constant 1.280000e+02 : f32
    %209 = vector.broadcast %cst_96 : f32 to vector<16x1xf32>
    %210 = arith.divf %208, %209 : vector<16x1xf32>
    %211 = vector.broadcast %210 : vector<16x1xf32> to vector<16x128xf32>
    %212 = arith.subf %206, %211 : vector<16x128xf32>
    %213 = arith.mulf %212, %212 : vector<16x128xf32>
    %cst_97 = arith.constant dense<0.000000e+00> : vector<16xf32>
    %214 = vector.multi_reduction <add>, %213, %cst_97 [1] : vector<16x128xf32> to vector<16xf32>
    %215 = vector.shape_cast %214 : vector<16xf32> to vector<16x1xf32>
    %cst_98 = arith.constant 1.280000e+02 : f32
    %216 = vector.broadcast %cst_98 : f32 to vector<16x1xf32>
    %217 = arith.divf %215, %216 : vector<16x1xf32>
    %cst_99 = arith.constant 9.99999996E-13 : f32
    %218 = vector.broadcast %cst_99 : f32 to vector<16x1xf32>
    %219 = arith.addf %217, %218 : vector<16x1xf32>
    %220 = math.rsqrt %219 : vector<16x1xf32>
    %221 = vector.broadcast %220 : vector<16x1xf32> to vector<16x128xf32>
    %222 = arith.mulf %212, %221 : vector<16x128xf32>
    %223 = vector.broadcast %152 : vector<1x128xf32> to vector<16x128xf32>
    %224 = arith.mulf %222, %223 : vector<16x128xf32>
    %225 = vector.broadcast %153 : vector<1x128xf32> to vector<16x128xf32>
    %226 = arith.addf %224, %225 : vector<16x128xf32>
    %227 = arith.truncf %226 : vector<16x128xf32> to vector<16x128xbf16>
    %cst_100 = arith.constant dense<0.000000e+00> : vector<16x512xf32>
    %228 = tpu.matmul %227, %154, %cst_100 {dimension_numbers = #tpu.dot_dimension_numbers<[1], [0], [0], [1], [0, 0, 1, 1], [], []>} : vector<16x128xbf16>, vector<128x512xbf16>, vector<16x512xf32> -> vector<16x512xf32>
    %229 = vector.broadcast %155 : vector<1x512xf32> to vector<16x512xf32>
    %230 = arith.addf %228, %229 : vector<16x512xf32>
    %cst_101 = arith.constant 5.000000e-01 : f32
    %231 = vector.broadcast %cst_101 : f32 to vector<16x512xf32>
    %232 = arith.mulf %231, %230 : vector<16x512xf32>
    %cst_102 = arith.constant 4.471500e-02 : f32
    %233 = vector.broadcast %cst_102 : f32 to vector<16x512xf32>
    %234 = arith.mulf %233, %230 : vector<16x512xf32>
    %235 = arith.mulf %234, %230 : vector<16x512xf32>
    %236 = arith.mulf %235, %230 : vector<16x512xf32>
    %237 = arith.addf %230, %236 : vector<16x512xf32>
    %cst_103 = arith.constant 0.797884583 : f32
    %238 = vector.broadcast %cst_103 : f32 to vector<16x512xf32>
    %239 = arith.mulf %238, %237 : vector<16x512xf32>
    %240 = math.tanh %239 : vector<16x512xf32>
    %cst_104 = arith.constant 1.000000e+00 : f32
    %241 = vector.broadcast %cst_104 : f32 to vector<16x512xf32>
    %242 = arith.addf %241, %240 : vector<16x512xf32>
    %243 = arith.mulf %232, %242 : vector<16x512xf32>
    %244 = arith.truncf %243 : vector<16x512xf32> to vector<16x512xbf16>
    %cst_105 = arith.constant dense<0.000000e+00> : vector<16x128xf32>
    %245 = tpu.matmul %244, %156, %cst_105 {dimension_numbers = #tpu.dot_dimension_numbers<[1], [0], [0], [1], [0, 0, 1, 1], [], []>} : vector<16x512xbf16>, vector<512x128xbf16>, vector<16x128xf32> -> vector<16x128xf32>
    %246 = vector.broadcast %157 : vector<1x128xf32> to vector<16x128xf32>
    %247 = arith.addf %245, %246 : vector<16x128xf32>
    %248 = arith.addf %247, %226 : vector<16x128xf32>
    %cst_106 = arith.constant dense<0.000000e+00> : vector<16xf32>
    %249 = vector.multi_reduction <add>, %248, %cst_106 [1] : vector<16x128xf32> to vector<16xf32>
    %250 = vector.shape_cast %249 : vector<16xf32> to vector<16x1xf32>
    %cst_107 = arith.constant 1.280000e+02 : f32
    %251 = vector.broadcast %cst_107 : f32 to vector<16x1xf32>
    %252 = arith.divf %250, %251 : vector<16x1xf32>
    %253 = vector.broadcast %252 : vector<16x1xf32> to vector<16x128xf32>
    %254 = arith.subf %248, %253 : vector<16x128xf32>
    %255 = arith.mulf %254, %254 : vector<16x128xf32>
    %cst_108 = arith.constant dense<0.000000e+00> : vector<16xf32>
    %256 = vector.multi_reduction <add>, %255, %cst_108 [1] : vector<16x128xf32> to vector<16xf32>
    %257 = vector.shape_cast %256 : vector<16xf32> to vector<16x1xf32>
    %cst_109 = arith.constant 1.280000e+02 : f32
    %258 = vector.broadcast %cst_109 : f32 to vector<16x1xf32>
    %259 = arith.divf %257, %258 : vector<16x1xf32>
    %cst_110 = arith.constant 9.99999996E-13 : f32
    %260 = vector.broadcast %cst_110 : f32 to vector<16x1xf32>
    %261 = arith.addf %259, %260 : vector<16x1xf32>
    %262 = math.rsqrt %261 : vector<16x1xf32>
    %263 = vector.broadcast %262 : vector<16x1xf32> to vector<16x128xf32>
    %264 = arith.mulf %254, %263 : vector<16x128xf32>
    %265 = vector.broadcast %158 : vector<1x128xf32> to vector<16x128xf32>
    %266 = arith.mulf %264, %265 : vector<16x128xf32>
    %267 = vector.broadcast %159 : vector<1x128xf32> to vector<16x128xf32>
    %268 = arith.addf %266, %267 : vector<16x128xf32>
    %c0_111 = arith.constant 0 : index
    %c0_112 = arith.constant 0 : index
    %269 = vector.load %arg29[%c0_111, %c0_112] : memref<128x128xbf16, #tpu.memory_space<vmem>>, vector<128x128xbf16>
    %c0_113 = arith.constant 0 : index
    %c0_114 = arith.constant 0 : index
    %270 = vector.load %arg30[%c0_113, %c0_114] : memref<1x128xf32, #tpu.memory_space<vmem>>, vector<1x128xf32>
    %271 = vector.shape_cast %268 : vector<16x128xf32> to vector<2x8x128xf32>
    %272 = vector.extract_strided_slice %271 {offsets = [0, 0, 0], sizes = [2, 1, 128], strides = [1, 1, 1]} : vector<2x8x128xf32> to vector<2x1x128xf32>
    %273 = vector.shape_cast %272 : vector<2x1x128xf32> to vector<2x128xf32>
    %274 = arith.truncf %273 : vector<2x128xf32> to vector<2x128xbf16>
    %cst_115 = arith.constant dense<0.000000e+00> : vector<2x128xf32>
    %275 = tpu.matmul %274, %269, %cst_115 {dimension_numbers = #tpu.dot_dimension_numbers<[1], [0], [0], [1], [0, 0, 1, 1], [], []>} : vector<2x128xbf16>, vector<128x128xbf16>, vector<2x128xf32> -> vector<2x128xf32>
    %276 = vector.broadcast %270 : vector<1x128xf32> to vector<2x128xf32>
    %277 = arith.addf %275, %276 : vector<2x128xf32>
    %c0_116 = arith.constant 0 : index
    %c0_117 = arith.constant 0 : index
    %278 = vector.load %arg31[%c0_116, %c0_117] : memref<2x128xf32, #tpu.memory_space<vmem>>, vector<2x128xf32>
    tpu.vector_store %arg31[%c0_116, %c0_117], %277 {strides = array<i32>} : memref<2x128xf32, #tpu.memory_space<vmem>>, vector<2x128xf32>,
    return
  }
  func.func @transform_0(%arg0: i32) -> (i32, i32) {
    %c0_i32 = arith.constant 0 : i32
    %c0_i32_0 = arith.constant 0 : i32
    return %arg0, %c0_i32 : i32, i32
  }
  func.func @transform_1(%arg0: i32) -> (i32, i32) {
    %c0_i32 = arith.constant 0 : i32
    %c0_i32_0 = arith.constant 0 : i32
    return %arg0, %c0_i32 : i32, i32
  }
  func.func @transform_2(%arg0: i32) -> (i32, i32) {
    %c0_i32 = arith.constant 0 : i32
    %c0_i32_0 = arith.constant 0 : i32
    %c0_i32_1 = arith.constant 0 : i32
    return %c0_i32, %c0_i32_0 : i32, i32
  }
  func.func @transform_3(%arg0: i32) -> (i32, i32) {
    %c0_i32 = arith.constant 0 : i32
    %c0_i32_0 = arith.constant 0 : i32
    %c0_i32_1 = arith.constant 0 : i32
    return %c0_i32, %c0_i32_0 : i32, i32
  }
  func.func @transform_4(%arg0: i32) -> (i32, i32) {
    %c0_i32 = arith.constant 0 : i32
    %c0_i32_0 = arith.constant 0 : i32
    %c0_i32_1 = arith.constant 0 : i32
    return %c0_i32, %c0_i32_0 : i32, i32
  }
  func.func @transform_5(%arg0: i32) -> (i32, i32) {
    %c0_i32 = arith.constant 0 : i32
    %c0_i32_0 = arith.constant 0 : i32
    %c0_i32_1 = arith.constant 0 : i32
    return %c0_i32, %c0_i32_0 : i32, i32
  }
  func.func @transform_6(%arg0: i32) -> (i32, i32) {
    %c0_i32 = arith.constant 0 : i32
    %c0_i32_0 = arith.constant 0 : i32
    %c0_i32_1 = arith.constant 0 : i32
    return %c0_i32, %c0_i32_0 : i32, i32
  }
  func.func @transform_7(%arg0: i32) -> (i32, i32) {
    %c0_i32 = arith.constant 0 : i32
    %c0_i32_0 = arith.constant 0 : i32
    %c0_i32_1 = arith.constant 0 : i32
    return %c0_i32, %c0_i32_0 : i32, i32
  }
  func.func @transform_8(%arg0: i32) -> (i32, i32) {
    %c0_i32 = arith.constant 0 : i32
    %c0_i32_0 = arith.constant 0 : i32
    %c0_i32_1 = arith.constant 0 : i32
    return %c0_i32, %c0_i32_0 : i32, i32
  }
  func.func @transform_9(%arg0: i32) -> (i32, i32) {
    %c0_i32 = arith.constant 0 : i32
    %c0_i32_0 = arith.constant 0 : i32
    %c0_i32_1 = arith.constant 0 : i32
    return %c0_i32, %c0_i32_0 : i32, i32
  }
  func.func @transform_10(%arg0: i32) -> (i32, i32) {
    %c0_i32 = arith.constant 0 : i32
    %c0_i32_0 = arith.constant 0 : i32
    %c0_i32_1 = arith.constant 0 : i32
    return %c0_i32, %c0_i32_0 : i32, i32
  }
  func.func @transform_11(%arg0: i32) -> (i32, i32) {
    %c0_i32 = arith.constant 0 : i32
    %c0_i32_0 = arith.constant 0 : i32
    %c0_i32_1 = arith.constant 0 : i32
    return %c0_i32, %c0_i32_0 : i32, i32
  }
  func.func @transform_12(%arg0: i32) -> (i32, i32) {
    %c0_i32 = arith.constant 0 : i32
    %c0_i32_0 = arith.constant 0 : i32
    %c0_i32_1 = arith.constant 0 : i32
    return %c0_i32, %c0_i32_0 : i32, i32
  }
  func.func @transform_13(%arg0: i32) -> (i32, i32) {
    %c0_i32 = arith.constant 0 : i32
    %c0_i32_0 = arith.constant 0 : i32
    %c0_i32_1 = arith.constant 0 : i32
    return %c0_i32, %c0_i32_0 : i32, i32
  }
  func.func @transform_14(%arg0: i32) -> (i32, i32) {
    %c0_i32 = arith.constant 0 : i32
    %c0_i32_0 = arith.constant 0 : i32
    %c0_i32_1 = arith.constant 0 : i32
    return %c0_i32, %c0_i32_0 : i32, i32
  }
  func.func @transform_15(%arg0: i32) -> (i32, i32) {
    %c0_i32 = arith.constant 0 : i32
    %c0_i32_0 = arith.constant 0 : i32
    %c0_i32_1 = arith.constant 0 : i32
    return %c0_i32, %c0_i32_0 : i32, i32
  }
  func.func @transform_16(%arg0: i32) -> (i32, i32) {
    %c0_i32 = arith.constant 0 : i32
    %c0_i32_0 = arith.constant 0 : i32
    %c0_i32_1 = arith.constant 0 : i32
    return %c0_i32, %c0_i32_0 : i32, i32
  }
  func.func @transform_17(%arg0: i32) -> (i32, i32) {
    %c0_i32 = arith.constant 0 : i32
    %c0_i32_0 = arith.constant 0 : i32
    %c0_i32_1 = arith.constant 0 : i32
    return %c0_i32, %c0_i32_0 : i32, i32
  }
  func.func @transform_18(%arg0: i32) -> (i32, i32) {
    %c0_i32 = arith.constant 0 : i32
    %c0_i32_0 = arith.constant 0 : i32
    %c0_i32_1 = arith.constant 0 : i32
    return %c0_i32, %c0_i32_0 : i32, i32
  }
  func.func @transform_19(%arg0: i32) -> (i32, i32) {
    %c0_i32 = arith.constant 0 : i32
    %c0_i32_0 = arith.constant 0 : i32
    %c0_i32_1 = arith.constant 0 : i32
    return %c0_i32, %c0_i32_0 : i32, i32
  }
  func.func @transform_20(%arg0: i32) -> (i32, i32) {
    %c0_i32 = arith.constant 0 : i32
    %c0_i32_0 = arith.constant 0 : i32
    %c0_i32_1 = arith.constant 0 : i32
    return %c0_i32, %c0_i32_0 : i32, i32
  }
  func.func @transform_21(%arg0: i32) -> (i32, i32) {
    %c0_i32 = arith.constant 0 : i32
    %c0_i32_0 = arith.constant 0 : i32
    %c0_i32_1 = arith.constant 0 : i32
    return %c0_i32, %c0_i32_0 : i32, i32
  }
  func.func @transform_22(%arg0: i32) -> (i32, i32) {
    %c0_i32 = arith.constant 0 : i32
    %c0_i32_0 = arith.constant 0 : i32
    %c0_i32_1 = arith.constant 0 : i32
    return %c0_i32, %c0_i32_0 : i32, i32
  }
  func.func @transform_23(%arg0: i32) -> (i32, i32) {
    %c0_i32 = arith.constant 0 : i32
    %c0_i32_0 = arith.constant 0 : i32
    %c0_i32_1 = arith.constant 0 : i32
    return %c0_i32, %c0_i32_0 : i32, i32
  }
  func.func @transform_24(%arg0: i32) -> (i32, i32) {
    %c0_i32 = arith.constant 0 : i32
    %c0_i32_0 = arith.constant 0 : i32
    %c0_i32_1 = arith.constant 0 : i32
    return %c0_i32, %c0_i32_0 : i32, i32
  }
  func.func @transform_25(%arg0: i32) -> (i32, i32) {
    %c0_i32 = arith.constant 0 : i32
    %c0_i32_0 = arith.constant 0 : i32
    %c0_i32_1 = arith.constant 0 : i32
    return %c0_i32, %c0_i32_0 : i32, i32
  }
  func.func @transform_26(%arg0: i32) -> (i32, i32) {
    %c0_i32 = arith.constant 0 : i32
    %c0_i32_0 = arith.constant 0 : i32
    %c0_i32_1 = arith.constant 0 : i32
    return %c0_i32, %c0_i32_0 : i32, i32
  }
  func.func @transform_27(%arg0: i32) -> (i32, i32) {
    %c0_i32 = arith.constant 0 : i32
    %c0_i32_0 = arith.constant 0 : i32
    %c0_i32_1 = arith.constant 0 : i32
    return %c0_i32, %c0_i32_0 : i32, i32
  }
  func.func @transform_28(%arg0: i32) -> (i32, i32) {
    %c0_i32 = arith.constant 0 : i32
    %c0_i32_0 = arith.constant 0 : i32
    %c0_i32_1 = arith.constant 0 : i32
    return %c0_i32, %c0_i32_0 : i32, i32
  }
  func.func @transform_29(%arg0: i32) -> (i32, i32) {
    %c0_i32 = arith.constant 0 : i32
    %c0_i32_0 = arith.constant 0 : i32
    %c0_i32_1 = arith.constant 0 : i32
    return %c0_i32, %c0_i32_0 : i32, i32
  }
  func.func @transform_30(%arg0: i32) -> (i32, i32) {
    %c0_i32 = arith.constant 0 : i32
    %c0_i32_0 = arith.constant 0 : i32
    return %arg0, %c0_i32 : i32, i32
  }
}

</mosaic_0001>

<llo_original>
// kernel: light_lyric_processor.1
$region0: #{light_lyric_processor.1}
  #allocation0 [shape = 'u32[]', space=smem, size = 0x4, offset = 0x4, fixed_abs, tag = 'smem constant byte address 0x4 - core index']
  #allocation1 [shape = 'u32[144,128]{1,0:T(1,128)}', space=vmem, size = 0x12000, scoped, tag = 'internal scratch']
  %s0 = inlined_call_operand.smem [shape: u32[31], index: -1, kind: input, shape index: {}]
  %s1 = sld [smem:[%s0]]
  %s2 = scalar_lea.smem %s0, 1
  %s3 = sld [smem:[%s2]]
  %s4 = scalar_lea.smem %s0, 2
  %s5 = sld [smem:[%s4]]
  %s6 = scalar_lea.smem %s0, 3
  %s7 = sld [smem:[%s6]]
  %s8 = scalar_lea.smem %s0, 4
  %s9 = sld [smem:[%s8]]
  %s10 = scalar_lea.smem %s0, 5
  %s11 = sld [smem:[%s10]]
  %s12 = scalar_lea.smem %s0, 6
  %s13 = sld [smem:[%s12]]
  %s14 = scalar_lea.smem %s0, 7
  %s15 = sld [smem:[%s14]]
  %s16 = scalar_lea.smem %s0, 8
  %s17 = sld [smem:[%s16]]
  %s18 = scalar_lea.smem %s0, 9
  %s19 = sld [smem:[%s18]]
  %s20 = scalar_lea.smem %s0, 10
  %s21 = sld [smem:[%s20]]
  %s22 = scalar_lea.smem %s0, 11
  %s23 = sld [smem:[%s22]]
  %s24 = scalar_lea.smem %s0, 12
  %s25 = sld [smem:[%s24]]
  %s26 = scalar_lea.smem %s0, 13
  %s27 = sld [smem:[%s26]]
  %s28 = scalar_lea.smem %s0, 14
  %s29 = sld [smem:[%s28]]
  %s30 = scalar_lea.smem %s0, 15
  %s31 = sld [smem:[%s30]]
  %s32 = scalar_lea.smem %s0, 16
  %s33 = sld [smem:[%s32]]
  %s34 = scalar_lea.smem %s0, 17
  %s35 = sld [smem:[%s34]]
  %s36 = scalar_lea.smem %s0, 18
  %s37 = sld [smem:[%s36]]
  %s38 = scalar_lea.smem %s0, 19
  %s39 = sld [smem:[%s38]]
  %s40 = scalar_lea.smem %s0, 20
  %s41 = sld [smem:[%s40]]
  %s42 = scalar_lea.smem %s0, 21
  %s43 = sld [smem:[%s42]]
  %s44 = scalar_lea.smem %s0, 22
  %s45 = sld [smem:[%s44]]
  %s46 = scalar_lea.smem %s0, 23
  %s47 = sld [smem:[%s46]]
  %s48 = scalar_lea.smem %s0, 24
  %s49 = sld [smem:[%s48]]
  %s50 = scalar_lea.smem %s0, 25
  %s51 = sld [smem:[%s50]]
  %s52 = scalar_lea.smem %s0, 26
  %s53 = sld [smem:[%s52]]
  %s54 = scalar_lea.smem %s0, 27
  %s55 = sld [smem:[%s54]]
  %s56 = scalar_lea.smem %s0, 28
  %s57 = sld [smem:[%s56]]
  %s58 = scalar_lea.smem %s0, 29
  %s59 = sld [smem:[%s58]]
  %s60 = scalar_lea.smem %s0, 30
  %s61 = sld [smem:[%s60]]
  %s62 = sld [smem:[#allocation0]]
  $region242: #{light_lyric_processor.1} parent=0
    _
  %s64 = ssub.s32 1, %s62
  %s65 = scalar_select 0, %s64, %s62
  $region1: #{light_lyric_processor.1} parent=0
    #allocation2 [shape = 'u8[512]{0}', space=vmem, size = 0x400, scoped, tag = 'input window, operand 2, single buffered']
    #allocation3 [shape = 's32[1]{0}', space=sflag, size = 0x4, scoped, tag = 'scoped memory for light_lyric_processor.1']
    #allocation4 [shape = 's32[1]{0}', space=sflag, size = 0x4, scoped, tag = 'scoped memory for light_lyric_processor.1']
    #allocation5 [shape = 'u8[512]{0}', space=vmem, size = 0x400, scoped, tag = 'input window, operand 3, single buffered']
    #allocation6 [shape = 's32[1]{0}', space=sflag, size = 0x4, scoped, tag = 'scoped memory for light_lyric_processor.1']
    #allocation7 [shape = 'u8[196608]{0}', space=vmem, size = 0x30000, scoped, tag = 'input window, operand 4, single buffered']
    #allocation8 [shape = 'u8[3072]{0}', space=vmem, size = 0xc00, scoped, tag = 'input window, operand 5, single buffered']
    #allocation9 [shape = 's32[1]{0}', space=sflag, size = 0x4, scoped, tag = 'scoped memory for light_lyric_processor.1']
    #allocation10 [shape = 'u8[32768]{0}', space=vmem, size = 0x8000, scoped, tag = 'input window, operand 6, single buffered']
    #allocation11 [shape = 'u8[512]{0}', space=vmem, size = 0x400, scoped, tag = 'input window, operand 7, single buffered']
    #allocation12 [shape = 's32[1]{0}', space=sflag, size = 0x4, scoped, tag = 'scoped memory for light_lyric_processor.1']
    #allocation13 [shape = 'u8[512]{0}', space=vmem, size = 0x400, scoped, tag = 'input window, operand 8, single buffered']
    #allocation14 [shape = 'u8[512]{0}', space=vmem, size = 0x400, scoped, tag = 'input window, operand 9, single buffered']
    #allocation15 [shape = 's32[1]{0}', space=sflag, size = 0x4, scoped, tag = 'scoped memory for light_lyric_processor.1']
    #allocation16 [shape = 'u8[131072]{0}', space=vmem, size = 0x20000, scoped, tag = 'input window, operand 10, single buffered']
    #allocation17 [shape = 'u8[2048]{0}', space=vmem, size = 0x800, scoped, tag = 'input window, operand 11, single buffered']
    #allocation18 [shape = 's32[1]{0}', space=sflag, size = 0x4, scoped, tag = 'scoped memory for light_lyric_processor.1']
    #allocation19 [shape = 'u8[131072]{0}', space=vmem, size = 0x20000, scoped, tag = 'input window, operand 12, single buffered']
    #allocation20 [shape = 'u8[512]{0}', space=vmem, size = 0x400, scoped, tag = 'input window, operand 13, single buffered']
    #allocation21 [shape = 's32[1]{0}', space=sflag, size = 0x4, scoped, tag = 'scoped memory for light_lyric_processor.1']
    #allocation22 [shape = 'u8[512]{0}', space=vmem, size = 0x400, scoped, tag = 'input window, operand 14, single buffered']
    #allocation23 [shape = 'u8[512]{0}', space=vmem, size = 0x400, scoped, tag = 'input window, operand 15, single buffered']
    #allocation24 [shape = 's32[1]{0}', space=sflag, size = 0x4, scoped, tag = 'scoped memory for light_lyric_processor.1']
    #allocation25 [shape = 'u8[196608]{0}', space=vmem, size = 0x30000, scoped, tag = 'input window, operand 16, single buffered']
    #allocation26 [shape = 'u8[3072]{0}', space=vmem, size = 0xc00, scoped, tag = 'input window, operand 17, single buffered']
    #allocation27 [shape = 's32[1]{0}', space=sflag, size = 0x4, scoped, tag = 'scoped memory for light_lyric_processor.1']
    #allocation28 [shape = 'u8[32768]{0}', space=vmem, size = 0x8000, scoped, tag = 'input window, operand 18, single buffered']
    #allocation29 [shape = 'u8[512]{0}', space=vmem, size = 0x400, scoped, tag = 'input window, operand 19, single buffered']
    #allocation30 [shape = 's32[1]{0}', space=sflag, size = 0x4, scoped, tag = 'scoped memory for light_lyric_processor.1']
    #allocation31 [shape = 'u8[512]{0}', space=vmem, size = 0x400, scoped, tag = 'input window, operand 20, single buffered']
    #allocation32 [shape = 'u8[512]{0}', space=vmem, size = 0x400, scoped, tag = 'input window, operand 21, single buffered']
    #allocation33 [shape = 's32[1]{0}', space=sflag, size = 0x4, scoped, tag = 'scoped memory for light_lyric_processor.1']
    #allocation34 [shape = 'u8[131072]{0}', space=vmem, size = 0x20000, scoped, tag = 'input window, operand 22, single buffered']
    #allocation35 [shape = 'u8[2048]{0}', space=vmem, size = 0x800, scoped, tag = 'input window, operand 23, single buffered']
    #allocation36 [shape = 's32[1]{0}', space=sflag, size = 0x4, scoped, tag = 'scoped memory for light_lyric_processor.1']
    #allocation37 [shape = 'u8[131072]{0}', space=vmem, size = 0x20000, scoped, tag = 'input window, operand 24, single buffered']
    #allocation38 [shape = 'u8[512]{0}', space=vmem, size = 0x400, scoped, tag = 'input window, operand 25, single buffered']
    #allocation39 [shape = 's32[1]{0}', space=sflag, size = 0x4, scoped, tag = 'scoped memory for light_lyric_processor.1']
    #allocation40 [shape = 'u8[512]{0}', space=vmem, size = 0x400, scoped, tag = 'input window, operand 26, single buffered']
    #allocation41 [shape = 'u8[512]{0}', space=vmem, size = 0x400, scoped, tag = 'input window, operand 27, single buffered']
    #allocation42 [shape = 's32[1]{0}', space=sflag, size = 0x4, scoped, tag = 'scoped memory for light_lyric_processor.1']
    #allocation43 [shape = 'u8[32768]{0}', space=vmem, size = 0x8000, scoped, tag = 'input window, operand 28, single buffered']
    #allocation44 [shape = 'u8[512]{0}', space=vmem, size = 0x400, scoped, tag = 'input window, operand 29, single buffered']
    #allocation45 [shape = 's32[1]{0}', space=sflag, size = 0x4, scoped, tag = 'scoped memory for light_lyric_processor.1']
    #allocation46 [shape = 'u8[1024]{0}', space=vmem, size = 0x400, scoped, tag = 'output window, operand 0, single buffered']
    %66 = vsyncpa [#allocation3], 0
    %67 = vsyncpa [#allocation6], 0
    %68 = vsyncpa [#allocation9], 0
    %69 = vsyncpa [#allocation12], 0
    %70 = vsyncpa [#allocation15], 0
    %71 = vsyncpa [#allocation18], 0
    %72 = vsyncpa [#allocation21], 0
    %73 = vsyncpa [#allocation24], 0
    %74 = vsyncpa [#allocation27], 0
    %75 = vsyncpa [#allocation30], 0
    %76 = vsyncpa [#allocation33], 0
    %77 = vsyncpa [#allocation36], 0
    %78 = vsyncpa [#allocation39], 0
    %79 = vsyncpa [#allocation42], 0
    %80 = vsyncpa [#allocation45], 0
    %81 = vsyncpa [#allocation4], 0
    // Predicated region
    $region2: #{light_lyric_processor.1} parent=1 // pred_check
      _
    $region3: #{light_lyric_processor.1} parent=1 // pred_check_branch
      %83 = sbr.rel (0) target = $region5
    $region4: #{light_lyric_processor.1} parent=1 // pred_region
      _
    $region5: #{light_lyric_processor.1} parent=1 // pred_fallthru
      _
    // Predicated region
    $region6: #{light_lyric_processor.1} parent=1 // pred_check
      _
    $region7: #{light_lyric_processor.1} parent=1 // pred_check_branch
      %85 = sbr.rel (0) target = $region9
    $region8: #{light_lyric_processor.1} parent=1 // pred_region
      _
    $region9: #{light_lyric_processor.1} parent=1 // pred_fallthru
      _
    // Predicated region
    $region10: #{light_lyric_processor.1} parent=1 // pred_check
      _
    $region11: #{light_lyric_processor.1} parent=1 // pred_check_branch
      %87 = sbr.rel (0) target = $region13
    $region12: #{light_lyric_processor.1} parent=1 // pred_region
      %s89 = ssub.s32 16, 16
      %90 = vsyncadd [#allocation3], %s89
      %s92 = sshll.u32 [#allocation2], 4
      %s93 = int_to_ptr.vmem [resolvable:$true] %s92
      %95 = dma.hbm_to_vmem [thread:$0]  %s5, 16, %s93, [#allocation3]
    $region13: #{light_lyric_processor.1} parent=1 // pred_fallthru
      _
    // Predicated region
    $region14: #{light_lyric_processor.1} parent=1 // pred_check
      _
    $region15: #{light_lyric_processor.1} parent=1 // pred_check_branch
      %97 = sbr.rel (0) target = $region17
    $region16: #{light_lyric_processor.1} parent=1 // pred_region
      %s99 = ssub.s32 16, 16
      %100 = vsyncadd [#allocation6], %s99
      %s102 = sshll.u32 [#allocation5], 4
      %s103 = int_to_ptr.vmem [resolvable:$true] %s102
      %105 = dma.hbm_to_vmem [thread:$0]  %s7, 16, %s103, [#allocation6]
    $region17: #{light_lyric_processor.1} parent=1 // pred_fallthru
      _
    // Predicated region
    $region18: #{light_lyric_processor.1} parent=1 // pred_check
      _
    $region19: #{light_lyric_processor.1} parent=1 // pred_check_branch
      %107 = sbr.rel (0) target = $region21
    $region20: #{light_lyric_processor.1} parent=1 // pred_region
      %s109 = ssub.s32 6144, 6144
      %110 = vsyncadd [#allocation6], %s109
      %s111 = sshll.u32 [#allocation7], 4
      %s112 = int_to_ptr.vmem [resolvable:$true] %s111
      %117 = dma.hbm_to_vmem [thread:$0]  %s9, 6144, %s112, [#allocation6], 384, 384, 24
    $region21: #{light_lyric_processor.1} parent=1 // pred_fallthru
      _
    // Predicated region
    $region22: #{light_lyric_processor.1} parent=1 // pred_check
      _
    $region23: #{light_lyric_processor.1} parent=1 // pred_check_branch
      %119 = sbr.rel (0) target = $region25
    $region24: #{light_lyric_processor.1} parent=1 // pred_region
      %s121 = ssub.s32 96, 96
      %122 = vsyncadd [#allocation9], %s121
      %s124 = sshll.u32 [#allocation8], 4
      %s125 = int_to_ptr.vmem [resolvable:$true] %s124
      %127 = dma.hbm_to_vmem [thread:$0]  %s11, 96, %s125, [#allocation9]
    $region25: #{light_lyric_processor.1} parent=1 // pred_fallthru
      _
    // Predicated region
    $region26: #{light_lyric_processor.1} parent=1 // pred_check
      _
    $region27: #{light_lyric_processor.1} parent=1 // pred_check_branch
      %129 = sbr.rel (0) target = $region29
    $region28: #{light_lyric_processor.1} parent=1 // pred_region
      %s131 = ssub.s32 1024, 1024
      %132 = vsyncadd [#allocation9], %s131
      %s133 = sshll.u32 [#allocation10], 4
      %s134 = int_to_ptr.vmem [resolvable:$true] %s133
      %139 = dma.hbm_to_vmem [thread:$0]  %s13, 1024, %s134, [#allocation9], 64, 64, 4
    $region29: #{light_lyric_processor.1} parent=1 // pred_fallthru
      _
    // Predicated region
    $region30: #{light_lyric_processor.1} parent=1 // pred_check
      _
    $region31: #{light_lyric_processor.1} parent=1 // pred_check_branch
      %141 = sbr.rel (0) target = $region33
    $region32: #{light_lyric_processor.1} parent=1 // pred_region
      %s143 = ssub.s32 16, 16
      %144 = vsyncadd [#allocation12], %s143
      %s146 = sshll.u32 [#allocation11], 4
      %s147 = int_to_ptr.vmem [resolvable:$true] %s146
      %149 = dma.hbm_to_vmem [thread:$0]  %s15, 16, %s147, [#allocation12]
    $region33: #{light_lyric_processor.1} parent=1 // pred_fallthru
      _
    // Predicated region
    $region34: #{light_lyric_processor.1} parent=1 // pred_check
      _
    $region35: #{light_lyric_processor.1} parent=1 // pred_check_branch
      %151 = sbr.rel (0) target = $region37
    $region36: #{light_lyric_processor.1} parent=1 // pred_region
      %s153 = ssub.s32 16, 16
      %154 = vsyncadd [#allocation12], %s153
      %s156 = sshll.u32 [#allocation13], 4
      %s157 = int_to_ptr.vmem [resolvable:$true] %s156
      %159 = dma.hbm_to_vmem [thread:$0]  %s17, 16, %s157, [#allocation12]
    $region37: #{light_lyric_processor.1} parent=1 // pred_fallthru
      _
    // Predicated region
    $region38: #{light_lyric_processor.1} parent=1 // pred_check
      _
    $region39: #{light_lyric_processor.1} parent=1 // pred_check_branch
      %161 = sbr.rel (0) target = $region41
    $region40: #{light_lyric_processor.1} parent=1 // pred_region
      %s163 = ssub.s32 16, 16
      %164 = vsyncadd [#allocation15], %s163
      %s166 = sshll.u32 [#allocation14], 4
      %s167 = int_to_ptr.vmem [resolvable:$true] %s166
      %169 = dma.hbm_to_vmem [thread:$0]  %s19, 16, %s167, [#allocation15]
    $region41: #{light_lyric_processor.1} parent=1 // pred_fallthru
      _
    // Predicated region
    $region42: #{light_lyric_processor.1} parent=1 // pred_check
      _
    $region43: #{light_lyric_processor.1} parent=1 // pred_check_branch
      %171 = sbr.rel (0) target = $region45
    $region44: #{light_lyric_processor.1} parent=1 // pred_region
      %s173 = ssub.s32 4096, 4096
      %174 = vsyncadd [#allocation15], %s173
      %s175 = sshll.u32 [#allocation16], 4
      %s176 = int_to_ptr.vmem [resolvable:$true] %s175
      %181 = dma.hbm_to_vmem [thread:$0]  %s21, 4096, %s176, [#allocation15], 256, 256, 16
    $region45: #{light_lyric_processor.1} parent=1 // pred_fallthru
      _
    // Predicated region
    $region46: #{light_lyric_processor.1} parent=1 // pred_check
      _
    $region47: #{light_lyric_processor.1} parent=1 // pred_check_branch
      %183 = sbr.rel (0) target = $region49
    $region48: #{light_lyric_processor.1} parent=1 // pred_region
      %s185 = ssub.s32 64, 64
      %186 = vsyncadd [#allocation18], %s185
      %s188 = sshll.u32 [#allocation17], 4
      %s189 = int_to_ptr.vmem [resolvable:$true] %s188
      %191 = dma.hbm_to_vmem [thread:$0]  %s23, 64, %s189, [#allocation18]
    $region49: #{light_lyric_processor.1} parent=1 // pred_fallthru
      _
    // Predicated region
    $region50: #{light_lyric_processor.1} parent=1 // pred_check
      _
    $region51: #{light_lyric_processor.1} parent=1 // pred_check_branch
      %193 = sbr.rel (0) target = $region53
    $region52: #{light_lyric_processor.1} parent=1 // pred_region
      %s195 = ssub.s32 4096, 4096
      %196 = vsyncadd [#allocation18], %s195
      %s197 = sshll.u32 [#allocation19], 4
      %s198 = int_to_ptr.vmem [resolvable:$true] %s197
      %203 = dma.hbm_to_vmem [thread:$0]  %s25, 4096, %s198, [#allocation18], 64, 64, 4
    $region53: #{light_lyric_processor.1} parent=1 // pred_fallthru
      _
    // Predicated region
    $region54: #{light_lyric_processor.1} parent=1 // pred_check
      _
    $region55: #{light_lyric_processor.1} parent=1 // pred_check_branch
      %205 = sbr.rel (0) target = $region57
    $region56: #{light_lyric_processor.1} parent=1 // pred_region
      %s207 = ssub.s32 16, 16
      %208 = vsyncadd [#allocation21], %s207
      %s210 = sshll.u32 [#allocation20], 4
      %s211 = int_to_ptr.vmem [resolvable:$true] %s210
      %213 = dma.hbm_to_vmem [thread:$0]  %s27, 16, %s211, [#allocation21]
    $region57: #{light_lyric_processor.1} parent=1 // pred_fallthru
      _
    // Predicated region
    $region58: #{light_lyric_processor.1} parent=1 // pred_check
      _
    $region59: #{light_lyric_processor.1} parent=1 // pred_check_branch
      %215 = sbr.rel (0) target = $region61
    $region60: #{light_lyric_processor.1} parent=1 // pred_region
      %s217 = ssub.s32 16, 16
      %218 = vsyncadd [#allocation21], %s217
      %s220 = sshll.u32 [#allocation22], 4
      %s221 = int_to_ptr.vmem [resolvable:$true] %s220
      %223 = dma.hbm_to_vmem [thread:$0]  %s29, 16, %s221, [#allocation21]
    $region61: #{light_lyric_processor.1} parent=1 // pred_fallthru
      _
    // Predicated region
    $region62: #{light_lyric_processor.1} parent=1 // pred_check
      _
    $region63: #{light_lyric_processor.1} parent=1 // pred_check_branch
      %225 = sbr.rel (0) target = $region65
    $region64: #{light_lyric_processor.1} parent=1 // pred_region
      %s227 = ssub.s32 16, 16
      %228 = vsyncadd [#allocation24], %s227
      %s230 = sshll.u32 [#allocation23], 4
      %s231 = int_to_ptr.vmem [resolvable:$true] %s230
      %233 = dma.hbm_to_vmem [thread:$0]  %s31, 16, %s231, [#allocation24]
    $region65: #{light_lyric_processor.1} parent=1 // pred_fallthru
      _
    // Predicated region
    $region66: #{light_lyric_processor.1} parent=1 // pred_check
      _
    $region67: #{light_lyric_processor.1} parent=1 // pred_check_branch
      %235 = sbr.rel (0) target = $region69
    $region68: #{light_lyric_processor.1} parent=1 // pred_region
      %s237 = ssub.s32 6144, 6144
      %238 = vsyncadd [#allocation24], %s237
      %s239 = sshll.u32 [#allocation25], 4
      %s240 = int_to_ptr.vmem [resolvable:$true] %s239
      %245 = dma.hbm_to_vmem [thread:$0]  %s33, 6144, %s240, [#allocation24], 384, 384, 24
    $region69: #{light_lyric_processor.1} parent=1 // pred_fallthru
      _
    // Predicated region
    $region70: #{light_lyric_processor.1} parent=1 // pred_check
      _
    $region71: #{light_lyric_processor.1} parent=1 // pred_check_branch
      %247 = sbr.rel (0) target = $region73
    $region72: #{light_lyric_processor.1} parent=1 // pred_region
      %s249 = ssub.s32 96, 96
      %250 = vsyncadd [#allocation27], %s249
      %s252 = sshll.u32 [#allocation26], 4
      %s253 = int_to_ptr.vmem [resolvable:$true] %s252
      %255 = dma.hbm_to_vmem [thread:$0]  %s35, 96, %s253, [#allocation27]
    $region73: #{light_lyric_processor.1} parent=1 // pred_fallthru
      _
    // Predicated region
    $region74: #{light_lyric_processor.1} parent=1 // pred_check
      _
    $region75: #{light_lyric_processor.1} parent=1 // pred_check_branch
      %257 = sbr.rel (0) target = $region77
    $region76: #{light_lyric_processor.1} parent=1 // pred_region
      %s259 = ssub.s32 1024, 1024
      %260 = vsyncadd [#allocation27], %s259
      %s261 = sshll.u32 [#allocation28], 4
      %s262 = int_to_ptr.vmem [resolvable:$true] %s261
      %267 = dma.hbm_to_vmem [thread:$0]  %s37, 1024, %s262, [#allocation27], 64, 64, 4
    $region77: #{light_lyric_processor.1} parent=1 // pred_fallthru
      _
    // Predicated region
    $region78: #{light_lyric_processor.1} parent=1 // pred_check
      _
    $region79: #{light_lyric_processor.1} parent=1 // pred_check_branch
      %269 = sbr.rel (0) target = $region81
    $region80: #{light_lyric_processor.1} parent=1 // pred_region
      %s271 = ssub.s32 16, 16
      %272 = vsyncadd [#allocation30], %s271
      %s274 = sshll.u32 [#allocation29], 4
      %s275 = int_to_ptr.vmem [resolvable:$true] %s274
      %277 = dma.hbm_to_vmem [thread:$0]  %s39, 16, %s275, [#allocation30]
    $region81: #{light_lyric_processor.1} parent=1 // pred_fallthru
      _
    // Predicated region
    $region82: #{light_lyric_processor.1} parent=1 // pred_check
      _
    $region83: #{light_lyric_processor.1} parent=1 // pred_check_branch
      %279 = sbr.rel (0) target = $region85
    $region84: #{light_lyric_processor.1} parent=1 // pred_region
      %s281 = ssub.s32 16, 16
      %282 = vsyncadd [#allocation30], %s281
      %s284 = sshll.u32 [#allocation31], 4
      %s285 = int_to_ptr.vmem [resolvable:$true] %s284
      %287 = dma.hbm_to_vmem [thread:$0]  %s41, 16, %s285, [#allocation30]
    $region85: #{light_lyric_processor.1} parent=1 // pred_fallthru
      _
    // Predicated region
    $region86: #{light_lyric_processor.1} parent=1 // pred_check
      _
    $region87: #{light_lyric_processor.1} parent=1 // pred_check_branch
      %289 = sbr.rel (0) target = $region89
    $region88: #{light_lyric_processor.1} parent=1 // pred_region
      %s291 = ssub.s32 16, 16
      %292 = vsyncadd [#allocation33], %s291
      %s294 = sshll.u32 [#allocation32], 4
      %s295 = int_to_ptr.vmem [resolvable:$true] %s294
      %297 = dma.hbm_to_vmem [thread:$0]  %s43, 16, %s295, [#allocation33]
    $region89: #{light_lyric_processor.1} parent=1 // pred_fallthru
      _
    // Predicated region
    $region90: #{light_lyric_processor.1} parent=1 // pred_check
      _
    $region91: #{light_lyric_processor.1} parent=1 // pred_check_branch
      %299 = sbr.rel (0) target = $region93
    $region92: #{light_lyric_processor.1} parent=1 // pred_region
      %s301 = ssub.s32 4096, 4096
      %302 = vsyncadd [#allocation33], %s301
      %s303 = sshll.u32 [#allocation34], 4
      %s304 = int_to_ptr.vmem [resolvable:$true] %s303
      %309 = dma.hbm_to_vmem [thread:$0]  %s45, 4096, %s304, [#allocation33], 256, 256, 16
    $region93: #{light_lyric_processor.1} parent=1 // pred_fallthru
      _
    // Predicated region
    $region94: #{light_lyric_processor.1} parent=1 // pred_check
      _
    $region95: #{light_lyric_processor.1} parent=1 // pred_check_branch
      %311 = sbr.rel (0) target = $region97
    $region96: #{light_lyric_processor.1} parent=1 // pred_region
      %s313 = ssub.s32 64, 64
      %314 = vsyncadd [#allocation36], %s313
      %s316 = sshll.u32 [#allocation35], 4
      %s317 = int_to_ptr.vmem [resolvable:$true] %s316
      %319 = dma.hbm_to_vmem [thread:$0]  %s47, 64, %s317, [#allocation36]
    $region97: #{light_lyric_processor.1} parent=1 // pred_fallthru
      _
    // Predicated region
    $region98: #{light_lyric_processor.1} parent=1 // pred_check
      _
    $region99: #{light_lyric_processor.1} parent=1 // pred_check_branch
      %321 = sbr.rel (0) target = $region101
    $region100: #{light_lyric_processor.1} parent=1 // pred_region
      %s323 = ssub.s32 4096, 4096
      %324 = vsyncadd [#allocation36], %s323
      %s325 = sshll.u32 [#allocation37], 4
      %s326 = int_to_ptr.vmem [resolvable:$true] %s325
      %331 = dma.hbm_to_vmem [thread:$0]  %s49, 4096, %s326, [#allocation36], 64, 64, 4
    $region101: #{light_lyric_processor.1} parent=1 // pred_fallthru
      _
    // Predicated region
    $region102: #{light_lyric_processor.1} parent=1 // pred_check
      _
    $region103: #{light_lyric_processor.1} parent=1 // pred_check_branch
      %333 = sbr.rel (0) target = $region105
    $region104: #{light_lyric_processor.1} parent=1 // pred_region
      %s335 = ssub.s32 16, 16
      %336 = vsyncadd [#allocation39], %s335
      %s338 = sshll.u32 [#allocation38], 4
      %s339 = int_to_ptr.vmem [resolvable:$true] %s338
      %341 = dma.hbm_to_vmem [thread:$0]  %s51, 16, %s339, [#allocation39]
    $region105: #{light_lyric_processor.1} parent=1 // pred_fallthru
      _
    // Predicated region
    $region106: #{light_lyric_processor.1} parent=1 // pred_check
      _
    $region107: #{light_lyric_processor.1} parent=1 // pred_check_branch
      %343 = sbr.rel (0) target = $region109
    $region108: #{light_lyric_processor.1} parent=1 // pred_region
      %s345 = ssub.s32 16, 16
      %346 = vsyncadd [#allocation39], %s345
      %s348 = sshll.u32 [#allocation40], 4
      %s349 = int_to_ptr.vmem [resolvable:$true] %s348
      %351 = dma.hbm_to_vmem [thread:$0]  %s53, 16, %s349, [#allocation39]
    $region109: #{light_lyric_processor.1} parent=1 // pred_fallthru
      _
    // Predicated region
    $region110: #{light_lyric_processor.1} parent=1 // pred_check
      _
    $region111: #{light_lyric_processor.1} parent=1 // pred_check_branch
      %353 = sbr.rel (0) target = $region113
    $region112: #{light_lyric_processor.1} parent=1 // pred_region
      %s355 = ssub.s32 16, 16
      %356 = vsyncadd [#allocation42], %s355
      %s358 = sshll.u32 [#allocation41], 4
      %s359 = int_to_ptr.vmem [resolvable:$true] %s358
      %361 = dma.hbm_to_vmem [thread:$0]  %s55, 16, %s359, [#allocation42]
    $region113: #{light_lyric_processor.1} parent=1 // pred_fallthru
      _
    // Predicated region
    $region114: #{light_lyric_processor.1} parent=1 // pred_check
      _
    $region115: #{light_lyric_processor.1} parent=1 // pred_check_branch
      %363 = sbr.rel (0) target = $region117
    $region116: #{light_lyric_processor.1} parent=1 // pred_region
      %s365 = ssub.s32 1024, 1024
      %366 = vsyncadd [#allocation42], %s365
      %s367 = sshll.u32 [#allocation43], 4
      %s368 = int_to_ptr.vmem [resolvable:$true] %s367
      %373 = dma.hbm_to_vmem [thread:$0]  %s57, 1024, %s368, [#allocation42], 64, 64, 4
    $region117: #{light_lyric_processor.1} parent=1 // pred_fallthru
      _
    // Predicated region
    $region118: #{light_lyric_processor.1} parent=1 // pred_check
      _
    $region119: #{light_lyric_processor.1} parent=1 // pred_check_branch
      %375 = sbr.rel (0) target = $region121
    $region120: #{light_lyric_processor.1} parent=1 // pred_region
      %s377 = ssub.s32 16, 16
      %378 = vsyncadd [#allocation45], %s377
      %s380 = sshll.u32 [#allocation44], 4
      %s381 = int_to_ptr.vmem [resolvable:$true] %s380
      %383 = dma.hbm_to_vmem [thread:$0]  %s59, 16, %s381, [#allocation45]
    $region121: #{light_lyric_processor.1} parent=1 // pred_fallthru
      _
    // Predicated region
    $region122: #{light_lyric_processor.1} parent=1 // pred_check
      _
    $region123: #{light_lyric_processor.1} parent=1 // pred_check_branch
      %385 = sbr.rel (0) target = $region125
    $region124: #{light_lyric_processor.1} parent=1 // pred_region
      %386 = dma.done [#allocation3], 16
    $region125: #{light_lyric_processor.1} parent=1 // pred_fallthru
      _
    // Predicated region
    $region126: #{light_lyric_processor.1} parent=1 // pred_check
      _
    $region127: #{light_lyric_processor.1} parent=1 // pred_check_branch
      %388 = sbr.rel (0) target = $region129
    $region128: #{light_lyric_processor.1} parent=1 // pred_region
      %389 = dma.done [#allocation6], 16
    $region129: #{light_lyric_processor.1} parent=1 // pred_fallthru
      _
    // Predicated region
    $region130: #{light_lyric_processor.1} parent=1 // pred_check
      _
    $region131: #{light_lyric_processor.1} parent=1 // pred_check_branch
      %391 = sbr.rel (0) target = $region133
    $region132: #{light_lyric_processor.1} parent=1 // pred_region
      %392 = dma.done [#allocation6], 6144
    $region133: #{light_lyric_processor.1} parent=1 // pred_fallthru
      _
    // Predicated region
    $region134: #{light_lyric_processor.1} parent=1 // pred_check
      _
    $region135: #{light_lyric_processor.1} parent=1 // pred_check_branch
      %394 = sbr.rel (0) target = $region137
    $region136: #{light_lyric_processor.1} parent=1 // pred_region
      %395 = dma.done [#allocation9], 96
    $region137: #{light_lyric_processor.1} parent=1 // pred_fallthru
      _
    // Predicated region
    $region138: #{light_lyric_processor.1} parent=1 // pred_check
      _
    $region139: #{light_lyric_processor.1} parent=1 // pred_check_branch
      %397 = sbr.rel (0) target = $region141
    $region140: #{light_lyric_processor.1} parent=1 // pred_region
      %398 = dma.done [#allocation9], 1024
    $region141: #{light_lyric_processor.1} parent=1 // pred_fallthru
      _
    // Predicated region
    $region142: #{light_lyric_processor.1} parent=1 // pred_check
      _
    $region143: #{light_lyric_processor.1} parent=1 // pred_check_branch
      %400 = sbr.rel (0) target = $region145
    $region144: #{light_lyric_processor.1} parent=1 // pred_region
      %401 = dma.done [#allocation12], 16
    $region145: #{light_lyric_processor.1} parent=1 // pred_fallthru
      _
    // Predicated region
    $region146: #{light_lyric_processor.1} parent=1 // pred_check
      _
    $region147: #{light_lyric_processor.1} parent=1 // pred_check_branch
      %403 = sbr.rel (0) target = $region149
    $region148: #{light_lyric_processor.1} parent=1 // pred_region
      %404 = dma.done [#allocation12], 16
    $region149: #{light_lyric_processor.1} parent=1 // pred_fallthru
      _
    // Predicated region
    $region150: #{light_lyric_processor.1} parent=1 // pred_check
      _
    $region151: #{light_lyric_processor.1} parent=1 // pred_check_branch
      %406 = sbr.rel (0) target = $region153
    $region152: #{light_lyric_processor.1} parent=1 // pred_region
      %407 = dma.done [#allocation15], 16
    $region153: #{light_lyric_processor.1} parent=1 // pred_fallthru
      _
    // Predicated region
    $region154: #{light_lyric_processor.1} parent=1 // pred_check
      _
    $region155: #{light_lyric_processor.1} parent=1 // pred_check_branch
      %409 = sbr.rel (0) target = $region157
    $region156: #{light_lyric_processor.1} parent=1 // pred_region
      %410 = dma.done [#allocation15], 4096
    $region157: #{light_lyric_processor.1} parent=1 // pred_fallthru
      _
    // Predicated region
    $region158: #{light_lyric_processor.1} parent=1 // pred_check
      _
    $region159: #{light_lyric_processor.1} parent=1 // pred_check_branch
      %412 = sbr.rel (0) target = $region161
    $region160: #{light_lyric_processor.1} parent=1 // pred_region
      %413 = dma.done [#allocation18], 64
    $region161: #{light_lyric_processor.1} parent=1 // pred_fallthru
      _
    // Predicated region
    $region162: #{light_lyric_processor.1} parent=1 // pred_check
      _
    $region163: #{light_lyric_processor.1} parent=1 // pred_check_branch
      %415 = sbr.rel (0) target = $region165
    $region164: #{light_lyric_processor.1} parent=1 // pred_region
      %416 = dma.done [#allocation18], 4096
    $region165: #{light_lyric_processor.1} parent=1 // pred_fallthru
      _
    // Predicated region
    $region166: #{light_lyric_processor.1} parent=1 // pred_check
      _
    $region167: #{light_lyric_processor.1} parent=1 // pred_check_branch
      %418 = sbr.rel (0) target = $region169
    $region168: #{light_lyric_processor.1} parent=1 // pred_region
      %419 = dma.done [#allocation21], 16
    $region169: #{light_lyric_processor.1} parent=1 // pred_fallthru
      _
    // Predicated region
    $region170: #{light_lyric_processor.1} parent=1 // pred_check
      _
    $region171: #{light_lyric_processor.1} parent=1 // pred_check_branch
      %421 = sbr.rel (0) target = $region173
    $region172: #{light_lyric_processor.1} parent=1 // pred_region
      %422 = dma.done [#allocation21], 16
    $region173: #{light_lyric_processor.1} parent=1 // pred_fallthru
      _
    // Predicated region
    $region174: #{light_lyric_processor.1} parent=1 // pred_check
      _
    $region175: #{light_lyric_processor.1} parent=1 // pred_check_branch
      %424 = sbr.rel (0) target = $region177
    $region176: #{light_lyric_processor.1} parent=1 // pred_region
      %425 = dma.done [#allocation24], 16
    $region177: #{light_lyric_processor.1} parent=1 // pred_fallthru
      _
    // Predicated region
    $region178: #{light_lyric_processor.1} parent=1 // pred_check
      _
    $region179: #{light_lyric_processor.1} parent=1 // pred_check_branch
      %427 = sbr.rel (0) target = $region181
    $region180: #{light_lyric_processor.1} parent=1 // pred_region
      %428 = dma.done [#allocation24], 6144
    $region181: #{light_lyric_processor.1} parent=1 // pred_fallthru
      _
    // Predicated region
    $region182: #{light_lyric_processor.1} parent=1 // pred_check
      _
    $region183: #{light_lyric_processor.1} parent=1 // pred_check_branch
      %430 = sbr.rel (0) target = $region185
    $region184: #{light_lyric_processor.1} parent=1 // pred_region
      %431 = dma.done [#allocation27], 96
    $region185: #{light_lyric_processor.1} parent=1 // pred_fallthru
      _
    // Predicated region
    $region186: #{light_lyric_processor.1} parent=1 // pred_check
      _
    $region187: #{light_lyric_processor.1} parent=1 // pred_check_branch
      %433 = sbr.rel (0) target = $region189
    $region188: #{light_lyric_processor.1} parent=1 // pred_region
      %434 = dma.done [#allocation27], 1024
    $region189: #{light_lyric_processor.1} parent=1 // pred_fallthru
      _
    // Predicated region
    $region190: #{light_lyric_processor.1} parent=1 // pred_check
      _
    $region191: #{light_lyric_processor.1} parent=1 // pred_check_branch
      %436 = sbr.rel (0) target = $region193
    $region192: #{light_lyric_processor.1} parent=1 // pred_region
      %437 = dma.done [#allocation30], 16
    $region193: #{light_lyric_processor.1} parent=1 // pred_fallthru
      _
    // Predicated region
    $region194: #{light_lyric_processor.1} parent=1 // pred_check
      _
    $region195: #{light_lyric_processor.1} parent=1 // pred_check_branch
      %439 = sbr.rel (0) target = $region197
    $region196: #{light_lyric_processor.1} parent=1 // pred_region
      %440 = dma.done [#allocation30], 16
    $region197: #{light_lyric_processor.1} parent=1 // pred_fallthru
      _
    // Predicated region
    $region198: #{light_lyric_processor.1} parent=1 // pred_check
      _
    $region199: #{light_lyric_processor.1} parent=1 // pred_check_branch
      %442 = sbr.rel (0) target = $region201
    $region200: #{light_lyric_processor.1} parent=1 // pred_region
      %443 = dma.done [#allocation33], 16
    $region201: #{light_lyric_processor.1} parent=1 // pred_fallthru
      _
    // Predicated region
    $region202: #{light_lyric_processor.1} parent=1 // pred_check
      _
    $region203: #{light_lyric_processor.1} parent=1 // pred_check_branch
      %445 = sbr.rel (0) target = $region205
    $region204: #{light_lyric_processor.1} parent=1 // pred_region
      %446 = dma.done [#allocation33], 4096
    $region205: #{light_lyric_processor.1} parent=1 // pred_fallthru
      _
    // Predicated region
    $region206: #{light_lyric_processor.1} parent=1 // pred_check
      _
    $region207: #{light_lyric_processor.1} parent=1 // pred_check_branch
      %448 = sbr.rel (0) target = $region209
    $region208: #{light_lyric_processor.1} parent=1 // pred_region
      %449 = dma.done [#allocation36], 64
    $region209: #{light_lyric_processor.1} parent=1 // pred_fallthru
      _
    // Predicated region
    $region210: #{light_lyric_processor.1} parent=1 // pred_check
      _
    $region211: #{light_lyric_processor.1} parent=1 // pred_check_branch
      %451 = sbr.rel (0) target = $region213
    $region212: #{light_lyric_processor.1} parent=1 // pred_region
      %452 = dma.done [#allocation36], 4096
    $region213: #{light_lyric_processor.1} parent=1 // pred_fallthru
      _
    // Predicated region
    $region214: #{light_lyric_processor.1} parent=1 // pred_check
      _
    $region215: #{light_lyric_processor.1} parent=1 // pred_check_branch
      %454 = sbr.rel (0) target = $region217
    $region216: #{light_lyric_processor.1} parent=1 // pred_region
      %455 = dma.done [#allocation39], 16
    $region217: #{light_lyric_processor.1} parent=1 // pred_fallthru
      _
    // Predicated region
    $region218: #{light_lyric_processor.1} parent=1 // pred_check
      _
    $region219: #{light_lyric_processor.1} parent=1 // pred_check_branch
      %457 = sbr.rel (0) target = $region221
    $region220: #{light_lyric_processor.1} parent=1 // pred_region
      %458 = dma.done [#allocation39], 16
    $region221: #{light_lyric_processor.1} parent=1 // pred_fallthru
      _
    // Predicated region
    $region222: #{light_lyric_processor.1} parent=1 // pred_check
      _
    $region223: #{light_lyric_processor.1} parent=1 // pred_check_branch
      %460 = sbr.rel (0) target = $region225
    $region224: #{light_lyric_processor.1} parent=1 // pred_region
      %461 = dma.done [#allocation42], 16
    $region225: #{light_lyric_processor.1} parent=1 // pred_fallthru
      _
    // Predicated region
    $region226: #{light_lyric_processor.1} parent=1 // pred_check
      _
    $region227: #{light_lyric_processor.1} parent=1 // pred_check_branch
      %463 = sbr.rel (0) target = $region229
    $region228: #{light_lyric_processor.1} parent=1 // pred_region
      %464 = dma.done [#allocation42], 1024
    $region229: #{light_lyric_processor.1} parent=1 // pred_fallthru
      _
    // Predicated region
    $region230: #{light_lyric_processor.1} parent=1 // pred_check
      _
    $region231: #{light_lyric_processor.1} parent=1 // pred_check_branch
      %466 = sbr.rel (0) target = $region233
    $region232: #{light_lyric_processor.1} parent=1 // pred_region
      %467 = dma.done [#allocation45], 16
    $region233: #{light_lyric_processor.1} parent=1 // pred_fallthru
      _
    %v469 = vld [vmem:[%s1] sm:$0xff]
    %v470 = vld [vmem:[%s1 + $0x8] sm:$0xff]
    %v471 = vld [vmem:[%s3] sm:$0x3]
    %v474 = vunpack.c.l.s4 1966171168
    %v475 = vunpack.c.0.s8 %v474
    %v476 = vlaneseq
    %v477 = vshrl.u32 %v476, 7
    %v478 = vsub.s32 %v475, %v477
    %v479 = vrot.slane %v471, %v478
    %v480 = vcombine.high %v479, %v479
    %v482 = vunpack.c.l.s4 1966171168
    %v483 = vunpack.c.0.s8 %v482
    %v484 = vlaneseq
    %v485 = vshrl.u32 %v484, 7
    %v486 = vsub.s32 %v483, %v485
    %v487 = vrot.slane %v479, %v486
    %v489 = vunpack.c.l.s4 1966171168
    %v490 = vunpack.c.0.s8 %v489
    %v491 = vlaneseq
    %v492 = vshrl.u32 %v491, 7
    %v493 = vsub.s32 %v490, %v492
    %v494 = vrot.slane %v480, %v493
    %v495 = vlaneseq
    %v496 = vshrl.u32 %v495, 7
    %v497 = vsub.s32 0, %v496
    %v498 = vrot.slane %v487, %v497
    %v499 = vlaneseq
    %v500 = vshrl.u32 %v499, 7
    %v501 = vsub.s32 0, %v500
    %v502 = vrot.slane %v494, %v501
    %v505 = vld [vmem:[#allocation2] sm:$0x1]
    %v506 = vld [vmem:[#allocation5] sm:$0x1]
    %507 = vadd.xlane.f32.xlu0 %v469
    %v508 = vpop.xlane.xlu0 %507
    %509 = vadd.xlane.f32.xlu0 %v470
    %v510 = vpop.xlane.xlu0 %509
    %v511 = vrcp.pop 128.0
    %v512 = vmul.f32 %v508, %v511
    %v513 = vmul.f32 %v510, %v511
    %v514 = vsub.f32 %v469, %v512
    %v515 = vsub.f32 %v470, %v513
    %v516 = vmul.f32 %v514, %v514
    %v517 = vmul.f32 %v515, %v515
    %518 = vadd.xlane.f32.xlu0 %v516
    %v519 = vpop.xlane.xlu0 %518
    %520 = vadd.xlane.f32.xlu0 %v517
    %v521 = vpop.xlane.xlu0 %520
    %v522 = vmul.f32 %v519, %v511
    %v523 = vmul.f32 %v521, %v511
    %v524 = vadd.f32 %v522, 1e-12
    %v525 = vadd.f32 %v523, 1e-12
    %v526 = vrsqrt.pop %v524
    %v527 = vrsqrt.pop %v525
    %v528 = vmul.f32 %v514, %v526
    %v529 = vmul.f32 %v515, %v527
    %v531 = vlaneseq
    %v532 = vshrl.u32 %v531, 7
    %v533 = vsub.s32 0, %v532
    %v534 = vrot.slane %v505, %v533
    %v536 = vmul.f32 %v528, %v534
    %v537 = vmul.f32 %v529, %v534
    %v539 = vlaneseq
    %v540 = vshrl.u32 %v539, 7
    %v541 = vsub.s32 0, %v540
    %v542 = vrot.slane %v506, %v541
    %v544 = vadd.f32 %v536, %v542
    %v545 = vadd.f32 %v537, %v542
    %v546 = vld [vmem:[#allocation7] sm:$0xff]
    %v547 = vld [vmem:[#allocation7 + $0x8] sm:$0xff]
    %v548 = vld [vmem:[#allocation7 + $0x10] sm:$0xff]
    %v549 = vld [vmem:[#allocation7 + $0x18] sm:$0xff]
    %v550 = vld [vmem:[#allocation7 + $0x20] sm:$0xff]
    %v551 = vld [vmem:[#allocation7 + $0x28] sm:$0xff]
    %v552 = vld [vmem:[#allocation7 + $0x30] sm:$0xff]
    %v553 = vld [vmem:[#allocation7 + $0x38] sm:$0xff]
    %v554 = vld [vmem:[#allocation7 + $0x40] sm:$0xff]
    %v555 = vld [vmem:[#allocation7 + $0x48] sm:$0xff]
    %v556 = vld [vmem:[#allocation7 + $0x50] sm:$0xff]
    %v557 = vld [vmem:[#allocation7 + $0x58] sm:$0xff]
    %v558 = vld [vmem:[#allocation7 + $0x60] sm:$0xff]
    %v559 = vld [vmem:[#allocation7 + $0x68] sm:$0xff]
    %v560 = vld [vmem:[#allocation7 + $0x70] sm:$0xff]
    %v561 = vld [vmem:[#allocation7 + $0x78] sm:$0xff]
    %v562 = vld [vmem:[#allocation7 + $0x80] sm:$0xff]
    %v563 = vld [vmem:[#allocation7 + $0x88] sm:$0xff]
    %v564 = vld [vmem:[#allocation7 + $0x90] sm:$0xff]
    %v565 = vld [vmem:[#allocation7 + $0x98] sm:$0xff]
    %v566 = vld [vmem:[#allocation7 + $0xa0] sm:$0xff]
    %v567 = vld [vmem:[#allocation7 + $0xa8] sm:$0xff]
    %v568 = vld [vmem:[#allocation7 + $0xb0] sm:$0xff]
    %v569 = vld [vmem:[#allocation7 + $0xb8] sm:$0xff]
    %v570 = vld [vmem:[#allocation7 + $0xc0] sm:$0xff]
    %v571 = vld [vmem:[#allocation7 + $0xc8] sm:$0xff]
    %v572 = vld [vmem:[#allocation7 + $0xd0] sm:$0xff]
    %v573 = vld [vmem:[#allocation7 + $0xd8] sm:$0xff]
    %v574 = vld [vmem:[#allocation7 + $0xe0] sm:$0xff]
    %v575 = vld [vmem:[#allocation7 + $0xe8] sm:$0xff]
    %v576 = vld [vmem:[#allocation7 + $0xf0] sm:$0xff]
    %v577 = vld [vmem:[#allocation7 + $0xf8] sm:$0xff]
    %v578 = vld [vmem:[#allocation7 + $0x100] sm:$0xff]
    %v579 = vld [vmem:[#allocation7 + $0x108] sm:$0xff]
    %v580 = vld [vmem:[#allocation7 + $0x110] sm:$0xff]
    %v581 = vld [vmem:[#allocation7 + $0x118] sm:$0xff]
    %v582 = vld [vmem:[#allocation7 + $0x120] sm:$0xff]
    %v583 = vld [vmem:[#allocation7 + $0x128] sm:$0xff]
    %v584 = vld [vmem:[#allocation7 + $0x130] sm:$0xff]
    %v585 = vld [vmem:[#allocation7 + $0x138] sm:$0xff]
    %v586 = vld [vmem:[#allocation7 + $0x140] sm:$0xff]
    %v587 = vld [vmem:[#allocation7 + $0x148] sm:$0xff]
    %v588 = vld [vmem:[#allocation7 + $0x150] sm:$0xff]
    %v589 = vld [vmem:[#allocation7 + $0x158] sm:$0xff]
    %v590 = vld [vmem:[#allocation7 + $0x160] sm:$0xff]
    %v591 = vld [vmem:[#allocation7 + $0x168] sm:$0xff]
    %v592 = vld [vmem:[#allocation7 + $0x170] sm:$0xff]
    %v593 = vld [vmem:[#allocation7 + $0x178] sm:$0xff]
    %v594 = vld [vmem:[#allocation8] sm:$0x3f]
    %v595 = vld [vmem:[#allocation10] sm:$0xf]
    %v596 = vld [vmem:[#allocation10 + $0x4] sm:$0xf]
    %v597 = vld [vmem:[#allocation10 + $0x8] sm:$0xf]
    %v598 = vld [vmem:[#allocation10 + $0xc] sm:$0xf]
    %v599 = vld [vmem:[#allocation10 + $0x10] sm:$0xf]
    %v600 = vld [vmem:[#allocation10 + $0x14] sm:$0xf]
    %v601 = vld [vmem:[#allocation10 + $0x18] sm:$0xf]
    %v602 = vld [vmem:[#allocation10 + $0x1c] sm:$0xf]
    %v603 = vld [vmem:[#allocation10 + $0x20] sm:$0xf]
    %v604 = vld [vmem:[#allocation10 + $0x24] sm:$0xf]
    %v605 = vld [vmem:[#allocation10 + $0x28] sm:$0xf]
    %v606 = vld [vmem:[#allocation10 + $0x2c] sm:$0xf]
    %v607 = vld [vmem:[#allocation10 + $0x30] sm:$0xf]
    %v608 = vld [vmem:[#allocation10 + $0x34] sm:$0xf]
    %v609 = vld [vmem:[#allocation10 + $0x38] sm:$0xf]
    %v610 = vld [vmem:[#allocation10 + $0x3c] sm:$0xf]
    %v611 = vld [vmem:[#allocation11] sm:$0x1]
    %v612 = vld [vmem:[#allocation13] sm:$0x1]
    %v613 = vld [vmem:[#allocation14] sm:$0x1]
    %v614 = vld [vmem:[#allocation16] sm:$0xff]
    %v615 = vld [vmem:[#allocation16 + $0x8] sm:$0xff]
    %v616 = vld [vmem:[#allocation16 + $0x10] sm:$0xff]
    %v617 = vld [vmem:[#allocation16 + $0x18] sm:$0xff]
    %v618 = vld [vmem:[#allocation16 + $0x20] sm:$0xff]
    %v619 = vld [vmem:[#allocation16 + $0x28] sm:$0xff]
    %v620 = vld [vmem:[#allocation16 + $0x30] sm:$0xff]
    %v621 = vld [vmem:[#allocation16 + $0x38] sm:$0xff]
    %v622 = vld [vmem:[#allocation16 + $0x40] sm:$0xff]
    %v623 = vld [vmem:[#allocation16 + $0x48] sm:$0xff]
    %v624 = vld [vmem:[#allocation16 + $0x50] sm:$0xff]
    %v625 = vld [vmem:[#allocation16 + $0x58] sm:$0xff]
    %v626 = vld [vmem:[#allocation16 + $0x60] sm:$0xff]
    %v627 = vld [vmem:[#allocation16 + $0x68] sm:$0xff]
    %v628 = vld [vmem:[#allocation16 + $0x70] sm:$0xff]
    %v629 = vld [vmem:[#allocation16 + $0x78] sm:$0xff]
    %v630 = vld [vmem:[#allocation16 + $0x80] sm:$0xff]
    %v631 = vld [vmem:[#allocation16 + $0x88] sm:$0xff]
    %v632 = vld [vmem:[#allocation16 + $0x90] sm:$0xff]
    %v633 = vld [vmem:[#allocation16 + $0x98] sm:$0xff]
    %v634 = vld [vmem:[#allocation16 + $0xa0] sm:$0xff]
    %v635 = vld [vmem:[#allocation16 + $0xa8] sm:$0xff]
    %v636 = vld [vmem:[#allocation16 + $0xb0] sm:$0xff]
    %v637 = vld [vmem:[#allocation16 + $0xb8] sm:$0xff]
    %v638 = vld [vmem:[#allocation16 + $0xc0] sm:$0xff]
    %v639 = vld [vmem:[#allocation16 + $0xc8] sm:$0xff]
    %v640 = vld [vmem:[#allocation16 + $0xd0] sm:$0xff]
    %v641 = vld [vmem:[#allocation16 + $0xd8] sm:$0xff]
    %v642 = vld [vmem:[#allocation16 + $0xe0] sm:$0xff]
    %v643 = vld [vmem:[#allocation16 + $0xe8] sm:$0xff]
    %v644 = vld [vmem:[#allocation16 + $0xf0] sm:$0xff]
    %v645 = vld [vmem:[#allocation16 + $0xf8] sm:$0xff]
    %v646 = vld [vmem:[#allocation17] sm:$0xf]
    %v647 = vld [vmem:[#allocation19] sm:$0xf]
    %v648 = vld [vmem:[#allocation19 + $0x4] sm:$0xf]
    %v649 = vld [vmem:[#allocation19 + $0x8] sm:$0xf]
    %v650 = vld [vmem:[#allocation19 + $0xc] sm:$0xf]
    %v651 = vld [vmem:[#allocation19 + $0x10] sm:$0xf]
    %v652 = vld [vmem:[#allocation19 + $0x14] sm:$0xf]
    %v653 = vld [vmem:[#allocation19 + $0x18] sm:$0xf]
    %v654 = vld [vmem:[#allocation19 + $0x1c] sm:$0xf]
    %v655 = vld [vmem:[#allocation19 + $0x20] sm:$0xf]
    %v656 = vld [vmem:[#allocation19 + $0x24] sm:$0xf]
    %v657 = vld [vmem:[#allocation19 + $0x28] sm:$0xf]
    %v658 = vld [vmem:[#allocation19 + $0x2c] sm:$0xf]
    %v659 = vld [vmem:[#allocation19 + $0x30] sm:$0xf]
    %v660 = vld [vmem:[#allocation19 + $0x34] sm:$0xf]
    %v661 = vld [vmem:[#allocation19 + $0x38] sm:$0xf]
    %v662 = vld [vmem:[#allocation19 + $0x3c] sm:$0xf]
    %v663 = vld [vmem:[#allocation19 + $0x40] sm:$0xf]
    %v664 = vld [vmem:[#allocation19 + $0x44] sm:$0xf]
    %v665 = vld [vmem:[#allocation19 + $0x48] sm:$0xf]
    %v666 = vld [vmem:[#allocation19 + $0x4c] sm:$0xf]
    %v667 = vld [vmem:[#allocation19 + $0x50] sm:$0xf]
    %v668 = vld [vmem:[#allocation19 + $0x54] sm:$0xf]
    %v669 = vld [vmem:[#allocation19 + $0x58] sm:$0xf]
    %v670 = vld [vmem:[#allocation19 + $0x5c] sm:$0xf]
    %v671 = vld [vmem:[#allocation19 + $0x60] sm:$0xf]
    %v672 = vld [vmem:[#allocation19 + $0x64] sm:$0xf]
    %v673 = vld [vmem:[#allocation19 + $0x68] sm:$0xf]
    %v674 = vld [vmem:[#allocation19 + $0x6c] sm:$0xf]
    %v675 = vld [vmem:[#allocation19 + $0x70] sm:$0xf]
    %v676 = vld [vmem:[#allocation19 + $0x74] sm:$0xf]
    %v677 = vld [vmem:[#allocation19 + $0x78] sm:$0xf]
    %v678 = vld [vmem:[#allocation19 + $0x7c] sm:$0xf]
    %v679 = vld [vmem:[#allocation19 + $0x80] sm:$0xf]
    %v680 = vld [vmem:[#allocation19 + $0x84] sm:$0xf]
    %v681 = vld [vmem:[#allocation19 + $0x88] sm:$0xf]
    %v682 = vld [vmem:[#allocation19 + $0x8c] sm:$0xf]
    %v683 = vld [vmem:[#allocation19 + $0x90] sm:$0xf]
    %v684 = vld [vmem:[#allocation19 + $0x94] sm:$0xf]
    %v685 = vld [vmem:[#allocation19 + $0x98] sm:$0xf]
    %v686 = vld [vmem:[#allocation19 + $0x9c] sm:$0xf]
    %v687 = vld [vmem:[#allocation19 + $0xa0] sm:$0xf]
    %v688 = vld [vmem:[#allocation19 + $0xa4] sm:$0xf]
    %v689 = vld [vmem:[#allocation19 + $0xa8] sm:$0xf]
    %v690 = vld [vmem:[#allocation19 + $0xac] sm:$0xf]
    %v691 = vld [vmem:[#allocation19 + $0xb0] sm:$0xf]
    %v692 = vld [vmem:[#allocation19 + $0xb4] sm:$0xf]
    %v693 = vld [vmem:[#allocation19 + $0xb8] sm:$0xf]
    %v694 = vld [vmem:[#allocation19 + $0xbc] sm:$0xf]
    %v695 = vld [vmem:[#allocation19 + $0xc0] sm:$0xf]
    %v696 = vld [vmem:[#allocation19 + $0xc4] sm:$0xf]
    %v697 = vld [vmem:[#allocation19 + $0xc8] sm:$0xf]
    %v698 = vld [vmem:[#allocation19 + $0xcc] sm:$0xf]
    %v699 = vld [vmem:[#allocation19 + $0xd0] sm:$0xf]
    %v700 = vld [vmem:[#allocation19 + $0xd4] sm:$0xf]
    %v701 = vld [vmem:[#allocation19 + $0xd8] sm:$0xf]
    %v702 = vld [vmem:[#allocation19 + $0xdc] sm:$0xf]
    %v703 = vld [vmem:[#allocation19 + $0xe0] sm:$0xf]
    %v704 = vld [vmem:[#allocation19 + $0xe4] sm:$0xf]
    %v705 = vld [vmem:[#allocation19 + $0xe8] sm:$0xf]
    %v706 = vld [vmem:[#allocation19 + $0xec] sm:$0xf]
    %v707 = vld [vmem:[#allocation19 + $0xf0] sm:$0xf]
    %v708 = vld [vmem:[#allocation19 + $0xf4] sm:$0xf]
    %v709 = vld [vmem:[#allocation19 + $0xf8] sm:$0xf]
    %v710 = vld [vmem:[#allocation19 + $0xfc] sm:$0xf]
    %v711 = vld [vmem:[#allocation20] sm:$0x1]
    %v712 = vld [vmem:[#allocation22] sm:$0x1]
    %v713 = vld [vmem:[#allocation23] sm:$0x1]
    %v714 = vpack.c.bf16 %v545, %v544
    %v716 = vlaneseq
    %v717 = vshrl.u32 %v716, 7
    %v718 = vsub.s32 0, %v717
    %v719 = vrot.slane %v594, %v718
    %v720 = vlaneseq
    %v721 = vshrl.u32 %v720, 7
    %v722 = vsub.s32 1, %v721
    %v723 = vrot.slane %v594, %v722
    %v724 = vlaneseq
    %v725 = vshrl.u32 %v724, 7
    %v726 = vsub.s32 2, %v725
    %v727 = vrot.slane %v594, %v726
    %v728 = vlaneseq
    %v729 = vshrl.u32 %v728, 7
    %v730 = vsub.s32 3, %v729
    %v731 = vrot.slane %v594, %v730
    %v732 = vlaneseq
    %v733 = vshrl.u32 %v732, 7
    %v734 = vsub.s32 4, %v733
    %v735 = vrot.slane %v594, %v734
    %v736 = vlaneseq
    %v737 = vshrl.u32 %v736, 7
    %v738 = vsub.s32 5, %v737
    %v739 = vrot.slane %v594, %v738
    %v794 = vunpack.c.l.b16 %v546
    %v795 = vunpack.c.h.b16 %v546
    %v796 = vunpack.c.l.b16 %v547
    %v797 = vunpack.c.h.b16 %v547
    %v798 = vunpack.c.l.b16 %v548
    %v799 = vunpack.c.h.b16 %v548
    %v800 = vunpack.c.l.b16 %v549
    %v801 = vunpack.c.h.b16 %v549
    %v802 = vunpack.c.l.b16 %v550
    %v803 = vunpack.c.h.b16 %v550
    %v804 = vunpack.c.l.b16 %v551
    %v805 = vunpack.c.h.b16 %v551
    %v806 = vunpack.c.l.b16 %v552
    %v807 = vunpack.c.h.b16 %v552
    %v808 = vunpack.c.l.b16 %v553
    %v809 = vunpack.c.h.b16 %v553
    %v810 = vunpack.c.l.b16 %v554
    %v811 = vunpack.c.h.b16 %v554
    %v812 = vunpack.c.l.b16 %v555
    %v813 = vunpack.c.h.b16 %v555
    %v814 = vunpack.c.l.b16 %v556
    %v815 = vunpack.c.h.b16 %v556
    %v816 = vunpack.c.l.b16 %v557
    %v817 = vunpack.c.h.b16 %v557
    %v818 = vunpack.c.l.b16 %v558
    %v819 = vunpack.c.h.b16 %v558
    %v820 = vunpack.c.l.b16 %v559
    %v821 = vunpack.c.h.b16 %v559
    %v822 = vunpack.c.l.b16 %v560
    %v823 = vunpack.c.h.b16 %v560
    %v824 = vunpack.c.l.b16 %v561
    %v825 = vunpack.c.h.b16 %v561
    %v826 = vunpack.c.l.b16 %v562
    %v827 = vunpack.c.h.b16 %v562
    %v828 = vunpack.c.l.b16 %v563
    %v829 = vunpack.c.h.b16 %v563
    %v830 = vunpack.c.l.b16 %v564
    %v831 = vunpack.c.h.b16 %v564
    %v832 = vunpack.c.l.b16 %v565
    %v833 = vunpack.c.h.b16 %v565
    %v834 = vunpack.c.l.b16 %v566
    %v835 = vunpack.c.h.b16 %v566
    %v836 = vunpack.c.l.b16 %v567
    %v837 = vunpack.c.h.b16 %v567
    %v838 = vunpack.c.l.b16 %v568
    %v839 = vunpack.c.h.b16 %v568
    %v840 = vunpack.c.l.b16 %v569
    %v841 = vunpack.c.h.b16 %v569
    %v842 = vunpack.c.l.b16 %v570
    %v843 = vunpack.c.h.b16 %v570
    %v844 = vunpack.c.l.b16 %v571
    %v845 = vunpack.c.h.b16 %v571
    %v846 = vunpack.c.l.b16 %v572
    %v847 = vunpack.c.h.b16 %v572
    %v848 = vunpack.c.l.b16 %v573
    %v849 = vunpack.c.h.b16 %v573
    %v850 = vunpack.c.l.b16 %v574
    %v851 = vunpack.c.h.b16 %v574
    %v852 = vunpack.c.l.b16 %v575
    %v853 = vunpack.c.h.b16 %v575
    %v854 = vunpack.c.l.b16 %v576
    %v855 = vunpack.c.h.b16 %v576
    %v856 = vunpack.c.l.b16 %v577
    %v857 = vunpack.c.h.b16 %v577
    %v858 = vunpack.c.l.b16 %v578
    %v859 = vunpack.c.h.b16 %v578
    %v860 = vunpack.c.l.b16 %v579
    %v861 = vunpack.c.h.b16 %v579
    %v862 = vunpack.c.l.b16 %v580
    %v863 = vunpack.c.h.b16 %v580
    %v864 = vunpack.c.l.b16 %v581
    %v865 = vunpack.c.h.b16 %v581
    %v866 = vunpack.c.l.b16 %v582
    %v867 = vunpack.c.h.b16 %v582
    %v868 = vunpack.c.l.b16 %v583
    %v869 = vunpack.c.h.b16 %v583
    %v870 = vunpack.c.l.b16 %v584
    %v871 = vunpack.c.h.b16 %v584
    %v872 = vunpack.c.l.b16 %v585
    %v873 = vunpack.c.h.b16 %v585
    %v874 = vunpack.c.l.b16 %v586
    %v875 = vunpack.c.h.b16 %v586
    %v876 = vunpack.c.l.b16 %v587
    %v877 = vunpack.c.h.b16 %v587
    %v878 = vunpack.c.l.b16 %v588
    %v879 = vunpack.c.h.b16 %v588
    %v880 = vunpack.c.l.b16 %v589
    %v881 = vunpack.c.h.b16 %v589
    %v882 = vunpack.c.l.b16 %v590
    %v883 = vunpack.c.h.b16 %v590
    %v884 = vunpack.c.l.b16 %v591
    %v885 = vunpack.c.h.b16 %v591
    %v886 = vunpack.c.l.b16 %v592
    %v887 = vunpack.c.h.b16 %v592
    %v888 = vunpack.c.l.b16 %v593
    %v889 = vunpack.c.h.b16 %v593
    %v890 = vpack.c.b16 %v800, %v794
    %v891 = vpack.c.b16 %v801, %v795
    %v892 = vpack.c.b16 %v802, %v796
    %v893 = vpack.c.b16 %v803, %v797
    %v894 = vpack.c.b16 %v804, %v798
    %v895 = vpack.c.b16 %v805, %v799
    %v896 = vpack.c.b16 %v812, %v806
    %v897 = vpack.c.b16 %v813, %v807
    %v898 = vpack.c.b16 %v814, %v808
    %v899 = vpack.c.b16 %v815, %v809
    %v900 = vpack.c.b16 %v816, %v810
    %v901 = vpack.c.b16 %v817, %v811
    %v902 = vpack.c.b16 %v824, %v818
    %v903 = vpack.c.b16 %v825, %v819
    %v904 = vpack.c.b16 %v826, %v820
    %v905 = vpack.c.b16 %v827, %v821
    %v906 = vpack.c.b16 %v828, %v822
    %v907 = vpack.c.b16 %v829, %v823
    %v908 = vpack.c.b16 %v836, %v830
    %v909 = vpack.c.b16 %v837, %v831
    %v910 = vpack.c.b16 %v838, %v832
    %v911 = vpack.c.b16 %v839, %v833
    %v912 = vpack.c.b16 %v840, %v834
    %v913 = vpack.c.b16 %v841, %v835
    %v914 = vpack.c.b16 %v848, %v842
    %v915 = vpack.c.b16 %v849, %v843
    %v916 = vpack.c.b16 %v850, %v844
    %v917 = vpack.c.b16 %v851, %v845
    %v918 = vpack.c.b16 %v852, %v846
    %v919 = vpack.c.b16 %v853, %v847
    %v920 = vpack.c.b16 %v860, %v854
    %v921 = vpack.c.b16 %v861, %v855
    %v922 = vpack.c.b16 %v862, %v856
    %v923 = vpack.c.b16 %v863, %v857
    %v924 = vpack.c.b16 %v864, %v858
    %v925 = vpack.c.b16 %v865, %v859
    %v926 = vpack.c.b16 %v872, %v866
    %v927 = vpack.c.b16 %v873, %v867
    %v928 = vpack.c.b16 %v874, %v868
    %v929 = vpack.c.b16 %v875, %v869
    %v930 = vpack.c.b16 %v876, %v870
    %v931 = vpack.c.b16 %v877, %v871
    %v932 = vpack.c.b16 %v884, %v878
    %v933 = vpack.c.b16 %v885, %v879
    %v934 = vpack.c.b16 %v886, %v880
    %v935 = vpack.c.b16 %v887, %v881
    %v936 = vpack.c.b16 %v888, %v882
    %v937 = vpack.c.b16 %v889, %v883
    %986 = vmatprep.subr.bf16.mxu0 %v891
    %987 = vmatpush1.bf16.msra.mxu0 %v890
    %988 = vmatprep.subr.bf16.mxu0 %v897
    %989 = vmatpush1.bf16.msra.mxu0 %v896
    %990 = vmatprep.subr.bf16.mxu0 %v903
    %991 = vmatpush1.bf16.msra.mxu0 %v902
    %992 = vmatprep.subr.bf16.mxu0 %v909
    %993 = vmatpush1.bf16.msra.mxu0 %v908
    %994 = vmatprep.subr.bf16.mxu0 %v915
    %995 = vmatpush1.bf16.msra.mxu0 %v914
    %996 = vmatprep.subr.bf16.mxu0 %v921
    %997 = vmatpush1.bf16.msra.mxu0 %v920
    %998 = vmatprep.subr.bf16.mxu0 %v927
    %999 = vmatpush1.bf16.msra.mxu0 %v926
    %1000 = vmatprep.subr.bf16.mxu0 %v933
    %1001 = vmatpush1.bf16.msra.mxu0 %v932
    %1002 = vmatprep.subr.bf16.mxu0 0
    %1003 = vmatpush1.bf16.msra.mxu0 0
    %1004 = vmatprep.subr.bf16.mxu0 0
    %1005 = vmatpush1.bf16.msra.mxu0 0
    %1006 = vmatprep.subr.bf16.mxu0 0
    %1007 = vmatpush1.bf16.msra.mxu0 0
    %1008 = vmatprep.subr.bf16.mxu0 0
    %1009 = vmatpush1.bf16.msra.mxu0 0
    %1010 = vmatprep.subr.bf16.mxu0 0
    %1011 = vmatpush1.bf16.msra.mxu0 0
    %1012 = vmatprep.subr.bf16.mxu0 0
    %1013 = vmatpush1.bf16.msra.mxu0 0
    %1014 = vmatprep.subr.bf16.mxu0 0
    %1015 = vmatpush1.bf16.msra.mxu0 0
    %1016 = vmatprep.subr.bf16.mxu0 0
    %1017 = vmatpush1.bf16.msra.mxu0 0
    %1018 = vmatprep.mubr.bf16.mxu0 0
    %1019 = vmatmul.mubr.bf16.gmra.mrb[0].mxu0 %v714
    %v1020 = vpop.f32.mrb[0].mxu0
    %v1021 = vadd.f32 %v719, %v1020
    %v1022 = vpop.f32.mrb[0].mxu0
    %v1023 = vadd.f32 %v723, %v1022
    %v1024 = vpop.f32.mrb[0].mxu0
    %v1025 = vadd.f32 %v719, %v1024
    %v1026 = vpop.f32.mrb[0].mxu0
    %v1027 = vadd.f32 %v723, %v1026
    %1028 = vdwg.mxu0
    %1029 = vmatprep.subr.bf16.mxu0 %v893
    %1030 = vmatpush1.bf16.msra.mxu0 %v892
    %1031 = vmatprep.subr.bf16.mxu0 %v899
    %1032 = vmatpush1.bf16.msra.mxu0 %v898
    %1033 = vmatprep.subr.bf16.mxu0 %v905
    %1034 = vmatpush1.bf16.msra.mxu0 %v904
    %1035 = vmatprep.subr.bf16.mxu0 %v911
    %1036 = vmatpush1.bf16.msra.mxu0 %v910
    %1037 = vmatprep.subr.bf16.mxu0 %v917
    %1038 = vmatpush1.bf16.msra.mxu0 %v916
    %1039 = vmatprep.subr.bf16.mxu0 %v923
    %1040 = vmatpush1.bf16.msra.mxu0 %v922
    %1041 = vmatprep.subr.bf16.mxu0 %v929
    %1042 = vmatpush1.bf16.msra.mxu0 %v928
    %1043 = vmatprep.subr.bf16.mxu0 %v935
    %1044 = vmatpush1.bf16.msra.mxu0 %v934
    %1045 = vmatprep.subr.bf16.mxu0 0
    %1046 = vmatpush1.bf16.msra.mxu0 0
    %1047 = vmatprep.subr.bf16.mxu0 0
    %1048 = vmatpush1.bf16.msra.mxu0 0
    %1049 = vmatprep.subr.bf16.mxu0 0
    %1050 = vmatpush1.bf16.msra.mxu0 0
    %1051 = vmatprep.subr.bf16.mxu0 0
    %1052 = vmatpush1.bf16.msra.mxu0 0
    %1053 = vmatprep.subr.bf16.mxu0 0
    %1054 = vmatpush1.bf16.msra.mxu0 0
    %1055 = vmatprep.subr.bf16.mxu0 0
    %1056 = vmatpush1.bf16.msra.mxu0 0
    %1057 = vmatprep.subr.bf16.mxu0 0
    %1058 = vmatpush1.bf16.msra.mxu0 0
    %1059 = vmatprep.subr.bf16.mxu0 0
    %1060 = vmatpush1.bf16.msra.mxu0 0
    %1061 = vmatprep.mubr.bf16.mxu0 0
    %1062 = vmatmul.mubr.bf16.gmra.mrb[0].mxu0 %v714
    %v1063 = vpop.f32.mrb[0].mxu0
    %v1064 = vadd.f32 %v727, %v1063
    %v1065 = vpop.f32.mrb[0].mxu0
    %v1066 = vadd.f32 %v731, %v1065
    %v1067 = vpop.f32.mrb[0].mxu0
    %v1068 = vadd.f32 %v727, %v1067
    %v1069 = vpop.f32.mrb[0].mxu0
    %v1070 = vadd.f32 %v731, %v1069
    %1071 = vdwg.mxu0
    %1072 = vmatprep.subr.bf16.mxu0 %v895
    %1073 = vmatpush1.bf16.msra.mxu0 %v894
    %1074 = vmatprep.subr.bf16.mxu0 %v901
    %1075 = vmatpush1.bf16.msra.mxu0 %v900
    %1076 = vmatprep.subr.bf16.mxu0 %v907
    %1077 = vmatpush1.bf16.msra.mxu0 %v906
    %1078 = vmatprep.subr.bf16.mxu0 %v913
    %1079 = vmatpush1.bf16.msra.mxu0 %v912
    %1080 = vmatprep.subr.bf16.mxu0 %v919
    %1081 = vmatpush1.bf16.msra.mxu0 %v918
    %1082 = vmatprep.subr.bf16.mxu0 %v925
    %1083 = vmatpush1.bf16.msra.mxu0 %v924
    %1084 = vmatprep.subr.bf16.mxu0 %v931
    %1085 = vmatpush1.bf16.msra.mxu0 %v930
    %1086 = vmatprep.subr.bf16.mxu0 %v937
    %1087 = vmatpush1.bf16.msra.mxu0 %v936
    %1088 = vmatprep.subr.bf16.mxu0 0
    %1089 = vmatpush1.bf16.msra.mxu0 0
    %1090 = vmatprep.subr.bf16.mxu0 0
    %1091 = vmatpush1.bf16.msra.mxu0 0
    %1092 = vmatprep.subr.bf16.mxu0 0
    %1093 = vmatpush1.bf16.msra.mxu0 0
    %1094 = vmatprep.subr.bf16.mxu0 0
    %1095 = vmatpush1.bf16.msra.mxu0 0
    %1096 = vmatprep.subr.bf16.mxu0 0
    %1097 = vmatpush1.bf16.msra.mxu0 0
    %1098 = vmatprep.subr.bf16.mxu0 0
    %1099 = vmatpush1.bf16.msra.mxu0 0
    %1100 = vmatprep.subr.bf16.mxu0 0
    %1101 = vmatpush1.bf16.msra.mxu0 0
    %1102 = vmatprep.subr.bf16.mxu0 0
    %1103 = vmatpush1.bf16.msra.mxu0 0
    %1104 = vmatprep.mubr.bf16.mxu0 0
    %1105 = vmatmul.mubr.bf16.gmra.mrb[0].mxu0 %v714
    %v1106 = vpop.f32.mrb[0].mxu0
    %v1107 = vadd.f32 %v735, %v1106
    %v1108 = vpop.f32.mrb[0].mxu0
    %v1109 = vadd.f32 %v739, %v1108
    %v1110 = vpop.f32.mrb[0].mxu0
    %v1111 = vadd.f32 %v735, %v1110
    %v1112 = vpop.f32.mrb[0].mxu0
    %v1113 = vadd.f32 %v739, %v1112
    %1114 = vdwg.mxu0
    %v1115 = vpack.c.bf16 %v1021, %v1021
    %v1116 = vpack.c.bf16 %v1023, %v1023
    %v1117 = vpack.c.bf16 %v1064, %v1064
    %v1118 = vpack.c.bf16 %v1066, %v1066
    %v1119 = vpack.c.bf16 %v1107, %v1107
    %v1120 = vpack.c.bf16 %v1109, %v1109
    %v1121 = vpack.c.bf16 %v1025, %v1025
    %v1122 = vpack.c.bf16 %v1027, %v1027
    %v1123 = vpack.c.bf16 %v1068, %v1068
    %v1124 = vpack.c.bf16 %v1070, %v1070
    %v1125 = vpack.c.bf16 %v1111, %v1111
    %v1126 = vpack.c.bf16 %v1113, %v1113
    %1127 = vmatprep.subr.bf16.mxu0 0
    %1128 = vmatpush1.bf16.xpose.msra.mxu0 %v1117
    %1129 = vmatprep.subr.bf16.mxu0 0
    %1130 = vmatpush1.bf16.xpose.msra.mxu0 0
    %1131 = vmatprep.subr.bf16.mxu0 0
    %1132 = vmatpush1.bf16.xpose.msra.mxu0 0
    %1133 = vmatprep.subr.bf16.mxu0 0
    %1134 = vmatpush1.bf16.xpose.msra.mxu0 0
    %1135 = vmatprep.subr.bf16.mxu0 0
    %1136 = vmatpush1.bf16.xpose.msra.mxu0 0
    %1137 = vmatprep.subr.bf16.mxu0 0
    %1138 = vmatpush1.bf16.xpose.msra.mxu0 0
    %1139 = vmatprep.subr.bf16.mxu0 0
    %1140 = vmatpush1.bf16.xpose.msra.mxu0 0
    %1141 = vmatprep.subr.bf16.mxu0 0
    %1142 = vmatpush1.bf16.xpose.msra.mxu0 0
    %1143 = vmatprep.subr.bf16.mxu0 0
    %1144 = vmatpush1.bf16.xpose.msra.mxu0 0
    %1145 = vmatprep.subr.bf16.mxu0 0
    %1146 = vmatpush1.bf16.xpose.msra.mxu0 0
    %1147 = vmatprep.subr.bf16.mxu0 0
    %1148 = vmatpush1.bf16.xpose.msra.mxu0 0
    %1149 = vmatprep.subr.bf16.mxu0 0
    %1150 = vmatpush1.bf16.xpose.msra.mxu0 0
    %1151 = vmatprep.subr.bf16.mxu0 0
    %1152 = vmatpush1.bf16.xpose.msra.mxu0 0
    %1153 = vmatprep.subr.bf16.mxu0 0
    %1154 = vmatpush1.bf16.xpose.msra.mxu0 0
    %1155 = vmatprep.subr.bf16.mxu0 0
    %1156 = vmatpush1.bf16.xpose.msra.mxu0 0
    %1157 = vmatprep.subr.bf16.mxu0 0
    %1158 = vmatpush1.bf16.xpose.msra.mxu0 0
    %1159 = vmatprep.mubr.bf16.mxu0 0
    %1160 = vmatmul.mubr.bf16.gmra.mrb[0].mxu0 %v1115
    %v1161 = vpop.f32.mrb[0].mxu0
    %v1162 = vadd.f32 %v498, %v1161
    %v1163 = vpop.f32.mrb[0].mxu0
    %v1164 = vpop.f32.mrb[0].mxu0
    %v1165 = vpop.f32.mrb[0].mxu0
    %1166 = vdwg.mxu0
    %1167 = vmatprep.subr.bf16.mxu0 0
    %1168 = vmatpush1.bf16.xpose.msra.mxu0 %v1123
    %1169 = vmatprep.subr.bf16.mxu0 0
    %1170 = vmatpush1.bf16.xpose.msra.mxu0 0
    %1171 = vmatprep.subr.bf16.mxu0 0
    %1172 = vmatpush1.bf16.xpose.msra.mxu0 0
    %1173 = vmatprep.subr.bf16.mxu0 0
    %1174 = vmatpush1.bf16.xpose.msra.mxu0 0
    %1175 = vmatprep.subr.bf16.mxu0 0
    %1176 = vmatpush1.bf16.xpose.msra.mxu0 0
    %1177 = vmatprep.subr.bf16.mxu0 0
    %1178 = vmatpush1.bf16.xpose.msra.mxu0 0
    %1179 = vmatprep.subr.bf16.mxu0 0
    %1180 = vmatpush1.bf16.xpose.msra.mxu0 0
    %1181 = vmatprep.subr.bf16.mxu0 0
    %1182 = vmatpush1.bf16.xpose.msra.mxu0 0
    %1183 = vmatprep.subr.bf16.mxu0 0
    %1184 = vmatpush1.bf16.xpose.msra.mxu0 0
    %1185 = vmatprep.subr.bf16.mxu0 0
    %1186 = vmatpush1.bf16.xpose.msra.mxu0 0
    %1187 = vmatprep.subr.bf16.mxu0 0
    %1188 = vmatpush1.bf16.xpose.msra.mxu0 0
    %1189 = vmatprep.subr.bf16.mxu0 0
    %1190 = vmatpush1.bf16.xpose.msra.mxu0 0
    %1191 = vmatprep.subr.bf16.mxu0 0
    %1192 = vmatpush1.bf16.xpose.msra.mxu0 0
    %1193 = vmatprep.subr.bf16.mxu0 0
    %1194 = vmatpush1.bf16.xpose.msra.mxu0 0
    %1195 = vmatprep.subr.bf16.mxu0 0
    %1196 = vmatpush1.bf16.xpose.msra.mxu0 0
    %1197 = vmatprep.subr.bf16.mxu0 0
    %1198 = vmatpush1.bf16.xpose.msra.mxu0 0
    %1199 = vmatprep.mubr.bf16.mxu0 0
    %1200 = vmatmul.mubr.bf16.gmra.mrb[0].mxu0 %v1121
    %v1201 = vpop.f32.mrb[0].mxu0
    %v1202 = vadd.f32 %v502, %v1201
    %v1203 = vpop.f32.mrb[0].mxu0
    %v1204 = vpop.f32.mrb[0].mxu0
    %v1205 = vpop.f32.mrb[0].mxu0
    %1206 = vdwg.mxu0
    %vm1207 = vcmask 64512
    %v1208 = vsel %vm1207, %v1162, -inf
    %1209 = vmax.xlane.f32.xlu0 %v1208
    %v1210 = vpop.xlane.xlu0 %1209
    %v1211 = vsel %vm1207, %v1202, -inf
    %1212 = vmax.xlane.f32.xlu0 %v1211
    %v1213 = vpop.xlane.xlu0 %1212
    %v1214 = vsub.f32 %v1162, %v1210
    %v1215 = vsub.f32 %v1202, %v1213
    %v1216 = vmul.f32 %v1214, 1.442695
    %v1217 = vpow.pop %v1216
    %v1218 = vmul.f32 %v1215, 1.442695
    %v1219 = vpow.pop %v1218
    %v1220 = vsel %vm1207, %v1217, 0.0
    %1221 = vadd.xlane.f32.xlu0 %v1220
    %v1222 = vpop.xlane.xlu0 %1221
    %v1223 = vsel %vm1207, %v1219, 0.0
    %1224 = vadd.xlane.f32.xlu0 %v1223
    %v1225 = vpop.xlane.xlu0 %1224
    %v1226 = vrcp.pop %v1222
    %v1227 = vrcp.pop %v1225
    %v1228 = vmul.f32 %v1217, %v1226
    %v1229 = vmul.f32 %v1219, %v1227
    %v1230 = vpack.c.bf16 %v1228, %v1228
    %v1231 = vpack.c.bf16 %v1229, %v1229
    %1232 = vmatprep.subr.bf16.mxu0 0
    %1233 = vmatpush1.bf16.xpose.msra.mxu0 %v1118
    %1234 = vmatprep.subr.bf16.mxu0 0
    %1235 = vmatpush1.bf16.xpose.msra.mxu0 0
    %1236 = vmatprep.subr.bf16.mxu0 0
    %1237 = vmatpush1.bf16.xpose.msra.mxu0 0
    %1238 = vmatprep.subr.bf16.mxu0 0
    %1239 = vmatpush1.bf16.xpose.msra.mxu0 0
    %1240 = vmatprep.subr.bf16.mxu0 0
    %1241 = vmatpush1.bf16.xpose.msra.mxu0 0
    %1242 = vmatprep.subr.bf16.mxu0 0
    %1243 = vmatpush1.bf16.xpose.msra.mxu0 0
    %1244 = vmatprep.subr.bf16.mxu0 0
    %1245 = vmatpush1.bf16.xpose.msra.mxu0 0
    %1246 = vmatprep.subr.bf16.mxu0 0
    %1247 = vmatpush1.bf16.xpose.msra.mxu0 0
    %1248 = vmatprep.subr.bf16.mxu0 0
    %1249 = vmatpush1.bf16.xpose.msra.mxu0 0
    %1250 = vmatprep.subr.bf16.mxu0 0
    %1251 = vmatpush1.bf16.xpose.msra.mxu0 0
    %1252 = vmatprep.subr.bf16.mxu0 0
    %1253 = vmatpush1.bf16.xpose.msra.mxu0 0
    %1254 = vmatprep.subr.bf16.mxu0 0
    %1255 = vmatpush1.bf16.xpose.msra.mxu0 0
    %1256 = vmatprep.subr.bf16.mxu0 0
    %1257 = vmatpush1.bf16.xpose.msra.mxu0 0
    %1258 = vmatprep.subr.bf16.mxu0 0
    %1259 = vmatpush1.bf16.xpose.msra.mxu0 0
    %1260 = vmatprep.subr.bf16.mxu0 0
    %1261 = vmatpush1.bf16.xpose.msra.mxu0 0
    %1262 = vmatprep.subr.bf16.mxu0 0
    %1263 = vmatpush1.bf16.xpose.msra.mxu0 0
    %1264 = vmatprep.mubr.bf16.mxu0 0
    %1265 = vmatmul.mubr.bf16.gmra.mrb[0].mxu0 %v1116
    %v1266 = vpop.f32.mrb[0].mxu0
    %v1267 = vadd.f32 %v498, %v1266
    %v1268 = vpop.f32.mrb[0].mxu0
    %v1269 = vpop.f32.mrb[0].mxu0
    %v1270 = vpop.f32.mrb[0].mxu0
    %1271 = vdwg.mxu0
    %1272 = vmatprep.subr.bf16.mxu0 0
    %1273 = vmatpush1.bf16.xpose.msra.mxu0 %v1124
    %1274 = vmatprep.subr.bf16.mxu0 0
    %1275 = vmatpush1.bf16.xpose.msra.mxu0 0
    %1276 = vmatprep.subr.bf16.mxu0 0
    %1277 = vmatpush1.bf16.xpose.msra.mxu0 0
    %1278 = vmatprep.subr.bf16.mxu0 0
    %1279 = vmatpush1.bf16.xpose.msra.mxu0 0
    %1280 = vmatprep.subr.bf16.mxu0 0
    %1281 = vmatpush1.bf16.xpose.msra.mxu0 0
    %1282 = vmatprep.subr.bf16.mxu0 0
    %1283 = vmatpush1.bf16.xpose.msra.mxu0 0
    %1284 = vmatprep.subr.bf16.mxu0 0
    %1285 = vmatpush1.bf16.xpose.msra.mxu0 0
    %1286 = vmatprep.subr.bf16.mxu0 0
    %1287 = vmatpush1.bf16.xpose.msra.mxu0 0
    %1288 = vmatprep.subr.bf16.mxu0 0
    %1289 = vmatpush1.bf16.xpose.msra.mxu0 0
    %1290 = vmatprep.subr.bf16.mxu0 0
    %1291 = vmatpush1.bf16.xpose.msra.mxu0 0
    %1292 = vmatprep.subr.bf16.mxu0 0
    %1293 = vmatpush1.bf16.xpose.msra.mxu0 0
    %1294 = vmatprep.subr.bf16.mxu0 0
    %1295 = vmatpush1.bf16.xpose.msra.mxu0 0
    %1296 = vmatprep.subr.bf16.mxu0 0
    %1297 = vmatpush1.bf16.xpose.msra.mxu0 0
    %1298 = vmatprep.subr.bf16.mxu0 0
    %1299 = vmatpush1.bf16.xpose.msra.mxu0 0
    %1300 = vmatprep.subr.bf16.mxu0 0
    %1301 = vmatpush1.bf16.xpose.msra.mxu0 0
    %1302 = vmatprep.subr.bf16.mxu0 0
    %1303 = vmatpush1.bf16.xpose.msra.mxu0 0
    %1304 = vmatprep.mubr.bf16.mxu0 0
    %1305 = vmatmul.mubr.bf16.gmra.mrb[0].mxu0 %v1122
    %v1306 = vpop.f32.mrb[0].mxu0
    %v1307 = vadd.f32 %v502, %v1306
    %v1308 = vpop.f32.mrb[0].mxu0
    %v1309 = vpop.f32.mrb[0].mxu0
    %v1310 = vpop.f32.mrb[0].mxu0
    %1311 = vdwg.mxu0
    %v1312 = vsel %vm1207, %v1267, -inf
    %1313 = vmax.xlane.f32.xlu0 %v1312
    %v1314 = vpop.xlane.xlu0 %1313
    %v1315 = vsel %vm1207, %v1307, -inf
    %1316 = vmax.xlane.f32.xlu0 %v1315
    %v1317 = vpop.xlane.xlu0 %1316
    %v1318 = vsub.f32 %v1267, %v1314
    %v1319 = vsub.f32 %v1307, %v1317
    %v1320 = vmul.f32 %v1318, 1.442695
    %v1321 = vpow.pop %v1320
    %v1322 = vmul.f32 %v1319, 1.442695
    %v1323 = vpow.pop %v1322
    %v1324 = vsel %vm1207, %v1321, 0.0
    %1325 = vadd.xlane.f32.xlu0 %v1324
    %v1326 = vpop.xlane.xlu0 %1325
    %v1327 = vsel %vm1207, %v1323, 0.0
    %1328 = vadd.xlane.f32.xlu0 %v1327
    %v1329 = vpop.xlane.xlu0 %1328
    %v1330 = vrcp.pop %v1326
    %v1331 = vrcp.pop %v1329
    %v1332 = vmul.f32 %v1321, %v1330
    %v1333 = vmul.f32 %v1323, %v1331
    %v1334 = vpack.c.bf16 %v1332, %v1332
    %v1335 = vpack.c.bf16 %v1333, %v1333
    %v1337 = vsel %vm1207, %v1334, 0
    %vm1339 = vcmask 1043456
    %v1341 = vsel %vm1339, %v1120, 0
    %1343 = vmatprep.subr.bf16.mxu0 0
    %1344 = vmatpush1.bf16.msra.mxu0 %v1341
    %1345 = vmatprep.subr.bf16.mxu0 0
    %1346 = vmatpush1.bf16.msra.mxu0 0
    %1347 = vmatprep.subr.bf16.mxu0 0
    %1348 = vmatpush1.bf16.msra.mxu0 0
    %1349 = vmatprep.subr.bf16.mxu0 0
    %1350 = vmatpush1.bf16.msra.mxu0 0
    %1351 = vmatprep.subr.bf16.mxu0 0
    %1352 = vmatpush1.bf16.msra.mxu0 0
    %1353 = vmatprep.subr.bf16.mxu0 0
    %1354 = vmatpush1.bf16.msra.mxu0 0
    %1355 = vmatprep.subr.bf16.mxu0 0
    %1356 = vmatpush1.bf16.msra.mxu0 0
    %1357 = vmatprep.subr.bf16.mxu0 0
    %1358 = vmatpush1.bf16.msra.mxu0 0
    %1359 = vmatprep.subr.bf16.mxu0 0
    %1360 = vmatpush1.bf16.msra.mxu0 0
    %1361 = vmatprep.subr.bf16.mxu0 0
    %1362 = vmatpush1.bf16.msra.mxu0 0
    %1363 = vmatprep.subr.bf16.mxu0 0
    %1364 = vmatpush1.bf16.msra.mxu0 0
    %1365 = vmatprep.subr.bf16.mxu0 0
    %1366 = vmatpush1.bf16.msra.mxu0 0
    %1367 = vmatprep.subr.bf16.mxu0 0
    %1368 = vmatpush1.bf16.msra.mxu0 0
    %1369 = vmatprep.subr.bf16.mxu0 0
    %1370 = vmatpush1.bf16.msra.mxu0 0
    %1371 = vmatprep.subr.bf16.mxu0 0
    %1372 = vmatpush1.bf16.msra.mxu0 0
    %1373 = vmatprep.subr.bf16.mxu0 0
    %1374 = vmatpush1.bf16.msra.mxu0 0
    %1375 = vmatprep.mubr.bf16.mxu0 0
    %1376 = vmatmul.mubr.bf16.gmra.mrb[0].mxu0 %v1337
    %v1377 = vpop.f32.mrb[0].mxu0
    %v1378 = vadd.f32 0.0, %v1377
    %v1379 = vpop.f32.mrb[0].mxu0
    %v1380 = vpop.f32.mrb[0].mxu0
    %v1381 = vpop.f32.mrb[0].mxu0
    %1382 = vdwg.mxu0
    %v1384 = vsel %vm1207, %v1335, 0
    %v1387 = vsel %vm1339, %v1126, 0
    %1389 = vmatprep.subr.bf16.mxu0 0
    %1390 = vmatpush1.bf16.msra.mxu0 %v1387
    %1391 = vmatprep.subr.bf16.mxu0 0
    %1392 = vmatpush1.bf16.msra.mxu0 0
    %1393 = vmatprep.subr.bf16.mxu0 0
    %1394 = vmatpush1.bf16.msra.mxu0 0
    %1395 = vmatprep.subr.bf16.mxu0 0
    %1396 = vmatpush1.bf16.msra.mxu0 0
    %1397 = vmatprep.subr.bf16.mxu0 0
    %1398 = vmatpush1.bf16.msra.mxu0 0
    %1399 = vmatprep.subr.bf16.mxu0 0
    %1400 = vmatpush1.bf16.msra.mxu0 0
    %1401 = vmatprep.subr.bf16.mxu0 0
    %1402 = vmatpush1.bf16.msra.mxu0 0
    %1403 = vmatprep.subr.bf16.mxu0 0
    %1404 = vmatpush1.bf16.msra.mxu0 0
    %1405 = vmatprep.subr.bf16.mxu0 0
    %1406 = vmatpush1.bf16.msra.mxu0 0
    %1407 = vmatprep.subr.bf16.mxu0 0
    %1408 = vmatpush1.bf16.msra.mxu0 0
    %1409 = vmatprep.subr.bf16.mxu0 0
    %1410 = vmatpush1.bf16.msra.mxu0 0
    %1411 = vmatprep.subr.bf16.mxu0 0
    %1412 = vmatpush1.bf16.msra.mxu0 0
    %1413 = vmatprep.subr.bf16.mxu0 0
    %1414 = vmatpush1.bf16.msra.mxu0 0
    %1415 = vmatprep.subr.bf16.mxu0 0
    %1416 = vmatpush1.bf16.msra.mxu0 0
    %1417 = vmatprep.subr.bf16.mxu0 0
    %1418 = vmatpush1.bf16.msra.mxu0 0
    %1419 = vmatprep.subr.bf16.mxu0 0
    %1420 = vmatpush1.bf16.msra.mxu0 0
    %1421 = vmatprep.mubr.bf16.mxu0 0
    %1422 = vmatmul.mubr.bf16.gmra.mrb[0].mxu0 %v1384
    %v1423 = vpop.f32.mrb[0].mxu0
    %v1424 = vadd.f32 0.0, %v1423
    %v1425 = vpop.f32.mrb[0].mxu0
    %v1426 = vpop.f32.mrb[0].mxu0
    %v1427 = vpop.f32.mrb[0].mxu0
    %1428 = vdwg.mxu0
    %v1430 = vsel %vm1207, %v1230, 0
    %v1433 = vsel %vm1339, %v1119, 0
    %1435 = vmatprep.subr.bf16.mxu0 0
    %1436 = vmatpush1.bf16.msra.mxu0 %v1433
    %1437 = vmatprep.subr.bf16.mxu0 0
    %1438 = vmatpush1.bf16.msra.mxu0 0
    %1439 = vmatprep.subr.bf16.mxu0 0
    %1440 = vmatpush1.bf16.msra.mxu0 0
    %1441 = vmatprep.subr.bf16.mxu0 0
    %1442 = vmatpush1.bf16.msra.mxu0 0
    %1443 = vmatprep.subr.bf16.mxu0 0
    %1444 = vmatpush1.bf16.msra.mxu0 0
    %1445 = vmatprep.subr.bf16.mxu0 0
    %1446 = vmatpush1.bf16.msra.mxu0 0
    %1447 = vmatprep.subr.bf16.mxu0 0
    %1448 = vmatpush1.bf16.msra.mxu0 0
    %1449 = vmatprep.subr.bf16.mxu0 0
    %1450 = vmatpush1.bf16.msra.mxu0 0
    %1451 = vmatprep.subr.bf16.mxu0 0
    %1452 = vmatpush1.bf16.msra.mxu0 0
    %1453 = vmatprep.subr.bf16.mxu0 0
    %1454 = vmatpush1.bf16.msra.mxu0 0
    %1455 = vmatprep.subr.bf16.mxu0 0
    %1456 = vmatpush1.bf16.msra.mxu0 0
    %1457 = vmatprep.subr.bf16.mxu0 0
    %1458 = vmatpush1.bf16.msra.mxu0 0
    %1459 = vmatprep.subr.bf16.mxu0 0
    %1460 = vmatpush1.bf16.msra.mxu0 0
    %1461 = vmatprep.subr.bf16.mxu0 0
    %1462 = vmatpush1.bf16.msra.mxu0 0
    %1463 = vmatprep.subr.bf16.mxu0 0
    %1464 = vmatpush1.bf16.msra.mxu0 0
    %1465 = vmatprep.subr.bf16.mxu0 0
    %1466 = vmatpush1.bf16.msra.mxu0 0
    %1467 = vmatprep.mubr.bf16.mxu0 0
    %1468 = vmatmul.mubr.bf16.gmra.mrb[0].mxu0 %v1430
    %v1469 = vpop.f32.mrb[0].mxu0
    %v1470 = vadd.f32 %v1378, %v1469
    %v1471 = vpop.f32.mrb[0].mxu0
    %v1472 = vpop.f32.mrb[0].mxu0
    %v1473 = vpop.f32.mrb[0].mxu0
    %1474 = vdwg.mxu0
    %v1476 = vsel %vm1207, %v1231, 0
    %v1479 = vsel %vm1339, %v1125, 0
    %1481 = vmatprep.subr.bf16.mxu0 0
    %1482 = vmatpush1.bf16.msra.mxu0 %v1479
    %1483 = vmatprep.subr.bf16.mxu0 0
    %1484 = vmatpush1.bf16.msra.mxu0 0
    %1485 = vmatprep.subr.bf16.mxu0 0
    %1486 = vmatpush1.bf16.msra.mxu0 0
    %1487 = vmatprep.subr.bf16.mxu0 0
    %1488 = vmatpush1.bf16.msra.mxu0 0
    %1489 = vmatprep.subr.bf16.mxu0 0
    %1490 = vmatpush1.bf16.msra.mxu0 0
    %1491 = vmatprep.subr.bf16.mxu0 0
    %1492 = vmatpush1.bf16.msra.mxu0 0
    %1493 = vmatprep.subr.bf16.mxu0 0
    %1494 = vmatpush1.bf16.msra.mxu0 0
    %1495 = vmatprep.subr.bf16.mxu0 0
    %1496 = vmatpush1.bf16.msra.mxu0 0
    %1497 = vmatprep.subr.bf16.mxu0 0
    %1498 = vmatpush1.bf16.msra.mxu0 0
    %1499 = vmatprep.subr.bf16.mxu0 0
    %1500 = vmatpush1.bf16.msra.mxu0 0
    %1501 = vmatprep.subr.bf16.mxu0 0
    %1502 = vmatpush1.bf16.msra.mxu0 0
    %1503 = vmatprep.subr.bf16.mxu0 0
    %1504 = vmatpush1.bf16.msra.mxu0 0
    %1505 = vmatprep.subr.bf16.mxu0 0
    %1506 = vmatpush1.bf16.msra.mxu0 0
    %1507 = vmatprep.subr.bf16.mxu0 0
    %1508 = vmatpush1.bf16.msra.mxu0 0
    %1509 = vmatprep.subr.bf16.mxu0 0
    %1510 = vmatpush1.bf16.msra.mxu0 0
    %1511 = vmatprep.subr.bf16.mxu0 0
    %1512 = vmatpush1.bf16.msra.mxu0 0
    %1513 = vmatprep.mubr.bf16.mxu0 0
    %1514 = vmatmul.mubr.bf16.gmra.mrb[0].mxu0 %v1476
    %v1515 = vpop.f32.mrb[0].mxu0
    %v1516 = vadd.f32 %v1424, %v1515
    %v1517 = vpop.f32.mrb[0].mxu0
    %v1518 = vpop.f32.mrb[0].mxu0
    %v1519 = vpop.f32.mrb[0].mxu0
    %1520 = vdwg.mxu0
    %v1521 = vpack.c.bf16 %v1516, %v1470
    %v1523 = vlaneseq
    %v1524 = vshrl.u32 %v1523, 7
    %v1525 = vsub.s32 0, %v1524
    %v1526 = vrot.slane %v611, %v1525
    %v1544 = vunpack.c.l.b16 %v595
    %v1545 = vunpack.c.l.b16 %v596
    %v1546 = vunpack.c.l.b16 %v597
    %v1547 = vunpack.c.l.b16 %v598
    %v1548 = vunpack.c.l.b16 %v599
    %v1549 = vunpack.c.l.b16 %v600
    %v1550 = vunpack.c.l.b16 %v601
    %v1551 = vunpack.c.l.b16 %v602
    %v1552 = vunpack.c.l.b16 %v603
    %v1553 = vunpack.c.l.b16 %v604
    %v1554 = vunpack.c.l.b16 %v605
    %v1555 = vunpack.c.l.b16 %v606
    %v1556 = vunpack.c.l.b16 %v607
    %v1557 = vunpack.c.l.b16 %v608
    %v1558 = vunpack.c.l.b16 %v609
    %v1559 = vunpack.c.l.b16 %v610
    %v1560 = vpack.c.b16 %v1545, %v1544
    %v1561 = vpack.c.b16 %v1547, %v1546
    %v1562 = vpack.c.b16 %v1549, %v1548
    %v1563 = vpack.c.b16 %v1551, %v1550
    %v1564 = vpack.c.b16 %v1553, %v1552
    %v1565 = vpack.c.b16 %v1555, %v1554
    %v1566 = vpack.c.b16 %v1557, %v1556
    %v1567 = vpack.c.b16 %v1559, %v1558
    %1576 = vmatprep.subr.bf16.mxu0 0
    %1577 = vmatpush1.bf16.msra.mxu0 %v1560
    %1578 = vmatprep.subr.bf16.mxu0 0
    %1579 = vmatpush1.bf16.msra.mxu0 %v1561
    %1580 = vmatprep.subr.bf16.mxu0 0
    %1581 = vmatpush1.bf16.msra.mxu0 %v1562
    %1582 = vmatprep.subr.bf16.mxu0 0
    %1583 = vmatpush1.bf16.msra.mxu0 %v1563
    %1584 = vmatprep.subr.bf16.mxu0 0
    %1585 = vmatpush1.bf16.msra.mxu0 %v1564
    %1586 = vmatprep.subr.bf16.mxu0 0
    %1587 = vmatpush1.bf16.msra.mxu0 %v1565
    %1588 = vmatprep.subr.bf16.mxu0 0
    %1589 = vmatpush1.bf16.msra.mxu0 %v1566
    %1590 = vmatprep.subr.bf16.mxu0 0
    %1591 = vmatpush1.bf16.msra.mxu0 %v1567
    %1592 = vmatprep.subr.bf16.mxu0 0
    %1593 = vmatpush1.bf16.msra.mxu0 0
    %1594 = vmatprep.subr.bf16.mxu0 0
    %1595 = vmatpush1.bf16.msra.mxu0 0
    %1596 = vmatprep.subr.bf16.mxu0 0
    %1597 = vmatpush1.bf16.msra.mxu0 0
    %1598 = vmatprep.subr.bf16.mxu0 0
    %1599 = vmatpush1.bf16.msra.mxu0 0
    %1600 = vmatprep.subr.bf16.mxu0 0
    %1601 = vmatpush1.bf16.msra.mxu0 0
    %1602 = vmatprep.subr.bf16.mxu0 0
    %1603 = vmatpush1.bf16.msra.mxu0 0
    %1604 = vmatprep.subr.bf16.mxu0 0
    %1605 = vmatpush1.bf16.msra.mxu0 0
    %1606 = vmatprep.subr.bf16.mxu0 0
    %1607 = vmatpush1.bf16.msra.mxu0 0
    %1608 = vmatprep.mubr.bf16.mxu0 0
    %1609 = vmatmul.mubr.bf16.gmra.mrb[0].mxu0 %v1521
    %v1610 = vpop.f32.mrb[0].mxu0
    %v1611 = vadd.f32 %v1526, %v1610
    %v1612 = vpop.f32.mrb[0].mxu0
    %v1613 = vpop.f32.mrb[0].mxu0
    %v1614 = vadd.f32 %v1526, %v1613
    %v1615 = vpop.f32.mrb[0].mxu0
    %1616 = vdwg.mxu0
    %v1617 = vadd.f32 %v1611, %v544
    %v1618 = vadd.f32 %v1614, %v545
    %1619 = vadd.xlane.f32.xlu0 %v1617
    %v1620 = vpop.xlane.xlu0 %1619
    %1621 = vadd.xlane.f32.xlu0 %v1618
    %v1622 = vpop.xlane.xlu0 %1621
    %v1623 = vmul.f32 %v1620, %v511
    %v1624 = vmul.f32 %v1622, %v511
    %v1625 = vsub.f32 %v1617, %v1623
    %v1626 = vsub.f32 %v1618, %v1624
    %v1627 = vmul.f32 %v1625, %v1625
    %v1628 = vmul.f32 %v1626, %v1626
    %1629 = vadd.xlane.f32.xlu0 %v1627
    %v1630 = vpop.xlane.xlu0 %1629
    %1631 = vadd.xlane.f32.xlu0 %v1628
    %v1632 = vpop.xlane.xlu0 %1631
    %v1633 = vmul.f32 %v1630, %v511
    %v1634 = vmul.f32 %v1632, %v511
    %v1635 = vadd.f32 %v1633, 1e-12
    %v1636 = vadd.f32 %v1634, 1e-12
    %v1637 = vrsqrt.pop %v1635
    %v1638 = vrsqrt.pop %v1636
    %v1639 = vmul.f32 %v1625, %v1637
    %v1640 = vmul.f32 %v1626, %v1638
    %v1642 = vlaneseq
    %v1643 = vshrl.u32 %v1642, 7
    %v1644 = vsub.s32 0, %v1643
    %v1645 = vrot.slane %v612, %v1644
    %v1647 = vmul.f32 %v1639, %v1645
    %v1648 = vmul.f32 %v1640, %v1645
    %v1650 = vlaneseq
    %v1651 = vshrl.u32 %v1650, 7
    %v1652 = vsub.s32 0, %v1651
    %v1653 = vrot.slane %v613, %v1652
    %v1655 = vadd.f32 %v1647, %v1653
    %v1656 = vadd.f32 %v1648, %v1653
    %v1657 = vpack.c.bf16 %v1656, %v1655
    %v1659 = vlaneseq
    %v1660 = vshrl.u32 %v1659, 7
    %v1661 = vsub.s32 0, %v1660
    %v1662 = vrot.slane %v646, %v1661
    %v1663 = vlaneseq
    %v1664 = vshrl.u32 %v1663, 7
    %v1665 = vsub.s32 1, %v1664
    %v1666 = vrot.slane %v646, %v1665
    %v1667 = vlaneseq
    %v1668 = vshrl.u32 %v1667, 7
    %v1669 = vsub.s32 2, %v1668
    %v1670 = vrot.slane %v646, %v1669
    %v1671 = vlaneseq
    %v1672 = vshrl.u32 %v1671, 7
    %v1673 = vsub.s32 3, %v1672
    %v1674 = vrot.slane %v646, %v1673
    %v1711 = vunpack.c.l.b16 %v614
    %v1712 = vunpack.c.h.b16 %v614
    %v1713 = vunpack.c.l.b16 %v615
    %v1714 = vunpack.c.h.b16 %v615
    %v1715 = vunpack.c.l.b16 %v616
    %v1716 = vunpack.c.h.b16 %v616
    %v1717 = vunpack.c.l.b16 %v617
    %v1718 = vunpack.c.h.b16 %v617
    %v1719 = vunpack.c.l.b16 %v618
    %v1720 = vunpack.c.h.b16 %v618
    %v1721 = vunpack.c.l.b16 %v619
    %v1722 = vunpack.c.h.b16 %v619
    %v1723 = vunpack.c.l.b16 %v620
    %v1724 = vunpack.c.h.b16 %v620
    %v1725 = vunpack.c.l.b16 %v621
    %v1726 = vunpack.c.h.b16 %v621
    %v1727 = vunpack.c.l.b16 %v622
    %v1728 = vunpack.c.h.b16 %v622
    %v1729 = vunpack.c.l.b16 %v623
    %v1730 = vunpack.c.h.b16 %v623
    %v1731 = vunpack.c.l.b16 %v624
    %v1732 = vunpack.c.h.b16 %v624
    %v1733 = vunpack.c.l.b16 %v625
    %v1734 = vunpack.c.h.b16 %v625
    %v1735 = vunpack.c.l.b16 %v626
    %v1736 = vunpack.c.h.b16 %v626
    %v1737 = vunpack.c.l.b16 %v627
    %v1738 = vunpack.c.h.b16 %v627
    %v1739 = vunpack.c.l.b16 %v628
    %v1740 = vunpack.c.h.b16 %v628
    %v1741 = vunpack.c.l.b16 %v629
    %v1742 = vunpack.c.h.b16 %v629
    %v1743 = vunpack.c.l.b16 %v630
    %v1744 = vunpack.c.h.b16 %v630
    %v1745 = vunpack.c.l.b16 %v631
    %v1746 = vunpack.c.h.b16 %v631
    %v1747 = vunpack.c.l.b16 %v632
    %v1748 = vunpack.c.h.b16 %v632
    %v1749 = vunpack.c.l.b16 %v633
    %v1750 = vunpack.c.h.b16 %v633
    %v1751 = vunpack.c.l.b16 %v634
    %v1752 = vunpack.c.h.b16 %v634
    %v1753 = vunpack.c.l.b16 %v635
    %v1754 = vunpack.c.h.b16 %v635
    %v1755 = vunpack.c.l.b16 %v636
    %v1756 = vunpack.c.h.b16 %v636
    %v1757 = vunpack.c.l.b16 %v637
    %v1758 = vunpack.c.h.b16 %v637
    %v1759 = vunpack.c.l.b16 %v638
    %v1760 = vunpack.c.h.b16 %v638
    %v1761 = vunpack.c.l.b16 %v639
    %v1762 = vunpack.c.h.b16 %v639
    %v1763 = vunpack.c.l.b16 %v640
    %v1764 = vunpack.c.h.b16 %v640
    %v1765 = vunpack.c.l.b16 %v641
    %v1766 = vunpack.c.h.b16 %v641
    %v1767 = vunpack.c.l.b16 %v642
    %v1768 = vunpack.c.h.b16 %v642
    %v1769 = vunpack.c.l.b16 %v643
    %v1770 = vunpack.c.h.b16 %v643
    %v1771 = vunpack.c.l.b16 %v644
    %v1772 = vunpack.c.h.b16 %v644
    %v1773 = vunpack.c.l.b16 %v645
    %v1774 = vunpack.c.h.b16 %v645
    %v1775 = vpack.c.b16 %v1715, %v1711
    %v1776 = vpack.c.b16 %v1716, %v1712
    %v1777 = vpack.c.b16 %v1717, %v1713
    %v1778 = vpack.c.b16 %v1718, %v1714
    %v1779 = vpack.c.b16 %v1723, %v1719
    %v1780 = vpack.c.b16 %v1724, %v1720
    %v1781 = vpack.c.b16 %v1725, %v1721
    %v1782 = vpack.c.b16 %v1726, %v1722
    %v1783 = vpack.c.b16 %v1731, %v1727
    %v1784 = vpack.c.b16 %v1732, %v1728
    %v1785 = vpack.c.b16 %v1733, %v1729
    %v1786 = vpack.c.b16 %v1734, %v1730
    %v1787 = vpack.c.b16 %v1739, %v1735
    %v1788 = vpack.c.b16 %v1740, %v1736
    %v1789 = vpack.c.b16 %v1741, %v1737
    %v1790 = vpack.c.b16 %v1742, %v1738
    %v1791 = vpack.c.b16 %v1747, %v1743
    %v1792 = vpack.c.b16 %v1748, %v1744
    %v1793 = vpack.c.b16 %v1749, %v1745
    %v1794 = vpack.c.b16 %v1750, %v1746
    %v1795 = vpack.c.b16 %v1755, %v1751
    %v1796 = vpack.c.b16 %v1756, %v1752
    %v1797 = vpack.c.b16 %v1757, %v1753
    %v1798 = vpack.c.b16 %v1758, %v1754
    %v1799 = vpack.c.b16 %v1763, %v1759
    %v1800 = vpack.c.b16 %v1764, %v1760
    %v1801 = vpack.c.b16 %v1765, %v1761
    %v1802 = vpack.c.b16 %v1766, %v1762
    %v1803 = vpack.c.b16 %v1771, %v1767
    %v1804 = vpack.c.b16 %v1772, %v1768
    %v1805 = vpack.c.b16 %v1773, %v1769
    %v1806 = vpack.c.b16 %v1774, %v1770
    %1839 = vmatprep.subr.bf16.mxu0 %v1776
    %1840 = vmatpush1.bf16.msra.mxu0 %v1775
    %1841 = vmatprep.subr.bf16.mxu0 %v1780
    %1842 = vmatpush1.bf16.msra.mxu0 %v1779
    %1843 = vmatprep.subr.bf16.mxu0 %v1784
    %1844 = vmatpush1.bf16.msra.mxu0 %v1783
    %1845 = vmatprep.subr.bf16.mxu0 %v1788
    %1846 = vmatpush1.bf16.msra.mxu0 %v1787
    %1847 = vmatprep.subr.bf16.mxu0 %v1792
    %1848 = vmatpush1.bf16.msra.mxu0 %v1791
    %1849 = vmatprep.subr.bf16.mxu0 %v1796
    %1850 = vmatpush1.bf16.msra.mxu0 %v1795
    %1851 = vmatprep.subr.bf16.mxu0 %v1800
    %1852 = vmatpush1.bf16.msra.mxu0 %v1799
    %1853 = vmatprep.subr.bf16.mxu0 %v1804
    %1854 = vmatpush1.bf16.msra.mxu0 %v1803
    %1855 = vmatprep.subr.bf16.mxu0 0
    %1856 = vmatpush1.bf16.msra.mxu0 0
    %1857 = vmatprep.subr.bf16.mxu0 0
    %1858 = vmatpush1.bf16.msra.mxu0 0
    %1859 = vmatprep.subr.bf16.mxu0 0
    %1860 = vmatpush1.bf16.msra.mxu0 0
    %1861 = vmatprep.subr.bf16.mxu0 0
    %1862 = vmatpush1.bf16.msra.mxu0 0
    %1863 = vmatprep.subr.bf16.mxu0 0
    %1864 = vmatpush1.bf16.msra.mxu0 0
    %1865 = vmatprep.subr.bf16.mxu0 0
    %1866 = vmatpush1.bf16.msra.mxu0 0
    %1867 = vmatprep.subr.bf16.mxu0 0
    %1868 = vmatpush1.bf16.msra.mxu0 0
    %1869 = vmatprep.subr.bf16.mxu0 0
    %1870 = vmatpush1.bf16.msra.mxu0 0
    %1871 = vmatprep.mubr.bf16.mxu0 0
    %1872 = vmatmul.mubr.bf16.gmra.mrb[0].mxu0 %v1657
    %v1873 = vpop.f32.mrb[0].mxu0
    %v1874 = vadd.f32 %v1662, %v1873
    %v1875 = vpop.f32.mrb[0].mxu0
    %v1876 = vadd.f32 %v1666, %v1875
    %v1877 = vpop.f32.mrb[0].mxu0
    %v1878 = vadd.f32 %v1662, %v1877
    %v1879 = vpop.f32.mrb[0].mxu0
    %v1880 = vadd.f32 %v1666, %v1879
    %1881 = vdwg.mxu0
    %1882 = vmatprep.subr.bf16.mxu0 %v1778
    %1883 = vmatpush1.bf16.msra.mxu0 %v1777
    %1884 = vmatprep.subr.bf16.mxu0 %v1782
    %1885 = vmatpush1.bf16.msra.mxu0 %v1781
    %1886 = vmatprep.subr.bf16.mxu0 %v1786
    %1887 = vmatpush1.bf16.msra.mxu0 %v1785
    %1888 = vmatprep.subr.bf16.mxu0 %v1790
    %1889 = vmatpush1.bf16.msra.mxu0 %v1789
    %1890 = vmatprep.subr.bf16.mxu0 %v1794
    %1891 = vmatpush1.bf16.msra.mxu0 %v1793
    %1892 = vmatprep.subr.bf16.mxu0 %v1798
    %1893 = vmatpush1.bf16.msra.mxu0 %v1797
    %1894 = vmatprep.subr.bf16.mxu0 %v1802
    %1895 = vmatpush1.bf16.msra.mxu0 %v1801
    %1896 = vmatprep.subr.bf16.mxu0 %v1806
    %1897 = vmatpush1.bf16.msra.mxu0 %v1805
    %1898 = vmatprep.subr.bf16.mxu0 0
    %1899 = vmatpush1.bf16.msra.mxu0 0
    %1900 = vmatprep.subr.bf16.mxu0 0
    %1901 = vmatpush1.bf16.msra.mxu0 0
    %1902 = vmatprep.subr.bf16.mxu0 0
    %1903 = vmatpush1.bf16.msra.mxu0 0
    %1904 = vmatprep.subr.bf16.mxu0 0
    %1905 = vmatpush1.bf16.msra.mxu0 0
    %1906 = vmatprep.subr.bf16.mxu0 0
    %1907 = vmatpush1.bf16.msra.mxu0 0
    %1908 = vmatprep.subr.bf16.mxu0 0
    %1909 = vmatpush1.bf16.msra.mxu0 0
    %1910 = vmatprep.subr.bf16.mxu0 0
    %1911 = vmatpush1.bf16.msra.mxu0 0
    %1912 = vmatprep.subr.bf16.mxu0 0
    %1913 = vmatpush1.bf16.msra.mxu0 0
    %1914 = vmatprep.mubr.bf16.mxu0 0
    %1915 = vmatmul.mubr.bf16.gmra.mrb[0].mxu0 %v1657
    %v1916 = vpop.f32.mrb[0].mxu0
    %v1917 = vadd.f32 %v1670, %v1916
    %v1918 = vpop.f32.mrb[0].mxu0
    %v1919 = vadd.f32 %v1674, %v1918
    %v1920 = vpop.f32.mrb[0].mxu0
    %v1921 = vadd.f32 %v1670, %v1920
    %v1922 = vpop.f32.mrb[0].mxu0
    %v1923 = vadd.f32 %v1674, %v1922
    %1924 = vdwg.mxu0
    %v1925 = vmul.f32 %v1874, 0.5
    %v1926 = vmul.f32 %v1876, 0.5
    %v1927 = vmul.f32 %v1917, 0.5
    %v1928 = vmul.f32 %v1919, 0.5
    %v1929 = vmul.f32 %v1878, 0.5
    %v1930 = vmul.f32 %v1880, 0.5
    %v1931 = vmul.f32 %v1921, 0.5
    %v1932 = vmul.f32 %v1923, 0.5
    %v1933 = vmul.f32 %v1874, 0.044715
    %v1934 = vmul.f32 %v1876, 0.044715
    %v1935 = vmul.f32 %v1917, 0.044715
    %v1936 = vmul.f32 %v1919, 0.044715
    %v1937 = vmul.f32 %v1878, 0.044715
    %v1938 = vmul.f32 %v1880, 0.044715
    %v1939 = vmul.f32 %v1921, 0.044715
    %v1940 = vmul.f32 %v1923, 0.044715
    %v1941 = vmul.f32 %v1933, %v1874
    %v1942 = vmul.f32 %v1934, %v1876
    %v1943 = vmul.f32 %v1935, %v1917
    %v1944 = vmul.f32 %v1936, %v1919
    %v1945 = vmul.f32 %v1937, %v1878
    %v1946 = vmul.f32 %v1938, %v1880
    %v1947 = vmul.f32 %v1939, %v1921
    %v1948 = vmul.f32 %v1940, %v1923
    %v1949 = vmul.f32 %v1941, %v1874
    %v1950 = vmul.f32 %v1942, %v1876
    %v1951 = vmul.f32 %v1943, %v1917
    %v1952 = vmul.f32 %v1944, %v1919
    %v1953 = vmul.f32 %v1945, %v1878
    %v1954 = vmul.f32 %v1946, %v1880
    %v1955 = vmul.f32 %v1947, %v1921
    %v1956 = vmul.f32 %v1948, %v1923
    %v1957 = vadd.f32 %v1874, %v1949
    %v1958 = vadd.f32 %v1876, %v1950
    %v1959 = vadd.f32 %v1917, %v1951
    %v1960 = vadd.f32 %v1919, %v1952
    %v1961 = vadd.f32 %v1878, %v1953
    %v1962 = vadd.f32 %v1880, %v1954
    %v1963 = vadd.f32 %v1921, %v1955
    %v1964 = vadd.f32 %v1923, %v1956
    %v1965 = vmul.f32 %v1957, 0.7978846
    %v1966 = vmul.f32 %v1958, 0.7978846
    %v1967 = vmul.f32 %v1959, 0.7978846
    %v1968 = vmul.f32 %v1960, 0.7978846
    %v1969 = vmul.f32 %v1961, 0.7978846
    %v1970 = vmul.f32 %v1962, 0.7978846
    %v1971 = vmul.f32 %v1963, 0.7978846
    %v1972 = vmul.f32 %v1964, 0.7978846
    %v1973 = vtanh.pop %v1965
    %v1974 = vtanh.pop %v1966
    %v1975 = vtanh.pop %v1967
    %v1976 = vtanh.pop %v1968
    %v1977 = vtanh.pop %v1969
    %v1978 = vtanh.pop %v1970
    %v1979 = vtanh.pop %v1971
    %v1980 = vtanh.pop %v1972
    %v1981 = vadd.f32 %v1973, 1.0
    %v1982 = vadd.f32 %v1974, 1.0
    %v1983 = vadd.f32 %v1975, 1.0
    %v1984 = vadd.f32 %v1976, 1.0
    %v1985 = vadd.f32 %v1977, 1.0
    %v1986 = vadd.f32 %v1978, 1.0
    %v1987 = vadd.f32 %v1979, 1.0
    %v1988 = vadd.f32 %v1980, 1.0
    %v1989 = vmul.f32 %v1925, %v1981
    %v1990 = vmul.f32 %v1926, %v1982
    %v1991 = vmul.f32 %v1927, %v1983
    %v1992 = vmul.f32 %v1928, %v1984
    %v1993 = vmul.f32 %v1929, %v1985
    %v1994 = vmul.f32 %v1930, %v1986
    %v1995 = vmul.f32 %v1931, %v1987
    %v1996 = vmul.f32 %v1932, %v1988
    %v1997 = vpack.c.bf16 %v1993, %v1989
    %v1998 = vpack.c.bf16 %v1994, %v1990
    %v1999 = vpack.c.bf16 %v1995, %v1991
    %v2000 = vpack.c.bf16 %v1996, %v1992
    %v2002 = vlaneseq
    %v2003 = vshrl.u32 %v2002, 7
    %v2004 = vsub.s32 0, %v2003
    %v2005 = vrot.slane %v711, %v2004
    %v2071 = vunpack.c.l.b16 %v647
    %v2072 = vunpack.c.l.b16 %v648
    %v2073 = vunpack.c.l.b16 %v649
    %v2074 = vunpack.c.l.b16 %v650
    %v2075 = vunpack.c.l.b16 %v651
    %v2076 = vunpack.c.l.b16 %v652
    %v2077 = vunpack.c.l.b16 %v653
    %v2078 = vunpack.c.l.b16 %v654
    %v2079 = vunpack.c.l.b16 %v655
    %v2080 = vunpack.c.l.b16 %v656
    %v2081 = vunpack.c.l.b16 %v657
    %v2082 = vunpack.c.l.b16 %v658
    %v2083 = vunpack.c.l.b16 %v659
    %v2084 = vunpack.c.l.b16 %v660
    %v2085 = vunpack.c.l.b16 %v661
    %v2086 = vunpack.c.l.b16 %v662
    %v2087 = vunpack.c.l.b16 %v663
    %v2088 = vunpack.c.l.b16 %v664
    %v2089 = vunpack.c.l.b16 %v665
    %v2090 = vunpack.c.l.b16 %v666
    %v2091 = vunpack.c.l.b16 %v667
    %v2092 = vunpack.c.l.b16 %v668
    %v2093 = vunpack.c.l.b16 %v669
    %v2094 = vunpack.c.l.b16 %v670
    %v2095 = vunpack.c.l.b16 %v671
    %v2096 = vunpack.c.l.b16 %v672
    %v2097 = vunpack.c.l.b16 %v673
    %v2098 = vunpack.c.l.b16 %v674
    %v2099 = vunpack.c.l.b16 %v675
    %v2100 = vunpack.c.l.b16 %v676
    %v2101 = vunpack.c.l.b16 %v677
    %v2102 = vunpack.c.l.b16 %v678
    %v2103 = vunpack.c.l.b16 %v679
    %v2104 = vunpack.c.l.b16 %v680
    %v2105 = vunpack.c.l.b16 %v681
    %v2106 = vunpack.c.l.b16 %v682
    %v2107 = vunpack.c.l.b16 %v683
    %v2108 = vunpack.c.l.b16 %v684
    %v2109 = vunpack.c.l.b16 %v685
    %v2110 = vunpack.c.l.b16 %v686
    %v2111 = vunpack.c.l.b16 %v687
    %v2112 = vunpack.c.l.b16 %v688
    %v2113 = vunpack.c.l.b16 %v689
    %v2114 = vunpack.c.l.b16 %v690
    %v2115 = vunpack.c.l.b16 %v691
    %v2116 = vunpack.c.l.b16 %v692
    %v2117 = vunpack.c.l.b16 %v693
    %v2118 = vunpack.c.l.b16 %v694
    %v2119 = vunpack.c.l.b16 %v695
    %v2120 = vunpack.c.l.b16 %v696
    %v2121 = vunpack.c.l.b16 %v697
    %v2122 = vunpack.c.l.b16 %v698
    %v2123 = vunpack.c.l.b16 %v699
    %v2124 = vunpack.c.l.b16 %v700
    %v2125 = vunpack.c.l.b16 %v701
    %v2126 = vunpack.c.l.b16 %v702
    %v2127 = vunpack.c.l.b16 %v703
    %v2128 = vunpack.c.l.b16 %v704
    %v2129 = vunpack.c.l.b16 %v705
    %v2130 = vunpack.c.l.b16 %v706
    %v2131 = vunpack.c.l.b16 %v707
    %v2132 = vunpack.c.l.b16 %v708
    %v2133 = vunpack.c.l.b16 %v709
    %v2134 = vunpack.c.l.b16 %v710
    %v2135 = vpack.c.b16 %v2072, %v2071
    %v2136 = vpack.c.b16 %v2074, %v2073
    %v2137 = vpack.c.b16 %v2076, %v2075
    %v2138 = vpack.c.b16 %v2078, %v2077
    %v2139 = vpack.c.b16 %v2080, %v2079
    %v2140 = vpack.c.b16 %v2082, %v2081
    %v2141 = vpack.c.b16 %v2084, %v2083
    %v2142 = vpack.c.b16 %v2086, %v2085
    %v2143 = vpack.c.b16 %v2088, %v2087
    %v2144 = vpack.c.b16 %v2090, %v2089
    %v2145 = vpack.c.b16 %v2092, %v2091
    %v2146 = vpack.c.b16 %v2094, %v2093
    %v2147 = vpack.c.b16 %v2096, %v2095
    %v2148 = vpack.c.b16 %v2098, %v2097
    %v2149 = vpack.c.b16 %v2100, %v2099
    %v2150 = vpack.c.b16 %v2102, %v2101
    %v2151 = vpack.c.b16 %v2104, %v2103
    %v2152 = vpack.c.b16 %v2106, %v2105
    %v2153 = vpack.c.b16 %v2108, %v2107
    %v2154 = vpack.c.b16 %v2110, %v2109
    %v2155 = vpack.c.b16 %v2112, %v2111
    %v2156 = vpack.c.b16 %v2114, %v2113
    %v2157 = vpack.c.b16 %v2116, %v2115
    %v2158 = vpack.c.b16 %v2118, %v2117
    %v2159 = vpack.c.b16 %v2120, %v2119
    %v2160 = vpack.c.b16 %v2122, %v2121
    %v2161 = vpack.c.b16 %v2124, %v2123
    %v2162 = vpack.c.b16 %v2126, %v2125
    %v2163 = vpack.c.b16 %v2128, %v2127
    %v2164 = vpack.c.b16 %v2130, %v2129
    %v2165 = vpack.c.b16 %v2132, %v2131
    %v2166 = vpack.c.b16 %v2134, %v2133
    %2199 = vmatprep.subr.bf16.mxu0 0
    %2200 = vmatpush1.bf16.msra.mxu0 %v2135
    %2201 = vmatprep.subr.bf16.mxu0 0
    %2202 = vmatpush1.bf16.msra.mxu0 %v2136
    %2203 = vmatprep.subr.bf16.mxu0 0
    %2204 = vmatpush1.bf16.msra.mxu0 %v2137
    %2205 = vmatprep.subr.bf16.mxu0 0
    %2206 = vmatpush1.bf16.msra.mxu0 %v2138
    %2207 = vmatprep.subr.bf16.mxu0 0
    %2208 = vmatpush1.bf16.msra.mxu0 %v2139
    %2209 = vmatprep.subr.bf16.mxu0 0
    %2210 = vmatpush1.bf16.msra.mxu0 %v2140
    %2211 = vmatprep.subr.bf16.mxu0 0
    %2212 = vmatpush1.bf16.msra.mxu0 %v2141
    %2213 = vmatprep.subr.bf16.mxu0 0
    %2214 = vmatpush1.bf16.msra.mxu0 %v2142
    %2215 = vmatprep.subr.bf16.mxu0 0
    %2216 = vmatpush1.bf16.msra.mxu0 %v2143
    %2217 = vmatprep.subr.bf16.mxu0 0
    %2218 = vmatpush1.bf16.msra.mxu0 %v2144
    %2219 = vmatprep.subr.bf16.mxu0 0
    %2220 = vmatpush1.bf16.msra.mxu0 %v2145
    %2221 = vmatprep.subr.bf16.mxu0 0
    %2222 = vmatpush1.bf16.msra.mxu0 %v2146
    %2223 = vmatprep.subr.bf16.mxu0 0
    %2224 = vmatpush1.bf16.msra.mxu0 %v2147
    %2225 = vmatprep.subr.bf16.mxu0 0
    %2226 = vmatpush1.bf16.msra.mxu0 %v2148
    %2227 = vmatprep.subr.bf16.mxu0 0
    %2228 = vmatpush1.bf16.msra.mxu0 %v2149
    %2229 = vmatprep.subr.bf16.mxu0 0
    %2230 = vmatpush1.bf16.msra.mxu0 %v2150
    %2231 = vmatprep.mubr.bf16.mxu0 %v1998
    %2232 = vmatmul.mubr.bf16.gmra.mrb[0].mxu0 %v1997
    %v2233 = vpop.f32.mrb[0].mxu0
    %v2234 = vadd.f32 %v2005, %v2233
    %v2235 = vpop.f32.mrb[0].mxu0
    %v2236 = vpop.f32.mrb[0].mxu0
    %v2237 = vadd.f32 %v2005, %v2236
    %v2238 = vpop.f32.mrb[0].mxu0
    %2239 = vdwg.mxu0
    %2240 = vmatprep.subr.bf16.mxu0 0
    %2241 = vmatpush1.bf16.msra.mxu0 %v2151
    %2242 = vmatprep.subr.bf16.mxu0 0
    %2243 = vmatpush1.bf16.msra.mxu0 %v2152
    %2244 = vmatprep.subr.bf16.mxu0 0
    %2245 = vmatpush1.bf16.msra.mxu0 %v2153
    %2246 = vmatprep.subr.bf16.mxu0 0
    %2247 = vmatpush1.bf16.msra.mxu0 %v2154
    %2248 = vmatprep.subr.bf16.mxu0 0
    %2249 = vmatpush1.bf16.msra.mxu0 %v2155
    %2250 = vmatprep.subr.bf16.mxu0 0
    %2251 = vmatpush1.bf16.msra.mxu0 %v2156
    %2252 = vmatprep.subr.bf16.mxu0 0
    %2253 = vmatpush1.bf16.msra.mxu0 %v2157
    %2254 = vmatprep.subr.bf16.mxu0 0
    %2255 = vmatpush1.bf16.msra.mxu0 %v2158
    %2256 = vmatprep.subr.bf16.mxu0 0
    %2257 = vmatpush1.bf16.msra.mxu0 %v2159
    %2258 = vmatprep.subr.bf16.mxu0 0
    %2259 = vmatpush1.bf16.msra.mxu0 %v2160
    %2260 = vmatprep.subr.bf16.mxu0 0
    %2261 = vmatpush1.bf16.msra.mxu0 %v2161
    %2262 = vmatprep.subr.bf16.mxu0 0
    %2263 = vmatpush1.bf16.msra.mxu0 %v2162
    %2264 = vmatprep.subr.bf16.mxu0 0
    %2265 = vmatpush1.bf16.msra.mxu0 %v2163
    %2266 = vmatprep.subr.bf16.mxu0 0
    %2267 = vmatpush1.bf16.msra.mxu0 %v2164
    %2268 = vmatprep.subr.bf16.mxu0 0
    %2269 = vmatpush1.bf16.msra.mxu0 %v2165
    %2270 = vmatprep.subr.bf16.mxu0 0
    %2271 = vmatpush1.bf16.msra.mxu0 %v2166
    %2272 = vmatprep.mubr.bf16.mxu0 %v2000
    %2273 = vmatmul.mubr.bf16.gmra.mrb[0].mxu0 %v1999
    %v2274 = vpop.f32.mrb[0].mxu0
    %v2275 = vadd.f32 %v2234, %v2274
    %v2276 = vpop.f32.mrb[0].mxu0
    %v2277 = vpop.f32.mrb[0].mxu0
    %v2278 = vadd.f32 %v2237, %v2277
    %v2279 = vpop.f32.mrb[0].mxu0
    %2280 = vdwg.mxu0
    %v2281 = vadd.f32 %v2275, %v1655
    %v2282 = vadd.f32 %v2278, %v1656
    %2283 = vadd.xlane.f32.xlu0 %v2281
    %v2284 = vpop.xlane.xlu0 %2283
    %2285 = vadd.xlane.f32.xlu0 %v2282
    %v2286 = vpop.xlane.xlu0 %2285
    %v2287 = vmul.f32 %v2284, %v511
    %v2288 = vmul.f32 %v2286, %v511
    %v2289 = vsub.f32 %v2281, %v2287
    %v2290 = vsub.f32 %v2282, %v2288
    %v2291 = vmul.f32 %v2289, %v2289
    %v2292 = vmul.f32 %v2290, %v2290
    %2293 = vadd.xlane.f32.xlu0 %v2291
    %v2294 = vpop.xlane.xlu0 %2293
    %2295 = vadd.xlane.f32.xlu0 %v2292
    %v2296 = vpop.xlane.xlu0 %2295
    %v2297 = vmul.f32 %v2294, %v511
    %v2298 = vmul.f32 %v2296, %v511
    %v2299 = vadd.f32 %v2297, 1e-12
    %v2300 = vadd.f32 %v2298, 1e-12
    %v2301 = vrsqrt.pop %v2299
    %v2302 = vrsqrt.pop %v2300
    %v2303 = vmul.f32 %v2289, %v2301
    %v2304 = vmul.f32 %v2290, %v2302
    %v2306 = vlaneseq
    %v2307 = vshrl.u32 %v2306, 7
    %v2308 = vsub.s32 0, %v2307
    %v2309 = vrot.slane %v712, %v2308
    %v2311 = vmul.f32 %v2303, %v2309
    %v2312 = vmul.f32 %v2304, %v2309
    %v2314 = vlaneseq
    %v2315 = vshrl.u32 %v2314, 7
    %v2316 = vsub.s32 0, %v2315
    %v2317 = vrot.slane %v713, %v2316
    %v2319 = vadd.f32 %v2311, %v2317
    %v2320 = vadd.f32 %v2312, %v2317
    %v2321 = vld [vmem:[#allocation25] sm:$0xff]
    %v2322 = vld [vmem:[#allocation25 + $0x8] sm:$0xff]
    %v2323 = vld [vmem:[#allocation25 + $0x10] sm:$0xff]
    %v2324 = vld [vmem:[#allocation25 + $0x18] sm:$0xff]
    %v2325 = vld [vmem:[#allocation25 + $0x20] sm:$0xff]
    %v2326 = vld [vmem:[#allocation25 + $0x28] sm:$0xff]
    %v2327 = vld [vmem:[#allocation25 + $0x30] sm:$0xff]
    %v2328 = vld [vmem:[#allocation25 + $0x38] sm:$0xff]
    %v2329 = vld [vmem:[#allocation25 + $0x40] sm:$0xff]
    %v2330 = vld [vmem:[#allocation25 + $0x48] sm:$0xff]
    %v2331 = vld [vmem:[#allocation25 + $0x50] sm:$0xff]
    %v2332 = vld [vmem:[#allocation25 + $0x58] sm:$0xff]
    %v2333 = vld [vmem:[#allocation25 + $0x60] sm:$0xff]
    %v2334 = vld [vmem:[#allocation25 + $0x68] sm:$0xff]
    %v2335 = vld [vmem:[#allocation25 + $0x70] sm:$0xff]
    %v2336 = vld [vmem:[#allocation25 + $0x78] sm:$0xff]
    %v2337 = vld [vmem:[#allocation25 + $0x80] sm:$0xff]
    %v2338 = vld [vmem:[#allocation25 + $0x88] sm:$0xff]
    %v2339 = vld [vmem:[#allocation25 + $0x90] sm:$0xff]
    %v2340 = vld [vmem:[#allocation25 + $0x98] sm:$0xff]
    %v2341 = vld [vmem:[#allocation25 + $0xa0] sm:$0xff]
    %v2342 = vld [vmem:[#allocation25 + $0xa8] sm:$0xff]
    %v2343 = vld [vmem:[#allocation25 + $0xb0] sm:$0xff]
    %v2344 = vld [vmem:[#allocation25 + $0xb8] sm:$0xff]
    %v2345 = vld [vmem:[#allocation25 + $0xc0] sm:$0xff]
    %v2346 = vld [vmem:[#allocation25 + $0xc8] sm:$0xff]
    %v2347 = vld [vmem:[#allocation25 + $0xd0] sm:$0xff]
    %v2348 = vld [vmem:[#allocation25 + $0xd8] sm:$0xff]
    %v2349 = vld [vmem:[#allocation25 + $0xe0] sm:$0xff]
    %v2350 = vld [vmem:[#allocation25 + $0xe8] sm:$0xff]
    %v2351 = vld [vmem:[#allocation25 + $0xf0] sm:$0xff]
    %v2352 = vld [vmem:[#allocation25 + $0xf8] sm:$0xff]
    %v2353 = vld [vmem:[#allocation25 + $0x100] sm:$0xff]
    %v2354 = vld [vmem:[#allocation25 + $0x108] sm:$0xff]
    %v2355 = vld [vmem:[#allocation25 + $0x110] sm:$0xff]
    %v2356 = vld [vmem:[#allocation25 + $0x118] sm:$0xff]
    %v2357 = vld [vmem:[#allocation25 + $0x120] sm:$0xff]
    %v2358 = vld [vmem:[#allocation25 + $0x128] sm:$0xff]
    %v2359 = vld [vmem:[#allocation25 + $0x130] sm:$0xff]
    %v2360 = vld [vmem:[#allocation25 + $0x138] sm:$0xff]
    %v2361 = vld [vmem:[#allocation25 + $0x140] sm:$0xff]
    %v2362 = vld [vmem:[#allocation25 + $0x148] sm:$0xff]
    %v2363 = vld [vmem:[#allocation25 + $0x150] sm:$0xff]
    %v2364 = vld [vmem:[#allocation25 + $0x158] sm:$0xff]
    %v2365 = vld [vmem:[#allocation25 + $0x160] sm:$0xff]
    %v2366 = vld [vmem:[#allocation25 + $0x168] sm:$0xff]
    %v2367 = vld [vmem:[#allocation25 + $0x170] sm:$0xff]
    %v2368 = vld [vmem:[#allocation25 + $0x178] sm:$0xff]
    %v2369 = vld [vmem:[#allocation26] sm:$0x3f]
    %v2370 = vld [vmem:[#allocation28] sm:$0xf]
    %v2371 = vld [vmem:[#allocation28 + $0x4] sm:$0xf]
    %v2372 = vld [vmem:[#allocation28 + $0x8] sm:$0xf]
    %v2373 = vld [vmem:[#allocation28 + $0xc] sm:$0xf]
    %v2374 = vld [vmem:[#allocation28 + $0x10] sm:$0xf]
    %v2375 = vld [vmem:[#allocation28 + $0x14] sm:$0xf]
    %v2376 = vld [vmem:[#allocation28 + $0x18] sm:$0xf]
    %v2377 = vld [vmem:[#allocation28 + $0x1c] sm:$0xf]
    %v2378 = vld [vmem:[#allocation28 + $0x20] sm:$0xf]
    %v2379 = vld [vmem:[#allocation28 + $0x24] sm:$0xf]
    %v2380 = vld [vmem:[#allocation28 + $0x28] sm:$0xf]
    %v2381 = vld [vmem:[#allocation28 + $0x2c] sm:$0xf]
    %v2382 = vld [vmem:[#allocation28 + $0x30] sm:$0xf]
    %v2383 = vld [vmem:[#allocation28 + $0x34] sm:$0xf]
    %v2384 = vld [vmem:[#allocation28 + $0x38] sm:$0xf]
    %v2385 = vld [vmem:[#allocation28 + $0x3c] sm:$0xf]
    %v2386 = vld [vmem:[#allocation29] sm:$0x1]
    %v2387 = vld [vmem:[#allocation31] sm:$0x1]
    %v2388 = vld [vmem:[#allocation32] sm:$0x1]
    %v2389 = vld [vmem:[#allocation34] sm:$0xff]
    %v2390 = vld [vmem:[#allocation34 + $0x8] sm:$0xff]
    %v2391 = vld [vmem:[#allocation34 + $0x10] sm:$0xff]
    %v2392 = vld [vmem:[#allocation34 + $0x18] sm:$0xff]
    %v2393 = vld [vmem:[#allocation34 + $0x20] sm:$0xff]
    %v2394 = vld [vmem:[#allocation34 + $0x28] sm:$0xff]
    %v2395 = vld [vmem:[#allocation34 + $0x30] sm:$0xff]
    %v2396 = vld [vmem:[#allocation34 + $0x38] sm:$0xff]
    %v2397 = vld [vmem:[#allocation34 + $0x40] sm:$0xff]
    %v2398 = vld [vmem:[#allocation34 + $0x48] sm:$0xff]
    %v2399 = vld [vmem:[#allocation34 + $0x50] sm:$0xff]
    %v2400 = vld [vmem:[#allocation34 + $0x58] sm:$0xff]
    %v2401 = vld [vmem:[#allocation34 + $0x60] sm:$0xff]
    %v2402 = vld [vmem:[#allocation34 + $0x68] sm:$0xff]
    %v2403 = vld [vmem:[#allocation34 + $0x70] sm:$0xff]
    %v2404 = vld [vmem:[#allocation34 + $0x78] sm:$0xff]
    %v2405 = vld [vmem:[#allocation34 + $0x80] sm:$0xff]
    %v2406 = vld [vmem:[#allocation34 + $0x88] sm:$0xff]
    %v2407 = vld [vmem:[#allocation34 + $0x90] sm:$0xff]
    %v2408 = vld [vmem:[#allocation34 + $0x98] sm:$0xff]
    %v2409 = vld [vmem:[#allocation34 + $0xa0] sm:$0xff]
    %v2410 = vld [vmem:[#allocation34 + $0xa8] sm:$0xff]
    %v2411 = vld [vmem:[#allocation34 + $0xb0] sm:$0xff]
    %v2412 = vld [vmem:[#allocation34 + $0xb8] sm:$0xff]
    %v2413 = vld [vmem:[#allocation34 + $0xc0] sm:$0xff]
    %v2414 = vld [vmem:[#allocation34 + $0xc8] sm:$0xff]
    %v2415 = vld [vmem:[#allocation34 + $0xd0] sm:$0xff]
    %v2416 = vld [vmem:[#allocation34 + $0xd8] sm:$0xff]
    %v2417 = vld [vmem:[#allocation34 + $0xe0] sm:$0xff]
    %v2418 = vld [vmem:[#allocation34 + $0xe8] sm:$0xff]
    %v2419 = vld [vmem:[#allocation34 + $0xf0] sm:$0xff]
    %v2420 = vld [vmem:[#allocation34 + $0xf8] sm:$0xff]
    %v2421 = vld [vmem:[#allocation35] sm:$0xf]
    %v2422 = vld [vmem:[#allocation37] sm:$0xf]
    %v2423 = vld [vmem:[#allocation37 + $0x4] sm:$0xf]
    %v2424 = vld [vmem:[#allocation37 + $0x8] sm:$0xf]
    %v2425 = vld [vmem:[#allocation37 + $0xc] sm:$0xf]
    %v2426 = vld [vmem:[#allocation37 + $0x10] sm:$0xf]
    %v2427 = vld [vmem:[#allocation37 + $0x14] sm:$0xf]
    %v2428 = vld [vmem:[#allocation37 + $0x18] sm:$0xf]
    %v2429 = vld [vmem:[#allocation37 + $0x1c] sm:$0xf]
    %v2430 = vld [vmem:[#allocation37 + $0x20] sm:$0xf]
    %v2431 = vld [vmem:[#allocation37 + $0x24] sm:$0xf]
    %v2432 = vld [vmem:[#allocation37 + $0x28] sm:$0xf]
    %v2433 = vld [vmem:[#allocation37 + $0x2c] sm:$0xf]
    %v2434 = vld [vmem:[#allocation37 + $0x30] sm:$0xf]
    %v2435 = vld [vmem:[#allocation37 + $0x34] sm:$0xf]
    %v2436 = vld [vmem:[#allocation37 + $0x38] sm:$0xf]
    %v2437 = vld [vmem:[#allocation37 + $0x3c] sm:$0xf]
    %v2438 = vld [vmem:[#allocation37 + $0x40] sm:$0xf]
    %v2439 = vld [vmem:[#allocation37 + $0x44] sm:$0xf]
    %v2440 = vld [vmem:[#allocation37 + $0x48] sm:$0xf]
    %v2441 = vld [vmem:[#allocation37 + $0x4c] sm:$0xf]
    %v2442 = vld [vmem:[#allocation37 + $0x50] sm:$0xf]
    %v2443 = vld [vmem:[#allocation37 + $0x54] sm:$0xf]
    %v2444 = vld [vmem:[#allocation37 + $0x58] sm:$0xf]
    %v2445 = vld [vmem:[#allocation37 + $0x5c] sm:$0xf]
    %v2446 = vld [vmem:[#allocation37 + $0x60] sm:$0xf]
    %v2447 = vld [vmem:[#allocation37 + $0x64] sm:$0xf]
    %v2448 = vld [vmem:[#allocation37 + $0x68] sm:$0xf]
    %v2449 = vld [vmem:[#allocation37 + $0x6c] sm:$0xf]
    %v2450 = vld [vmem:[#allocation37 + $0x70] sm:$0xf]
    %v2451 = vld [vmem:[#allocation37 + $0x74] sm:$0xf]
    %v2452 = vld [vmem:[#allocation37 + $0x78] sm:$0xf]
    %v2453 = vld [vmem:[#allocation37 + $0x7c] sm:$0xf]
    %v2454 = vld [vmem:[#allocation37 + $0x80] sm:$0xf]
    %v2455 = vld [vmem:[#allocation37 + $0x84] sm:$0xf]
    %v2456 = vld [vmem:[#allocation37 + $0x88] sm:$0xf]
    %v2457 = vld [vmem:[#allocation37 + $0x8c] sm:$0xf]
    %v2458 = vld [vmem:[#allocation37 + $0x90] sm:$0xf]
    %v2459 = vld [vmem:[#allocation37 + $0x94] sm:$0xf]
    %v2460 = vld [vmem:[#allocation37 + $0x98] sm:$0xf]
    %v2461 = vld [vmem:[#allocation37 + $0x9c] sm:$0xf]
    %v2462 = vld [vmem:[#allocation37 + $0xa0] sm:$0xf]
    %v2463 = vld [vmem:[#allocation37 + $0xa4] sm:$0xf]
    %v2464 = vld [vmem:[#allocation37 + $0xa8] sm:$0xf]
    %v2465 = vld [vmem:[#allocation37 + $0xac] sm:$0xf]
    %v2466 = vld [vmem:[#allocation37 + $0xb0] sm:$0xf]
    %v2467 = vld [vmem:[#allocation37 + $0xb4] sm:$0xf]
    %v2468 = vld [vmem:[#allocation37 + $0xb8] sm:$0xf]
    %v2469 = vld [vmem:[#allocation37 + $0xbc] sm:$0xf]
    %v2470 = vld [vmem:[#allocation37 + $0xc0] sm:$0xf]
    %v2471 = vld [vmem:[#allocation37 + $0xc4] sm:$0xf]
    %v2472 = vld [vmem:[#allocation37 + $0xc8] sm:$0xf]
    %v2473 = vld [vmem:[#allocation37 + $0xcc] sm:$0xf]
    %v2474 = vld [vmem:[#allocation37 + $0xd0] sm:$0xf]
    %v2475 = vld [vmem:[#allocation37 + $0xd4] sm:$0xf]
    %v2476 = vld [vmem:[#allocation37 + $0xd8] sm:$0xf]
    %v2477 = vld [vmem:[#allocation37 + $0xdc] sm:$0xf]
    %v2478 = vld [vmem:[#allocation37 + $0xe0] sm:$0xf]
    %v2479 = vld [vmem:[#allocation37 + $0xe4] sm:$0xf]
    %v2480 = vld [vmem:[#allocation37 + $0xe8] sm:$0xf]
    %v2481 = vld [vmem:[#allocation37 + $0xec] sm:$0xf]
    %v2482 = vld [vmem:[#allocation37 + $0xf0] sm:$0xf]
    %v2483 = vld [vmem:[#allocation37 + $0xf4] sm:$0xf]
    %v2484 = vld [vmem:[#allocation37 + $0xf8] sm:$0xf]
    %v2485 = vld [vmem:[#allocation37 + $0xfc] sm:$0xf]
    %v2486 = vld [vmem:[#allocation38] sm:$0x1]
    %v2487 = vld [vmem:[#allocation40] sm:$0x1]
    %v2488 = vld [vmem:[#allocation41] sm:$0x1]
    %v2489 = vpack.c.bf16 %v2320, %v2319
    %v2491 = vlaneseq
    %v2492 = vshrl.u32 %v2491, 7
    %v2493 = vsub.s32 0, %v2492
    %v2494 = vrot.slane %v2369, %v2493
    %v2495 = vlaneseq
    %v2496 = vshrl.u32 %v2495, 7
    %v2497 = vsub.s32 1, %v2496
    %v2498 = vrot.slane %v2369, %v2497
    %v2499 = vlaneseq
    %v2500 = vshrl.u32 %v2499, 7
    %v2501 = vsub.s32 2, %v2500
    %v2502 = vrot.slane %v2369, %v2501
    %v2503 = vlaneseq
    %v2504 = vshrl.u32 %v2503, 7
    %v2505 = vsub.s32 3, %v2504
    %v2506 = vrot.slane %v2369, %v2505
    %v2507 = vlaneseq
    %v2508 = vshrl.u32 %v2507, 7
    %v2509 = vsub.s32 4, %v2508
    %v2510 = vrot.slane %v2369, %v2509
    %v2511 = vlaneseq
    %v2512 = vshrl.u32 %v2511, 7
    %v2513 = vsub.s32 5, %v2512
    %v2514 = vrot.slane %v2369, %v2513
    %v2569 = vunpack.c.l.b16 %v2321
    %v2570 = vunpack.c.h.b16 %v2321
    %v2571 = vunpack.c.l.b16 %v2322
    %v2572 = vunpack.c.h.b16 %v2322
    %v2573 = vunpack.c.l.b16 %v2323
    %v2574 = vunpack.c.h.b16 %v2323
    %v2575 = vunpack.c.l.b16 %v2324
    %v2576 = vunpack.c.h.b16 %v2324
    %v2577 = vunpack.c.l.b16 %v2325
    %v2578 = vunpack.c.h.b16 %v2325
    %v2579 = vunpack.c.l.b16 %v2326
    %v2580 = vunpack.c.h.b16 %v2326
    %v2581 = vunpack.c.l.b16 %v2327
    %v2582 = vunpack.c.h.b16 %v2327
    %v2583 = vunpack.c.l.b16 %v2328
    %v2584 = vunpack.c.h.b16 %v2328
    %v2585 = vunpack.c.l.b16 %v2329
    %v2586 = vunpack.c.h.b16 %v2329
    %v2587 = vunpack.c.l.b16 %v2330
    %v2588 = vunpack.c.h.b16 %v2330
    %v2589 = vunpack.c.l.b16 %v2331
    %v2590 = vunpack.c.h.b16 %v2331
    %v2591 = vunpack.c.l.b16 %v2332
    %v2592 = vunpack.c.h.b16 %v2332
    %v2593 = vunpack.c.l.b16 %v2333
    %v2594 = vunpack.c.h.b16 %v2333
    %v2595 = vunpack.c.l.b16 %v2334
    %v2596 = vunpack.c.h.b16 %v2334
    %v2597 = vunpack.c.l.b16 %v2335
    %v2598 = vunpack.c.h.b16 %v2335
    %v2599 = vunpack.c.l.b16 %v2336
    %v2600 = vunpack.c.h.b16 %v2336
    %v2601 = vunpack.c.l.b16 %v2337
    %v2602 = vunpack.c.h.b16 %v2337
    %v2603 = vunpack.c.l.b16 %v2338
    %v2604 = vunpack.c.h.b16 %v2338
    %v2605 = vunpack.c.l.b16 %v2339
    %v2606 = vunpack.c.h.b16 %v2339
    %v2607 = vunpack.c.l.b16 %v2340
    %v2608 = vunpack.c.h.b16 %v2340
    %v2609 = vunpack.c.l.b16 %v2341
    %v2610 = vunpack.c.h.b16 %v2341
    %v2611 = vunpack.c.l.b16 %v2342
    %v2612 = vunpack.c.h.b16 %v2342
    %v2613 = vunpack.c.l.b16 %v2343
    %v2614 = vunpack.c.h.b16 %v2343
    %v2615 = vunpack.c.l.b16 %v2344
    %v2616 = vunpack.c.h.b16 %v2344
    %v2617 = vunpack.c.l.b16 %v2345
    %v2618 = vunpack.c.h.b16 %v2345
    %v2619 = vunpack.c.l.b16 %v2346
    %v2620 = vunpack.c.h.b16 %v2346
    %v2621 = vunpack.c.l.b16 %v2347
    %v2622 = vunpack.c.h.b16 %v2347
    %v2623 = vunpack.c.l.b16 %v2348
    %v2624 = vunpack.c.h.b16 %v2348
    %v2625 = vunpack.c.l.b16 %v2349
    %v2626 = vunpack.c.h.b16 %v2349
    %v2627 = vunpack.c.l.b16 %v2350
    %v2628 = vunpack.c.h.b16 %v2350
    %v2629 = vunpack.c.l.b16 %v2351
    %v2630 = vunpack.c.h.b16 %v2351
    %v2631 = vunpack.c.l.b16 %v2352
    %v2632 = vunpack.c.h.b16 %v2352
    %v2633 = vunpack.c.l.b16 %v2353
    %v2634 = vunpack.c.h.b16 %v2353
    %v2635 = vunpack.c.l.b16 %v2354
    %v2636 = vunpack.c.h.b16 %v2354
    %v2637 = vunpack.c.l.b16 %v2355
    %v2638 = vunpack.c.h.b16 %v2355
    %v2639 = vunpack.c.l.b16 %v2356
    %v2640 = vunpack.c.h.b16 %v2356
    %v2641 = vunpack.c.l.b16 %v2357
    %v2642 = vunpack.c.h.b16 %v2357
    %v2643 = vunpack.c.l.b16 %v2358
    %v2644 = vunpack.c.h.b16 %v2358
    %v2645 = vunpack.c.l.b16 %v2359
    %v2646 = vunpack.c.h.b16 %v2359
    %v2647 = vunpack.c.l.b16 %v2360
    %v2648 = vunpack.c.h.b16 %v2360
    %v2649 = vunpack.c.l.b16 %v2361
    %v2650 = vunpack.c.h.b16 %v2361
    %v2651 = vunpack.c.l.b16 %v2362
    %v2652 = vunpack.c.h.b16 %v2362
    %v2653 = vunpack.c.l.b16 %v2363
    %v2654 = vunpack.c.h.b16 %v2363
    %v2655 = vunpack.c.l.b16 %v2364
    %v2656 = vunpack.c.h.b16 %v2364
    %v2657 = vunpack.c.l.b16 %v2365
    %v2658 = vunpack.c.h.b16 %v2365
    %v2659 = vunpack.c.l.b16 %v2366
    %v2660 = vunpack.c.h.b16 %v2366
    %v2661 = vunpack.c.l.b16 %v2367
    %v2662 = vunpack.c.h.b16 %v2367
    %v2663 = vunpack.c.l.b16 %v2368
    %v2664 = vunpack.c.h.b16 %v2368
    %v2665 = vpack.c.b16 %v2575, %v2569
    %v2666 = vpack.c.b16 %v2576, %v2570
    %v2667 = vpack.c.b16 %v2577, %v2571
    %v2668 = vpack.c.b16 %v2578, %v2572
    %v2669 = vpack.c.b16 %v2579, %v2573
    %v2670 = vpack.c.b16 %v2580, %v2574
    %v2671 = vpack.c.b16 %v2587, %v2581
    %v2672 = vpack.c.b16 %v2588, %v2582
    %v2673 = vpack.c.b16 %v2589, %v2583
    %v2674 = vpack.c.b16 %v2590, %v2584
    %v2675 = vpack.c.b16 %v2591, %v2585
    %v2676 = vpack.c.b16 %v2592, %v2586
    %v2677 = vpack.c.b16 %v2599, %v2593
    %v2678 = vpack.c.b16 %v2600, %v2594
    %v2679 = vpack.c.b16 %v2601, %v2595
    %v2680 = vpack.c.b16 %v2602, %v2596
    %v2681 = vpack.c.b16 %v2603, %v2597
    %v2682 = vpack.c.b16 %v2604, %v2598
    %v2683 = vpack.c.b16 %v2611, %v2605
    %v2684 = vpack.c.b16 %v2612, %v2606
    %v2685 = vpack.c.b16 %v2613, %v2607
    %v2686 = vpack.c.b16 %v2614, %v2608
    %v2687 = vpack.c.b16 %v2615, %v2609
    %v2688 = vpack.c.b16 %v2616, %v2610
    %v2689 = vpack.c.b16 %v2623, %v2617
    %v2690 = vpack.c.b16 %v2624, %v2618
    %v2691 = vpack.c.b16 %v2625, %v2619
    %v2692 = vpack.c.b16 %v2626, %v2620
    %v2693 = vpack.c.b16 %v2627, %v2621
    %v2694 = vpack.c.b16 %v2628, %v2622
    %v2695 = vpack.c.b16 %v2635, %v2629
    %v2696 = vpack.c.b16 %v2636, %v2630
    %v2697 = vpack.c.b16 %v2637, %v2631
    %v2698 = vpack.c.b16 %v2638, %v2632
    %v2699 = vpack.c.b16 %v2639, %v2633
    %v2700 = vpack.c.b16 %v2640, %v2634
    %v2701 = vpack.c.b16 %v2647, %v2641
    %v2702 = vpack.c.b16 %v2648, %v2642
    %v2703 = vpack.c.b16 %v2649, %v2643
    %v2704 = vpack.c.b16 %v2650, %v2644
    %v2705 = vpack.c.b16 %v2651, %v2645
    %v2706 = vpack.c.b16 %v2652, %v2646
    %v2707 = vpack.c.b16 %v2659, %v2653
    %v2708 = vpack.c.b16 %v2660, %v2654
    %v2709 = vpack.c.b16 %v2661, %v2655
    %v2710 = vpack.c.b16 %v2662, %v2656
    %v2711 = vpack.c.b16 %v2663, %v2657
    %v2712 = vpack.c.b16 %v2664, %v2658
    %2761 = vmatprep.subr.bf16.mxu0 %v2666
    %2762 = vmatpush1.bf16.msra.mxu0 %v2665
    %2763 = vmatprep.subr.bf16.mxu0 %v2672
    %2764 = vmatpush1.bf16.msra.mxu0 %v2671
    %2765 = vmatprep.subr.bf16.mxu0 %v2678
    %2766 = vmatpush1.bf16.msra.mxu0 %v2677
    %2767 = vmatprep.subr.bf16.mxu0 %v2684
    %2768 = vmatpush1.bf16.msra.mxu0 %v2683
    %2769 = vmatprep.subr.bf16.mxu0 %v2690
    %2770 = vmatpush1.bf16.msra.mxu0 %v2689
    %2771 = vmatprep.subr.bf16.mxu0 %v2696
    %2772 = vmatpush1.bf16.msra.mxu0 %v2695
    %2773 = vmatprep.subr.bf16.mxu0 %v2702
    %2774 = vmatpush1.bf16.msra.mxu0 %v2701
    %2775 = vmatprep.subr.bf16.mxu0 %v2708
    %2776 = vmatpush1.bf16.msra.mxu0 %v2707
    %2777 = vmatprep.subr.bf16.mxu0 0
    %2778 = vmatpush1.bf16.msra.mxu0 0
    %2779 = vmatprep.subr.bf16.mxu0 0
    %2780 = vmatpush1.bf16.msra.mxu0 0
    %2781 = vmatprep.subr.bf16.mxu0 0
    %2782 = vmatpush1.bf16.msra.mxu0 0
    %2783 = vmatprep.subr.bf16.mxu0 0
    %2784 = vmatpush1.bf16.msra.mxu0 0
    %2785 = vmatprep.subr.bf16.mxu0 0
    %2786 = vmatpush1.bf16.msra.mxu0 0
    %2787 = vmatprep.subr.bf16.mxu0 0
    %2788 = vmatpush1.bf16.msra.mxu0 0
    %2789 = vmatprep.subr.bf16.mxu0 0
    %2790 = vmatpush1.bf16.msra.mxu0 0
    %2791 = vmatprep.subr.bf16.mxu0 0
    %2792 = vmatpush1.bf16.msra.mxu0 0
    %2793 = vmatprep.mubr.bf16.mxu0 0
    %2794 = vmatmul.mubr.bf16.gmra.mrb[0].mxu0 %v2489
    %v2795 = vpop.f32.mrb[0].mxu0
    %v2796 = vadd.f32 %v2494, %v2795
    %v2797 = vpop.f32.mrb[0].mxu0
    %v2798 = vadd.f32 %v2498, %v2797
    %v2799 = vpop.f32.mrb[0].mxu0
    %v2800 = vadd.f32 %v2494, %v2799
    %v2801 = vpop.f32.mrb[0].mxu0
    %v2802 = vadd.f32 %v2498, %v2801
    %2803 = vdwg.mxu0
    %2804 = vmatprep.subr.bf16.mxu0 %v2668
    %2805 = vmatpush1.bf16.msra.mxu0 %v2667
    %2806 = vmatprep.subr.bf16.mxu0 %v2674
    %2807 = vmatpush1.bf16.msra.mxu0 %v2673
    %2808 = vmatprep.subr.bf16.mxu0 %v2680
    %2809 = vmatpush1.bf16.msra.mxu0 %v2679
    %2810 = vmatprep.subr.bf16.mxu0 %v2686
    %2811 = vmatpush1.bf16.msra.mxu0 %v2685
    %2812 = vmatprep.subr.bf16.mxu0 %v2692
    %2813 = vmatpush1.bf16.msra.mxu0 %v2691
    %2814 = vmatprep.subr.bf16.mxu0 %v2698
    %2815 = vmatpush1.bf16.msra.mxu0 %v2697
    %2816 = vmatprep.subr.bf16.mxu0 %v2704
    %2817 = vmatpush1.bf16.msra.mxu0 %v2703
    %2818 = vmatprep.subr.bf16.mxu0 %v2710
    %2819 = vmatpush1.bf16.msra.mxu0 %v2709
    %2820 = vmatprep.subr.bf16.mxu0 0
    %2821 = vmatpush1.bf16.msra.mxu0 0
    %2822 = vmatprep.subr.bf16.mxu0 0
    %2823 = vmatpush1.bf16.msra.mxu0 0
    %2824 = vmatprep.subr.bf16.mxu0 0
    %2825 = vmatpush1.bf16.msra.mxu0 0
    %2826 = vmatprep.subr.bf16.mxu0 0
    %2827 = vmatpush1.bf16.msra.mxu0 0
    %2828 = vmatprep.subr.bf16.mxu0 0
    %2829 = vmatpush1.bf16.msra.mxu0 0
    %2830 = vmatprep.subr.bf16.mxu0 0
    %2831 = vmatpush1.bf16.msra.mxu0 0
    %2832 = vmatprep.subr.bf16.mxu0 0
    %2833 = vmatpush1.bf16.msra.mxu0 0
    %2834 = vmatprep.subr.bf16.mxu0 0
    %2835 = vmatpush1.bf16.msra.mxu0 0
    %2836 = vmatprep.mubr.bf16.mxu0 0
    %2837 = vmatmul.mubr.bf16.gmra.mrb[0].mxu0 %v2489
    %v2838 = vpop.f32.mrb[0].mxu0
    %v2839 = vadd.f32 %v2502, %v2838
    %v2840 = vpop.f32.mrb[0].mxu0
    %v2841 = vadd.f32 %v2506, %v2840
    %v2842 = vpop.f32.mrb[0].mxu0
    %v2843 = vadd.f32 %v2502, %v2842
    %v2844 = vpop.f32.mrb[0].mxu0
    %v2845 = vadd.f32 %v2506, %v2844
    %2846 = vdwg.mxu0
    %2847 = vmatprep.subr.bf16.mxu0 %v2670
    %2848 = vmatpush1.bf16.msra.mxu0 %v2669
    %2849 = vmatprep.subr.bf16.mxu0 %v2676
    %2850 = vmatpush1.bf16.msra.mxu0 %v2675
    %2851 = vmatprep.subr.bf16.mxu0 %v2682
    %2852 = vmatpush1.bf16.msra.mxu0 %v2681
    %2853 = vmatprep.subr.bf16.mxu0 %v2688
    %2854 = vmatpush1.bf16.msra.mxu0 %v2687
    %2855 = vmatprep.subr.bf16.mxu0 %v2694
    %2856 = vmatpush1.bf16.msra.mxu0 %v2693
    %2857 = vmatprep.subr.bf16.mxu0 %v2700
    %2858 = vmatpush1.bf16.msra.mxu0 %v2699
    %2859 = vmatprep.subr.bf16.mxu0 %v2706
    %2860 = vmatpush1.bf16.msra.mxu0 %v2705
    %2861 = vmatprep.subr.bf16.mxu0 %v2712
    %2862 = vmatpush1.bf16.msra.mxu0 %v2711
    %2863 = vmatprep.subr.bf16.mxu0 0
    %2864 = vmatpush1.bf16.msra.mxu0 0
    %2865 = vmatprep.subr.bf16.mxu0 0
    %2866 = vmatpush1.bf16.msra.mxu0 0
    %2867 = vmatprep.subr.bf16.mxu0 0
    %2868 = vmatpush1.bf16.msra.mxu0 0
    %2869 = vmatprep.subr.bf16.mxu0 0
    %2870 = vmatpush1.bf16.msra.mxu0 0
    %2871 = vmatprep.subr.bf16.mxu0 0
    %2872 = vmatpush1.bf16.msra.mxu0 0
    %2873 = vmatprep.subr.bf16.mxu0 0
    %2874 = vmatpush1.bf16.msra.mxu0 0
    %2875 = vmatprep.subr.bf16.mxu0 0
    %2876 = vmatpush1.bf16.msra.mxu0 0
    %2877 = vmatprep.subr.bf16.mxu0 0
    %2878 = vmatpush1.bf16.msra.mxu0 0
    %2879 = vmatprep.mubr.bf16.mxu0 0
    %2880 = vmatmul.mubr.bf16.gmra.mrb[0].mxu0 %v2489
    %v2881 = vpop.f32.mrb[0].mxu0
    %v2882 = vadd.f32 %v2510, %v2881
    %v2883 = vpop.f32.mrb[0].mxu0
    %v2884 = vadd.f32 %v2514, %v2883
    %v2885 = vpop.f32.mrb[0].mxu0
    %v2886 = vadd.f32 %v2510, %v2885
    %v2887 = vpop.f32.mrb[0].mxu0
    %v2888 = vadd.f32 %v2514, %v2887
    %2889 = vdwg.mxu0
    %v2890 = vpack.c.bf16 %v2796, %v2796
    %v2891 = vpack.c.bf16 %v2798, %v2798
    %v2892 = vpack.c.bf16 %v2839, %v2839
    %v2893 = vpack.c.bf16 %v2841, %v2841
    %v2894 = vpack.c.bf16 %v2882, %v2882
    %v2895 = vpack.c.bf16 %v2884, %v2884
    %v2896 = vpack.c.bf16 %v2800, %v2800
    %v2897 = vpack.c.bf16 %v2802, %v2802
    %v2898 = vpack.c.bf16 %v2843, %v2843
    %v2899 = vpack.c.bf16 %v2845, %v2845
    %v2900 = vpack.c.bf16 %v2886, %v2886
    %v2901 = vpack.c.bf16 %v2888, %v2888
    %2902 = vmatprep.subr.bf16.mxu0 0
    %2903 = vmatpush1.bf16.xpose.msra.mxu0 %v2892
    %2904 = vmatprep.subr.bf16.mxu0 0
    %2905 = vmatpush1.bf16.xpose.msra.mxu0 0
    %2906 = vmatprep.subr.bf16.mxu0 0
    %2907 = vmatpush1.bf16.xpose.msra.mxu0 0
    %2908 = vmatprep.subr.bf16.mxu0 0
    %2909 = vmatpush1.bf16.xpose.msra.mxu0 0
    %2910 = vmatprep.subr.bf16.mxu0 0
    %2911 = vmatpush1.bf16.xpose.msra.mxu0 0
    %2912 = vmatprep.subr.bf16.mxu0 0
    %2913 = vmatpush1.bf16.xpose.msra.mxu0 0
    %2914 = vmatprep.subr.bf16.mxu0 0
    %2915 = vmatpush1.bf16.xpose.msra.mxu0 0
    %2916 = vmatprep.subr.bf16.mxu0 0
    %2917 = vmatpush1.bf16.xpose.msra.mxu0 0
    %2918 = vmatprep.subr.bf16.mxu0 0
    %2919 = vmatpush1.bf16.xpose.msra.mxu0 0
    %2920 = vmatprep.subr.bf16.mxu0 0
    %2921 = vmatpush1.bf16.xpose.msra.mxu0 0
    %2922 = vmatprep.subr.bf16.mxu0 0
    %2923 = vmatpush1.bf16.xpose.msra.mxu0 0
    %2924 = vmatprep.subr.bf16.mxu0 0
    %2925 = vmatpush1.bf16.xpose.msra.mxu0 0
    %2926 = vmatprep.subr.bf16.mxu0 0
    %2927 = vmatpush1.bf16.xpose.msra.mxu0 0
    %2928 = vmatprep.subr.bf16.mxu0 0
    %2929 = vmatpush1.bf16.xpose.msra.mxu0 0
    %2930 = vmatprep.subr.bf16.mxu0 0
    %2931 = vmatpush1.bf16.xpose.msra.mxu0 0
    %2932 = vmatprep.subr.bf16.mxu0 0
    %2933 = vmatpush1.bf16.xpose.msra.mxu0 0
    %2934 = vmatprep.mubr.bf16.mxu0 0
    %2935 = vmatmul.mubr.bf16.gmra.mrb[0].mxu0 %v2890
    %v2936 = vpop.f32.mrb[0].mxu0
    %v2937 = vadd.f32 %v498, %v2936
    %v2938 = vpop.f32.mrb[0].mxu0
    %v2939 = vpop.f32.mrb[0].mxu0
    %v2940 = vpop.f32.mrb[0].mxu0
    %2941 = vdwg.mxu0
    %2942 = vmatprep.subr.bf16.mxu0 0
    %2943 = vmatpush1.bf16.xpose.msra.mxu0 %v2898
    %2944 = vmatprep.subr.bf16.mxu0 0
    %2945 = vmatpush1.bf16.xpose.msra.mxu0 0
    %2946 = vmatprep.subr.bf16.mxu0 0
    %2947 = vmatpush1.bf16.xpose.msra.mxu0 0
    %2948 = vmatprep.subr.bf16.mxu0 0
    %2949 = vmatpush1.bf16.xpose.msra.mxu0 0
    %2950 = vmatprep.subr.bf16.mxu0 0
    %2951 = vmatpush1.bf16.xpose.msra.mxu0 0
    %2952 = vmatprep.subr.bf16.mxu0 0
    %2953 = vmatpush1.bf16.xpose.msra.mxu0 0
    %2954 = vmatprep.subr.bf16.mxu0 0
    %2955 = vmatpush1.bf16.xpose.msra.mxu0 0
    %2956 = vmatprep.subr.bf16.mxu0 0
    %2957 = vmatpush1.bf16.xpose.msra.mxu0 0
    %2958 = vmatprep.subr.bf16.mxu0 0
    %2959 = vmatpush1.bf16.xpose.msra.mxu0 0
    %2960 = vmatprep.subr.bf16.mxu0 0
    %2961 = vmatpush1.bf16.xpose.msra.mxu0 0
    %2962 = vmatprep.subr.bf16.mxu0 0
    %2963 = vmatpush1.bf16.xpose.msra.mxu0 0
    %2964 = vmatprep.subr.bf16.mxu0 0
    %2965 = vmatpush1.bf16.xpose.msra.mxu0 0
    %2966 = vmatprep.subr.bf16.mxu0 0
    %2967 = vmatpush1.bf16.xpose.msra.mxu0 0
    %2968 = vmatprep.subr.bf16.mxu0 0
    %2969 = vmatpush1.bf16.xpose.msra.mxu0 0
    %2970 = vmatprep.subr.bf16.mxu0 0
    %2971 = vmatpush1.bf16.xpose.msra.mxu0 0
    %2972 = vmatprep.subr.bf16.mxu0 0
    %2973 = vmatpush1.bf16.xpose.msra.mxu0 0
    %2974 = vmatprep.mubr.bf16.mxu0 0
    %2975 = vmatmul.mubr.bf16.gmra.mrb[0].mxu0 %v2896
    %v2976 = vpop.f32.mrb[0].mxu0
    %v2977 = vadd.f32 %v502, %v2976
    %v2978 = vpop.f32.mrb[0].mxu0
    %v2979 = vpop.f32.mrb[0].mxu0
    %v2980 = vpop.f32.mrb[0].mxu0
    %2981 = vdwg.mxu0
    %v2982 = vsel %vm1207, %v2937, -inf
    %2983 = vmax.xlane.f32.xlu0 %v2982
    %v2984 = vpop.xlane.xlu0 %2983
    %v2985 = vsel %vm1207, %v2977, -inf
    %2986 = vmax.xlane.f32.xlu0 %v2985
    %v2987 = vpop.xlane.xlu0 %2986
    %v2988 = vsub.f32 %v2937, %v2984
    %v2989 = vsub.f32 %v2977, %v2987
    %v2990 = vmul.f32 %v2988, 1.442695
    %v2991 = vpow.pop %v2990
    %v2992 = vmul.f32 %v2989, 1.442695
    %v2993 = vpow.pop %v2992
    %v2994 = vsel %vm1207, %v2991, 0.0
    %2995 = vadd.xlane.f32.xlu0 %v2994
    %v2996 = vpop.xlane.xlu0 %2995
    %v2997 = vsel %vm1207, %v2993, 0.0
    %2998 = vadd.xlane.f32.xlu0 %v2997
    %v2999 = vpop.xlane.xlu0 %2998
    %v3000 = vrcp.pop %v2996
    %v3001 = vrcp.pop %v2999
    %v3002 = vmul.f32 %v2991, %v3000
    %v3003 = vmul.f32 %v2993, %v3001
    %v3004 = vpack.c.bf16 %v3002, %v3002
    %v3005 = vpack.c.bf16 %v3003, %v3003
    %3006 = vmatprep.subr.bf16.mxu0 0
    %3007 = vmatpush1.bf16.xpose.msra.mxu0 %v2893
    %3008 = vmatprep.subr.bf16.mxu0 0
    %3009 = vmatpush1.bf16.xpose.msra.mxu0 0
    %3010 = vmatprep.subr.bf16.mxu0 0
    %3011 = vmatpush1.bf16.xpose.msra.mxu0 0
    %3012 = vmatprep.subr.bf16.mxu0 0
    %3013 = vmatpush1.bf16.xpose.msra.mxu0 0
    %3014 = vmatprep.subr.bf16.mxu0 0
    %3015 = vmatpush1.bf16.xpose.msra.mxu0 0
    %3016 = vmatprep.subr.bf16.mxu0 0
    %3017 = vmatpush1.bf16.xpose.msra.mxu0 0
    %3018 = vmatprep.subr.bf16.mxu0 0
    %3019 = vmatpush1.bf16.xpose.msra.mxu0 0
    %3020 = vmatprep.subr.bf16.mxu0 0
    %3021 = vmatpush1.bf16.xpose.msra.mxu0 0
    %3022 = vmatprep.subr.bf16.mxu0 0
    %3023 = vmatpush1.bf16.xpose.msra.mxu0 0
    %3024 = vmatprep.subr.bf16.mxu0 0
    %3025 = vmatpush1.bf16.xpose.msra.mxu0 0
    %3026 = vmatprep.subr.bf16.mxu0 0
    %3027 = vmatpush1.bf16.xpose.msra.mxu0 0
    %3028 = vmatprep.subr.bf16.mxu0 0
    %3029 = vmatpush1.bf16.xpose.msra.mxu0 0
    %3030 = vmatprep.subr.bf16.mxu0 0
    %3031 = vmatpush1.bf16.xpose.msra.mxu0 0
    %3032 = vmatprep.subr.bf16.mxu0 0
    %3033 = vmatpush1.bf16.xpose.msra.mxu0 0
    %3034 = vmatprep.subr.bf16.mxu0 0
    %3035 = vmatpush1.bf16.xpose.msra.mxu0 0
    %3036 = vmatprep.subr.bf16.mxu0 0
    %3037 = vmatpush1.bf16.xpose.msra.mxu0 0
    %3038 = vmatprep.mubr.bf16.mxu0 0
    %3039 = vmatmul.mubr.bf16.gmra.mrb[0].mxu0 %v2891
    %v3040 = vpop.f32.mrb[0].mxu0
    %v3041 = vadd.f32 %v498, %v3040
    %v3042 = vpop.f32.mrb[0].mxu0
    %v3043 = vpop.f32.mrb[0].mxu0
    %v3044 = vpop.f32.mrb[0].mxu0
    %3045 = vdwg.mxu0
    %3046 = vmatprep.subr.bf16.mxu0 0
    %3047 = vmatpush1.bf16.xpose.msra.mxu0 %v2899
    %3048 = vmatprep.subr.bf16.mxu0 0
    %3049 = vmatpush1.bf16.xpose.msra.mxu0 0
    %3050 = vmatprep.subr.bf16.mxu0 0
    %3051 = vmatpush1.bf16.xpose.msra.mxu0 0
    %3052 = vmatprep.subr.bf16.mxu0 0
    %3053 = vmatpush1.bf16.xpose.msra.mxu0 0
    %3054 = vmatprep.subr.bf16.mxu0 0
    %3055 = vmatpush1.bf16.xpose.msra.mxu0 0
    %3056 = vmatprep.subr.bf16.mxu0 0
    %3057 = vmatpush1.bf16.xpose.msra.mxu0 0
    %3058 = vmatprep.subr.bf16.mxu0 0
    %3059 = vmatpush1.bf16.xpose.msra.mxu0 0
    %3060 = vmatprep.subr.bf16.mxu0 0
    %3061 = vmatpush1.bf16.xpose.msra.mxu0 0
    %3062 = vmatprep.subr.bf16.mxu0 0
    %3063 = vmatpush1.bf16.xpose.msra.mxu0 0
    %3064 = vmatprep.subr.bf16.mxu0 0
    %3065 = vmatpush1.bf16.xpose.msra.mxu0 0
    %3066 = vmatprep.subr.bf16.mxu0 0
    %3067 = vmatpush1.bf16.xpose.msra.mxu0 0
    %3068 = vmatprep.subr.bf16.mxu0 0
    %3069 = vmatpush1.bf16.xpose.msra.mxu0 0
    %3070 = vmatprep.subr.bf16.mxu0 0
    %3071 = vmatpush1.bf16.xpose.msra.mxu0 0
    %3072 = vmatprep.subr.bf16.mxu0 0
    %3073 = vmatpush1.bf16.xpose.msra.mxu0 0
    %3074 = vmatprep.subr.bf16.mxu0 0
    %3075 = vmatpush1.bf16.xpose.msra.mxu0 0
    %3076 = vmatprep.subr.bf16.mxu0 0
    %3077 = vmatpush1.bf16.xpose.msra.mxu0 0
    %3078 = vmatprep.mubr.bf16.mxu0 0
    %3079 = vmatmul.mubr.bf16.gmra.mrb[0].mxu0 %v2897
    %v3080 = vpop.f32.mrb[0].mxu0
    %v3081 = vadd.f32 %v502, %v3080
    %v3082 = vpop.f32.mrb[0].mxu0
    %v3083 = vpop.f32.mrb[0].mxu0
    %v3084 = vpop.f32.mrb[0].mxu0
    %3085 = vdwg.mxu0
    %v3086 = vsel %vm1207, %v3041, -inf
    %3087 = vmax.xlane.f32.xlu0 %v3086
    %v3088 = vpop.xlane.xlu0 %3087
    %v3089 = vsel %vm1207, %v3081, -inf
    %3090 = vmax.xlane.f32.xlu0 %v3089
    %v3091 = vpop.xlane.xlu0 %3090
    %v3092 = vsub.f32 %v3041, %v3088
    %v3093 = vsub.f32 %v3081, %v3091
    %v3094 = vmul.f32 %v3092, 1.442695
    %v3095 = vpow.pop %v3094
    %v3096 = vmul.f32 %v3093, 1.442695
    %v3097 = vpow.pop %v3096
    %v3098 = vsel %vm1207, %v3095, 0.0
    %3099 = vadd.xlane.f32.xlu0 %v3098
    %v3100 = vpop.xlane.xlu0 %3099
    %v3101 = vsel %vm1207, %v3097, 0.0
    %3102 = vadd.xlane.f32.xlu0 %v3101
    %v3103 = vpop.xlane.xlu0 %3102
    %v3104 = vrcp.pop %v3100
    %v3105 = vrcp.pop %v3103
    %v3106 = vmul.f32 %v3095, %v3104
    %v3107 = vmul.f32 %v3097, %v3105
    %v3108 = vpack.c.bf16 %v3106, %v3106
    %v3109 = vpack.c.bf16 %v3107, %v3107
    %v3111 = vsel %vm1207, %v3108, 0
    %v3114 = vsel %vm1339, %v2895, 0
    %3116 = vmatprep.subr.bf16.mxu0 0
    %3117 = vmatpush1.bf16.msra.mxu0 %v3114
    %3118 = vmatprep.subr.bf16.mxu0 0
    %3119 = vmatpush1.bf16.msra.mxu0 0
    %3120 = vmatprep.subr.bf16.mxu0 0
    %3121 = vmatpush1.bf16.msra.mxu0 0
    %3122 = vmatprep.subr.bf16.mxu0 0
    %3123 = vmatpush1.bf16.msra.mxu0 0
    %3124 = vmatprep.subr.bf16.mxu0 0
    %3125 = vmatpush1.bf16.msra.mxu0 0
    %3126 = vmatprep.subr.bf16.mxu0 0
    %3127 = vmatpush1.bf16.msra.mxu0 0
    %3128 = vmatprep.subr.bf16.mxu0 0
    %3129 = vmatpush1.bf16.msra.mxu0 0
    %3130 = vmatprep.subr.bf16.mxu0 0
    %3131 = vmatpush1.bf16.msra.mxu0 0
    %3132 = vmatprep.subr.bf16.mxu0 0
    %3133 = vmatpush1.bf16.msra.mxu0 0
    %3134 = vmatprep.subr.bf16.mxu0 0
    %3135 = vmatpush1.bf16.msra.mxu0 0
    %3136 = vmatprep.subr.bf16.mxu0 0
    %3137 = vmatpush1.bf16.msra.mxu0 0
    %3138 = vmatprep.subr.bf16.mxu0 0
    %3139 = vmatpush1.bf16.msra.mxu0 0
    %3140 = vmatprep.subr.bf16.mxu0 0
    %3141 = vmatpush1.bf16.msra.mxu0 0
    %3142 = vmatprep.subr.bf16.mxu0 0
    %3143 = vmatpush1.bf16.msra.mxu0 0
    %3144 = vmatprep.subr.bf16.mxu0 0
    %3145 = vmatpush1.bf16.msra.mxu0 0
    %3146 = vmatprep.subr.bf16.mxu0 0
    %3147 = vmatpush1.bf16.msra.mxu0 0
    %3148 = vmatprep.mubr.bf16.mxu0 0
    %3149 = vmatmul.mubr.bf16.gmra.mrb[0].mxu0 %v3111
    %v3150 = vpop.f32.mrb[0].mxu0
    %v3151 = vadd.f32 0.0, %v3150
    %v3152 = vpop.f32.mrb[0].mxu0
    %v3153 = vpop.f32.mrb[0].mxu0
    %v3154 = vpop.f32.mrb[0].mxu0
    %3155 = vdwg.mxu0
    %v3157 = vsel %vm1207, %v3109, 0
    %v3160 = vsel %vm1339, %v2901, 0
    %3162 = vmatprep.subr.bf16.mxu0 0
    %3163 = vmatpush1.bf16.msra.mxu0 %v3160
    %3164 = vmatprep.subr.bf16.mxu0 0
    %3165 = vmatpush1.bf16.msra.mxu0 0
    %3166 = vmatprep.subr.bf16.mxu0 0
    %3167 = vmatpush1.bf16.msra.mxu0 0
    %3168 = vmatprep.subr.bf16.mxu0 0
    %3169 = vmatpush1.bf16.msra.mxu0 0
    %3170 = vmatprep.subr.bf16.mxu0 0
    %3171 = vmatpush1.bf16.msra.mxu0 0
    %3172 = vmatprep.subr.bf16.mxu0 0
    %3173 = vmatpush1.bf16.msra.mxu0 0
    %3174 = vmatprep.subr.bf16.mxu0 0
    %3175 = vmatpush1.bf16.msra.mxu0 0
    %3176 = vmatprep.subr.bf16.mxu0 0
    %3177 = vmatpush1.bf16.msra.mxu0 0
    %3178 = vmatprep.subr.bf16.mxu0 0
    %3179 = vmatpush1.bf16.msra.mxu0 0
    %3180 = vmatprep.subr.bf16.mxu0 0
    %3181 = vmatpush1.bf16.msra.mxu0 0
    %3182 = vmatprep.subr.bf16.mxu0 0
    %3183 = vmatpush1.bf16.msra.mxu0 0
    %3184 = vmatprep.subr.bf16.mxu0 0
    %3185 = vmatpush1.bf16.msra.mxu0 0
    %3186 = vmatprep.subr.bf16.mxu0 0
    %3187 = vmatpush1.bf16.msra.mxu0 0
    %3188 = vmatprep.subr.bf16.mxu0 0
    %3189 = vmatpush1.bf16.msra.mxu0 0
    %3190 = vmatprep.subr.bf16.mxu0 0
    %3191 = vmatpush1.bf16.msra.mxu0 0
    %3192 = vmatprep.subr.bf16.mxu0 0
    %3193 = vmatpush1.bf16.msra.mxu0 0
    %3194 = vmatprep.mubr.bf16.mxu0 0
    %3195 = vmatmul.mubr.bf16.gmra.mrb[0].mxu0 %v3157
    %v3196 = vpop.f32.mrb[0].mxu0
    %v3197 = vadd.f32 0.0, %v3196
    %v3198 = vpop.f32.mrb[0].mxu0
    %v3199 = vpop.f32.mrb[0].mxu0
    %v3200 = vpop.f32.mrb[0].mxu0
    %3201 = vdwg.mxu0
    %v3203 = vsel %vm1207, %v3004, 0
    %v3206 = vsel %vm1339, %v2894, 0
    %3208 = vmatprep.subr.bf16.mxu0 0
    %3209 = vmatpush1.bf16.msra.mxu0 %v3206
    %3210 = vmatprep.subr.bf16.mxu0 0
    %3211 = vmatpush1.bf16.msra.mxu0 0
    %3212 = vmatprep.subr.bf16.mxu0 0
    %3213 = vmatpush1.bf16.msra.mxu0 0
    %3214 = vmatprep.subr.bf16.mxu0 0
    %3215 = vmatpush1.bf16.msra.mxu0 0
    %3216 = vmatprep.subr.bf16.mxu0 0
    %3217 = vmatpush1.bf16.msra.mxu0 0
    %3218 = vmatprep.subr.bf16.mxu0 0
    %3219 = vmatpush1.bf16.msra.mxu0 0
    %3220 = vmatprep.subr.bf16.mxu0 0
    %3221 = vmatpush1.bf16.msra.mxu0 0
    %3222 = vmatprep.subr.bf16.mxu0 0
    %3223 = vmatpush1.bf16.msra.mxu0 0
    %3224 = vmatprep.subr.bf16.mxu0 0
    %3225 = vmatpush1.bf16.msra.mxu0 0
    %3226 = vmatprep.subr.bf16.mxu0 0
    %3227 = vmatpush1.bf16.msra.mxu0 0
    %3228 = vmatprep.subr.bf16.mxu0 0
    %3229 = vmatpush1.bf16.msra.mxu0 0
    %3230 = vmatprep.subr.bf16.mxu0 0
    %3231 = vmatpush1.bf16.msra.mxu0 0
    %3232 = vmatprep.subr.bf16.mxu0 0
    %3233 = vmatpush1.bf16.msra.mxu0 0
    %3234 = vmatprep.subr.bf16.mxu0 0
    %3235 = vmatpush1.bf16.msra.mxu0 0
    %3236 = vmatprep.subr.bf16.mxu0 0
    %3237 = vmatpush1.bf16.msra.mxu0 0
    %3238 = vmatprep.subr.bf16.mxu0 0
    %3239 = vmatpush1.bf16.msra.mxu0 0
    %3240 = vmatprep.mubr.bf16.mxu0 0
    %3241 = vmatmul.mubr.bf16.gmra.mrb[0].mxu0 %v3203
    %v3242 = vpop.f32.mrb[0].mxu0
    %v3243 = vadd.f32 %v3151, %v3242
    %v3244 = vpop.f32.mrb[0].mxu0
    %v3245 = vpop.f32.mrb[0].mxu0
    %v3246 = vpop.f32.mrb[0].mxu0
    %3247 = vdwg.mxu0
    %v3249 = vsel %vm1207, %v3005, 0
    %v3252 = vsel %vm1339, %v2900, 0
    %3254 = vmatprep.subr.bf16.mxu0 0
    %3255 = vmatpush1.bf16.msra.mxu0 %v3252
    %3256 = vmatprep.subr.bf16.mxu0 0
    %3257 = vmatpush1.bf16.msra.mxu0 0
    %3258 = vmatprep.subr.bf16.mxu0 0
    %3259 = vmatpush1.bf16.msra.mxu0 0
    %3260 = vmatprep.subr.bf16.mxu0 0
    %3261 = vmatpush1.bf16.msra.mxu0 0
    %3262 = vmatprep.subr.bf16.mxu0 0
    %3263 = vmatpush1.bf16.msra.mxu0 0
    %3264 = vmatprep.subr.bf16.mxu0 0
    %3265 = vmatpush1.bf16.msra.mxu0 0
    %3266 = vmatprep.subr.bf16.mxu0 0
    %3267 = vmatpush1.bf16.msra.mxu0 0
    %3268 = vmatprep.subr.bf16.mxu0 0
    %3269 = vmatpush1.bf16.msra.mxu0 0
    %3270 = vmatprep.subr.bf16.mxu0 0
    %3271 = vmatpush1.bf16.msra.mxu0 0
    %3272 = vmatprep.subr.bf16.mxu0 0
    %3273 = vmatpush1.bf16.msra.mxu0 0
    %3274 = vmatprep.subr.bf16.mxu0 0
    %3275 = vmatpush1.bf16.msra.mxu0 0
    %3276 = vmatprep.subr.bf16.mxu0 0
    %3277 = vmatpush1.bf16.msra.mxu0 0
    %3278 = vmatprep.subr.bf16.mxu0 0
    %3279 = vmatpush1.bf16.msra.mxu0 0
    %3280 = vmatprep.subr.bf16.mxu0 0
    %3281 = vmatpush1.bf16.msra.mxu0 0
    %3282 = vmatprep.subr.bf16.mxu0 0
    %3283 = vmatpush1.bf16.msra.mxu0 0
    %3284 = vmatprep.subr.bf16.mxu0 0
    %3285 = vmatpush1.bf16.msra.mxu0 0
    %3286 = vmatprep.mubr.bf16.mxu0 0
    %3287 = vmatmul.mubr.bf16.gmra.mrb[0].mxu0 %v3249
    %v3288 = vpop.f32.mrb[0].mxu0
    %v3289 = vadd.f32 %v3197, %v3288
    %v3290 = vpop.f32.mrb[0].mxu0
    %v3291 = vpop.f32.mrb[0].mxu0
    %v3292 = vpop.f32.mrb[0].mxu0
    %3293 = vdwg.mxu0
    %v3294 = vpack.c.bf16 %v3289, %v3243
    %v3296 = vlaneseq
    %v3297 = vshrl.u32 %v3296, 7
    %v3298 = vsub.s32 0, %v3297
    %v3299 = vrot.slane %v2386, %v3298
    %v3317 = vunpack.c.l.b16 %v2370
    %v3318 = vunpack.c.l.b16 %v2371
    %v3319 = vunpack.c.l.b16 %v2372
    %v3320 = vunpack.c.l.b16 %v2373
    %v3321 = vunpack.c.l.b16 %v2374
    %v3322 = vunpack.c.l.b16 %v2375
    %v3323 = vunpack.c.l.b16 %v2376
    %v3324 = vunpack.c.l.b16 %v2377
    %v3325 = vunpack.c.l.b16 %v2378
    %v3326 = vunpack.c.l.b16 %v2379
    %v3327 = vunpack.c.l.b16 %v2380
    %v3328 = vunpack.c.l.b16 %v2381
    %v3329 = vunpack.c.l.b16 %v2382
    %v3330 = vunpack.c.l.b16 %v2383
    %v3331 = vunpack.c.l.b16 %v2384
    %v3332 = vunpack.c.l.b16 %v2385
    %v3333 = vpack.c.b16 %v3318, %v3317
    %v3334 = vpack.c.b16 %v3320, %v3319
    %v3335 = vpack.c.b16 %v3322, %v3321
    %v3336 = vpack.c.b16 %v3324, %v3323
    %v3337 = vpack.c.b16 %v3326, %v3325
    %v3338 = vpack.c.b16 %v3328, %v3327
    %v3339 = vpack.c.b16 %v3330, %v3329
    %v3340 = vpack.c.b16 %v3332, %v3331
    %3349 = vmatprep.subr.bf16.mxu0 0
    %3350 = vmatpush1.bf16.msra.mxu0 %v3333
    %3351 = vmatprep.subr.bf16.mxu0 0
    %3352 = vmatpush1.bf16.msra.mxu0 %v3334
    %3353 = vmatprep.subr.bf16.mxu0 0
    %3354 = vmatpush1.bf16.msra.mxu0 %v3335
    %3355 = vmatprep.subr.bf16.mxu0 0
    %3356 = vmatpush1.bf16.msra.mxu0 %v3336
    %3357 = vmatprep.subr.bf16.mxu0 0
    %3358 = vmatpush1.bf16.msra.mxu0 %v3337
    %3359 = vmatprep.subr.bf16.mxu0 0
    %3360 = vmatpush1.bf16.msra.mxu0 %v3338
    %3361 = vmatprep.subr.bf16.mxu0 0
    %3362 = vmatpush1.bf16.msra.mxu0 %v3339
    %3363 = vmatprep.subr.bf16.mxu0 0
    %3364 = vmatpush1.bf16.msra.mxu0 %v3340
    %3365 = vmatprep.subr.bf16.mxu0 0
    %3366 = vmatpush1.bf16.msra.mxu0 0
    %3367 = vmatprep.subr.bf16.mxu0 0
    %3368 = vmatpush1.bf16.msra.mxu0 0
    %3369 = vmatprep.subr.bf16.mxu0 0
    %3370 = vmatpush1.bf16.msra.mxu0 0
    %3371 = vmatprep.subr.bf16.mxu0 0
    %3372 = vmatpush1.bf16.msra.mxu0 0
    %3373 = vmatprep.subr.bf16.mxu0 0
    %3374 = vmatpush1.bf16.msra.mxu0 0
    %3375 = vmatprep.subr.bf16.mxu0 0
    %3376 = vmatpush1.bf16.msra.mxu0 0
    %3377 = vmatprep.subr.bf16.mxu0 0
    %3378 = vmatpush1.bf16.msra.mxu0 0
    %3379 = vmatprep.subr.bf16.mxu0 0
    %3380 = vmatpush1.bf16.msra.mxu0 0
    %3381 = vmatprep.mubr.bf16.mxu0 0
    %3382 = vmatmul.mubr.bf16.gmra.mrb[0].mxu0 %v3294
    %v3383 = vpop.f32.mrb[0].mxu0
    %v3384 = vadd.f32 %v3299, %v3383
    %v3385 = vpop.f32.mrb[0].mxu0
    %v3386 = vpop.f32.mrb[0].mxu0
    %v3387 = vadd.f32 %v3299, %v3386
    %v3388 = vpop.f32.mrb[0].mxu0
    %3389 = vdwg.mxu0
    %v3390 = vadd.f32 %v3384, %v2319
    %v3391 = vadd.f32 %v3387, %v2320
    %3392 = vadd.xlane.f32.xlu0 %v3390
    %v3393 = vpop.xlane.xlu0 %3392
    %3394 = vadd.xlane.f32.xlu0 %v3391
    %v3395 = vpop.xlane.xlu0 %3394
    %v3396 = vmul.f32 %v3393, %v511
    %v3397 = vmul.f32 %v3395, %v511
    %v3398 = vsub.f32 %v3390, %v3396
    %v3399 = vsub.f32 %v3391, %v3397
    %v3400 = vmul.f32 %v3398, %v3398
    %v3401 = vmul.f32 %v3399, %v3399
    %3402 = vadd.xlane.f32.xlu0 %v3400
    %v3403 = vpop.xlane.xlu0 %3402
    %3404 = vadd.xlane.f32.xlu0 %v3401
    %v3405 = vpop.xlane.xlu0 %3404
    %v3406 = vmul.f32 %v3403, %v511
    %v3407 = vmul.f32 %v3405, %v511
    %v3408 = vadd.f32 %v3406, 1e-12
    %v3409 = vadd.f32 %v3407, 1e-12
    %v3410 = vrsqrt.pop %v3408
    %v3411 = vrsqrt.pop %v3409
    %v3412 = vmul.f32 %v3398, %v3410
    %v3413 = vmul.f32 %v3399, %v3411
    %v3415 = vlaneseq
    %v3416 = vshrl.u32 %v3415, 7
    %v3417 = vsub.s32 0, %v3416
    %v3418 = vrot.slane %v2387, %v3417
    %v3420 = vmul.f32 %v3412, %v3418
    %v3421 = vmul.f32 %v3413, %v3418
    %v3423 = vlaneseq
    %v3424 = vshrl.u32 %v3423, 7
    %v3425 = vsub.s32 0, %v3424
    %v3426 = vrot.slane %v2388, %v3425
    %v3428 = vadd.f32 %v3420, %v3426
    %v3429 = vadd.f32 %v3421, %v3426
    %v3430 = vpack.c.bf16 %v3429, %v3428
    %v3432 = vlaneseq
    %v3433 = vshrl.u32 %v3432, 7
    %v3434 = vsub.s32 0, %v3433
    %v3435 = vrot.slane %v2421, %v3434
    %v3436 = vlaneseq
    %v3437 = vshrl.u32 %v3436, 7
    %v3438 = vsub.s32 1, %v3437
    %v3439 = vrot.slane %v2421, %v3438
    %v3440 = vlaneseq
    %v3441 = vshrl.u32 %v3440, 7
    %v3442 = vsub.s32 2, %v3441
    %v3443 = vrot.slane %v2421, %v3442
    %v3444 = vlaneseq
    %v3445 = vshrl.u32 %v3444, 7
    %v3446 = vsub.s32 3, %v3445
    %v3447 = vrot.slane %v2421, %v3446
    %v3484 = vunpack.c.l.b16 %v2389
    %v3485 = vunpack.c.h.b16 %v2389
    %v3486 = vunpack.c.l.b16 %v2390
    %v3487 = vunpack.c.h.b16 %v2390
    %v3488 = vunpack.c.l.b16 %v2391
    %v3489 = vunpack.c.h.b16 %v2391
    %v3490 = vunpack.c.l.b16 %v2392
    %v3491 = vunpack.c.h.b16 %v2392
    %v3492 = vunpack.c.l.b16 %v2393
    %v3493 = vunpack.c.h.b16 %v2393
    %v3494 = vunpack.c.l.b16 %v2394
    %v3495 = vunpack.c.h.b16 %v2394
    %v3496 = vunpack.c.l.b16 %v2395
    %v3497 = vunpack.c.h.b16 %v2395
    %v3498 = vunpack.c.l.b16 %v2396
    %v3499 = vunpack.c.h.b16 %v2396
    %v3500 = vunpack.c.l.b16 %v2397
    %v3501 = vunpack.c.h.b16 %v2397
    %v3502 = vunpack.c.l.b16 %v2398
    %v3503 = vunpack.c.h.b16 %v2398
    %v3504 = vunpack.c.l.b16 %v2399
    %v3505 = vunpack.c.h.b16 %v2399
    %v3506 = vunpack.c.l.b16 %v2400
    %v3507 = vunpack.c.h.b16 %v2400
    %v3508 = vunpack.c.l.b16 %v2401
    %v3509 = vunpack.c.h.b16 %v2401
    %v3510 = vunpack.c.l.b16 %v2402
    %v3511 = vunpack.c.h.b16 %v2402
    %v3512 = vunpack.c.l.b16 %v2403
    %v3513 = vunpack.c.h.b16 %v2403
    %v3514 = vunpack.c.l.b16 %v2404
    %v3515 = vunpack.c.h.b16 %v2404
    %v3516 = vunpack.c.l.b16 %v2405
    %v3517 = vunpack.c.h.b16 %v2405
    %v3518 = vunpack.c.l.b16 %v2406
    %v3519 = vunpack.c.h.b16 %v2406
    %v3520 = vunpack.c.l.b16 %v2407
    %v3521 = vunpack.c.h.b16 %v2407
    %v3522 = vunpack.c.l.b16 %v2408
    %v3523 = vunpack.c.h.b16 %v2408
    %v3524 = vunpack.c.l.b16 %v2409
    %v3525 = vunpack.c.h.b16 %v2409
    %v3526 = vunpack.c.l.b16 %v2410
    %v3527 = vunpack.c.h.b16 %v2410
    %v3528 = vunpack.c.l.b16 %v2411
    %v3529 = vunpack.c.h.b16 %v2411
    %v3530 = vunpack.c.l.b16 %v2412
    %v3531 = vunpack.c.h.b16 %v2412
    %v3532 = vunpack.c.l.b16 %v2413
    %v3533 = vunpack.c.h.b16 %v2413
    %v3534 = vunpack.c.l.b16 %v2414
    %v3535 = vunpack.c.h.b16 %v2414
    %v3536 = vunpack.c.l.b16 %v2415
    %v3537 = vunpack.c.h.b16 %v2415
    %v3538 = vunpack.c.l.b16 %v2416
    %v3539 = vunpack.c.h.b16 %v2416
    %v3540 = vunpack.c.l.b16 %v2417
    %v3541 = vunpack.c.h.b16 %v2417
    %v3542 = vunpack.c.l.b16 %v2418
    %v3543 = vunpack.c.h.b16 %v2418
    %v3544 = vunpack.c.l.b16 %v2419
    %v3545 = vunpack.c.h.b16 %v2419
    %v3546 = vunpack.c.l.b16 %v2420
    %v3547 = vunpack.c.h.b16 %v2420
    %v3548 = vpack.c.b16 %v3488, %v3484
    %v3549 = vpack.c.b16 %v3489, %v3485
    %v3550 = vpack.c.b16 %v3490, %v3486
    %v3551 = vpack.c.b16 %v3491, %v3487
    %v3552 = vpack.c.b16 %v3496, %v3492
    %v3553 = vpack.c.b16 %v3497, %v3493
    %v3554 = vpack.c.b16 %v3498, %v3494
    %v3555 = vpack.c.b16 %v3499, %v3495
    %v3556 = vpack.c.b16 %v3504, %v3500
    %v3557 = vpack.c.b16 %v3505, %v3501
    %v3558 = vpack.c.b16 %v3506, %v3502
    %v3559 = vpack.c.b16 %v3507, %v3503
    %v3560 = vpack.c.b16 %v3512, %v3508
    %v3561 = vpack.c.b16 %v3513, %v3509
    %v3562 = vpack.c.b16 %v3514, %v3510
    %v3563 = vpack.c.b16 %v3515, %v3511
    %v3564 = vpack.c.b16 %v3520, %v3516
    %v3565 = vpack.c.b16 %v3521, %v3517
    %v3566 = vpack.c.b16 %v3522, %v3518
    %v3567 = vpack.c.b16 %v3523, %v3519
    %v3568 = vpack.c.b16 %v3528, %v3524
    %v3569 = vpack.c.b16 %v3529, %v3525
    %v3570 = vpack.c.b16 %v3530, %v3526
    %v3571 = vpack.c.b16 %v3531, %v3527
    %v3572 = vpack.c.b16 %v3536, %v3532
    %v3573 = vpack.c.b16 %v3537, %v3533
    %v3574 = vpack.c.b16 %v3538, %v3534
    %v3575 = vpack.c.b16 %v3539, %v3535
    %v3576 = vpack.c.b16 %v3544, %v3540
    %v3577 = vpack.c.b16 %v3545, %v3541
    %v3578 = vpack.c.b16 %v3546, %v3542
    %v3579 = vpack.c.b16 %v3547, %v3543
    %3612 = vmatprep.subr.bf16.mxu0 %v3549
    %3613 = vmatpush1.bf16.msra.mxu0 %v3548
    %3614 = vmatprep.subr.bf16.mxu0 %v3553
    %3615 = vmatpush1.bf16.msra.mxu0 %v3552
    %3616 = vmatprep.subr.bf16.mxu0 %v3557
    %3617 = vmatpush1.bf16.msra.mxu0 %v3556
    %3618 = vmatprep.subr.bf16.mxu0 %v3561
    %3619 = vmatpush1.bf16.msra.mxu0 %v3560
    %3620 = vmatprep.subr.bf16.mxu0 %v3565
    %3621 = vmatpush1.bf16.msra.mxu0 %v3564
    %3622 = vmatprep.subr.bf16.mxu0 %v3569
    %3623 = vmatpush1.bf16.msra.mxu0 %v3568
    %3624 = vmatprep.subr.bf16.mxu0 %v3573
    %3625 = vmatpush1.bf16.msra.mxu0 %v3572
    %3626 = vmatprep.subr.bf16.mxu0 %v3577
    %3627 = vmatpush1.bf16.msra.mxu0 %v3576
    %3628 = vmatprep.subr.bf16.mxu0 0
    %3629 = vmatpush1.bf16.msra.mxu0 0
    %3630 = vmatprep.subr.bf16.mxu0 0
    %3631 = vmatpush1.bf16.msra.mxu0 0
    %3632 = vmatprep.subr.bf16.mxu0 0
    %3633 = vmatpush1.bf16.msra.mxu0 0
    %3634 = vmatprep.subr.bf16.mxu0 0
    %3635 = vmatpush1.bf16.msra.mxu0 0
    %3636 = vmatprep.subr.bf16.mxu0 0
    %3637 = vmatpush1.bf16.msra.mxu0 0
    %3638 = vmatprep.subr.bf16.mxu0 0
    %3639 = vmatpush1.bf16.msra.mxu0 0
    %3640 = vmatprep.subr.bf16.mxu0 0
    %3641 = vmatpush1.bf16.msra.mxu0 0
    %3642 = vmatprep.subr.bf16.mxu0 0
    %3643 = vmatpush1.bf16.msra.mxu0 0
    %3644 = vmatprep.mubr.bf16.mxu0 0
    %3645 = vmatmul.mubr.bf16.gmra.mrb[0].mxu0 %v3430
    %v3646 = vpop.f32.mrb[0].mxu0
    %v3647 = vadd.f32 %v3435, %v3646
    %v3648 = vpop.f32.mrb[0].mxu0
    %v3649 = vadd.f32 %v3439, %v3648
    %v3650 = vpop.f32.mrb[0].mxu0
    %v3651 = vadd.f32 %v3435, %v3650
    %v3652 = vpop.f32.mrb[0].mxu0
    %v3653 = vadd.f32 %v3439, %v3652
    %3654 = vdwg.mxu0
    %3655 = vmatprep.subr.bf16.mxu0 %v3551
    %3656 = vmatpush1.bf16.msra.mxu0 %v3550
    %3657 = vmatprep.subr.bf16.mxu0 %v3555
    %3658 = vmatpush1.bf16.msra.mxu0 %v3554
    %3659 = vmatprep.subr.bf16.mxu0 %v3559
    %3660 = vmatpush1.bf16.msra.mxu0 %v3558
    %3661 = vmatprep.subr.bf16.mxu0 %v3563
    %3662 = vmatpush1.bf16.msra.mxu0 %v3562
    %3663 = vmatprep.subr.bf16.mxu0 %v3567
    %3664 = vmatpush1.bf16.msra.mxu0 %v3566
    %3665 = vmatprep.subr.bf16.mxu0 %v3571
    %3666 = vmatpush1.bf16.msra.mxu0 %v3570
    %3667 = vmatprep.subr.bf16.mxu0 %v3575
    %3668 = vmatpush1.bf16.msra.mxu0 %v3574
    %3669 = vmatprep.subr.bf16.mxu0 %v3579
    %3670 = vmatpush1.bf16.msra.mxu0 %v3578
    %3671 = vmatprep.subr.bf16.mxu0 0
    %3672 = vmatpush1.bf16.msra.mxu0 0
    %3673 = vmatprep.subr.bf16.mxu0 0
    %3674 = vmatpush1.bf16.msra.mxu0 0
    %3675 = vmatprep.subr.bf16.mxu0 0
    %3676 = vmatpush1.bf16.msra.mxu0 0
    %3677 = vmatprep.subr.bf16.mxu0 0
    %3678 = vmatpush1.bf16.msra.mxu0 0
    %3679 = vmatprep.subr.bf16.mxu0 0
    %3680 = vmatpush1.bf16.msra.mxu0 0
    %3681 = vmatprep.subr.bf16.mxu0 0
    %3682 = vmatpush1.bf16.msra.mxu0 0
    %3683 = vmatprep.subr.bf16.mxu0 0
    %3684 = vmatpush1.bf16.msra.mxu0 0
    %3685 = vmatprep.subr.bf16.mxu0 0
    %3686 = vmatpush1.bf16.msra.mxu0 0
    %3687 = vmatprep.mubr.bf16.mxu0 0
    %3688 = vmatmul.mubr.bf16.gmra.mrb[0].mxu0 %v3430
    %v3689 = vpop.f32.mrb[0].mxu0
    %v3690 = vadd.f32 %v3443, %v3689
    %v3691 = vpop.f32.mrb[0].mxu0
    %v3692 = vadd.f32 %v3447, %v3691
    %v3693 = vpop.f32.mrb[0].mxu0
    %v3694 = vadd.f32 %v3443, %v3693
    %v3695 = vpop.f32.mrb[0].mxu0
    %v3696 = vadd.f32 %v3447, %v3695
    %3697 = vdwg.mxu0
    %v3698 = vmul.f32 %v3647, 0.5
    %v3699 = vmul.f32 %v3649, 0.5
    %v3700 = vmul.f32 %v3690, 0.5
    %v3701 = vmul.f32 %v3692, 0.5
    %v3702 = vmul.f32 %v3651, 0.5
    %v3703 = vmul.f32 %v3653, 0.5
    %v3704 = vmul.f32 %v3694, 0.5
    %v3705 = vmul.f32 %v3696, 0.5
    %v3706 = vmul.f32 %v3647, 0.044715
    %v3707 = vmul.f32 %v3649, 0.044715
    %v3708 = vmul.f32 %v3690, 0.044715
    %v3709 = vmul.f32 %v3692, 0.044715
    %v3710 = vmul.f32 %v3651, 0.044715
    %v3711 = vmul.f32 %v3653, 0.044715
    %v3712 = vmul.f32 %v3694, 0.044715
    %v3713 = vmul.f32 %v3696, 0.044715
    %v3714 = vmul.f32 %v3706, %v3647
    %v3715 = vmul.f32 %v3707, %v3649
    %v3716 = vmul.f32 %v3708, %v3690
    %v3717 = vmul.f32 %v3709, %v3692
    %v3718 = vmul.f32 %v3710, %v3651
    %v3719 = vmul.f32 %v3711, %v3653
    %v3720 = vmul.f32 %v3712, %v3694
    %v3721 = vmul.f32 %v3713, %v3696
    %v3722 = vmul.f32 %v3714, %v3647
    %v3723 = vmul.f32 %v3715, %v3649
    %v3724 = vmul.f32 %v3716, %v3690
    %v3725 = vmul.f32 %v3717, %v3692
    %v3726 = vmul.f32 %v3718, %v3651
    %v3727 = vmul.f32 %v3719, %v3653
    %v3728 = vmul.f32 %v3720, %v3694
    %v3729 = vmul.f32 %v3721, %v3696
    %v3730 = vadd.f32 %v3647, %v3722
    %v3731 = vadd.f32 %v3649, %v3723
    %v3732 = vadd.f32 %v3690, %v3724
    %v3733 = vadd.f32 %v3692, %v3725
    %v3734 = vadd.f32 %v3651, %v3726
    %v3735 = vadd.f32 %v3653, %v3727
    %v3736 = vadd.f32 %v3694, %v3728
    %v3737 = vadd.f32 %v3696, %v3729
    %v3738 = vmul.f32 %v3730, 0.7978846
    %v3739 = vmul.f32 %v3731, 0.7978846
    %v3740 = vmul.f32 %v3732, 0.7978846
    %v3741 = vmul.f32 %v3733, 0.7978846
    %v3742 = vmul.f32 %v3734, 0.7978846
    %v3743 = vmul.f32 %v3735, 0.7978846
    %v3744 = vmul.f32 %v3736, 0.7978846
    %v3745 = vmul.f32 %v3737, 0.7978846
    %v3746 = vtanh.pop %v3738
    %v3747 = vtanh.pop %v3739
    %v3748 = vtanh.pop %v3740
    %v3749 = vtanh.pop %v3741
    %v3750 = vtanh.pop %v3742
    %v3751 = vtanh.pop %v3743
    %v3752 = vtanh.pop %v3744
    %v3753 = vtanh.pop %v3745
    %v3754 = vadd.f32 %v3746, 1.0
    %v3755 = vadd.f32 %v3747, 1.0
    %v3756 = vadd.f32 %v3748, 1.0
    %v3757 = vadd.f32 %v3749, 1.0
    %v3758 = vadd.f32 %v3750, 1.0
    %v3759 = vadd.f32 %v3751, 1.0
    %v3760 = vadd.f32 %v3752, 1.0
    %v3761 = vadd.f32 %v3753, 1.0
    %v3762 = vmul.f32 %v3698, %v3754
    %v3763 = vmul.f32 %v3699, %v3755
    %v3764 = vmul.f32 %v3700, %v3756
    %v3765 = vmul.f32 %v3701, %v3757
    %v3766 = vmul.f32 %v3702, %v3758
    %v3767 = vmul.f32 %v3703, %v3759
    %v3768 = vmul.f32 %v3704, %v3760
    %v3769 = vmul.f32 %v3705, %v3761
    %v3770 = vpack.c.bf16 %v3766, %v3762
    %v3771 = vpack.c.bf16 %v3767, %v3763
    %v3772 = vpack.c.bf16 %v3768, %v3764
    %v3773 = vpack.c.bf16 %v3769, %v3765
    %v3775 = vlaneseq
    %v3776 = vshrl.u32 %v3775, 7
    %v3777 = vsub.s32 0, %v3776
    %v3778 = vrot.slane %v2486, %v3777
    %v3844 = vunpack.c.l.b16 %v2422
    %v3845 = vunpack.c.l.b16 %v2423
    %v3846 = vunpack.c.l.b16 %v2424
    %v3847 = vunpack.c.l.b16 %v2425
    %v3848 = vunpack.c.l.b16 %v2426
    %v3849 = vunpack.c.l.b16 %v2427
    %v3850 = vunpack.c.l.b16 %v2428
    %v3851 = vunpack.c.l.b16 %v2429
    %v3852 = vunpack.c.l.b16 %v2430
    %v3853 = vunpack.c.l.b16 %v2431
    %v3854 = vunpack.c.l.b16 %v2432
    %v3855 = vunpack.c.l.b16 %v2433
    %v3856 = vunpack.c.l.b16 %v2434
    %v3857 = vunpack.c.l.b16 %v2435
    %v3858 = vunpack.c.l.b16 %v2436
    %v3859 = vunpack.c.l.b16 %v2437
    %v3860 = vunpack.c.l.b16 %v2438
    %v3861 = vunpack.c.l.b16 %v2439
    %v3862 = vunpack.c.l.b16 %v2440
    %v3863 = vunpack.c.l.b16 %v2441
    %v3864 = vunpack.c.l.b16 %v2442
    %v3865 = vunpack.c.l.b16 %v2443
    %v3866 = vunpack.c.l.b16 %v2444
    %v3867 = vunpack.c.l.b16 %v2445
    %v3868 = vunpack.c.l.b16 %v2446
    %v3869 = vunpack.c.l.b16 %v2447
    %v3870 = vunpack.c.l.b16 %v2448
    %v3871 = vunpack.c.l.b16 %v2449
    %v3872 = vunpack.c.l.b16 %v2450
    %v3873 = vunpack.c.l.b16 %v2451
    %v3874 = vunpack.c.l.b16 %v2452
    %v3875 = vunpack.c.l.b16 %v2453
    %v3876 = vunpack.c.l.b16 %v2454
    %v3877 = vunpack.c.l.b16 %v2455
    %v3878 = vunpack.c.l.b16 %v2456
    %v3879 = vunpack.c.l.b16 %v2457
    %v3880 = vunpack.c.l.b16 %v2458
    %v3881 = vunpack.c.l.b16 %v2459
    %v3882 = vunpack.c.l.b16 %v2460
    %v3883 = vunpack.c.l.b16 %v2461
    %v3884 = vunpack.c.l.b16 %v2462
    %v3885 = vunpack.c.l.b16 %v2463
    %v3886 = vunpack.c.l.b16 %v2464
    %v3887 = vunpack.c.l.b16 %v2465
    %v3888 = vunpack.c.l.b16 %v2466
    %v3889 = vunpack.c.l.b16 %v2467
    %v3890 = vunpack.c.l.b16 %v2468
    %v3891 = vunpack.c.l.b16 %v2469
    %v3892 = vunpack.c.l.b16 %v2470
    %v3893 = vunpack.c.l.b16 %v2471
    %v3894 = vunpack.c.l.b16 %v2472
    %v3895 = vunpack.c.l.b16 %v2473
    %v3896 = vunpack.c.l.b16 %v2474
    %v3897 = vunpack.c.l.b16 %v2475
    %v3898 = vunpack.c.l.b16 %v2476
    %v3899 = vunpack.c.l.b16 %v2477
    %v3900 = vunpack.c.l.b16 %v2478
    %v3901 = vunpack.c.l.b16 %v2479
    %v3902 = vunpack.c.l.b16 %v2480
    %v3903 = vunpack.c.l.b16 %v2481
    %v3904 = vunpack.c.l.b16 %v2482
    %v3905 = vunpack.c.l.b16 %v2483
    %v3906 = vunpack.c.l.b16 %v2484
    %v3907 = vunpack.c.l.b16 %v2485
    %v3908 = vpack.c.b16 %v3845, %v3844
    %v3909 = vpack.c.b16 %v3847, %v3846
    %v3910 = vpack.c.b16 %v3849, %v3848
    %v3911 = vpack.c.b16 %v3851, %v3850
    %v3912 = vpack.c.b16 %v3853, %v3852
    %v3913 = vpack.c.b16 %v3855, %v3854
    %v3914 = vpack.c.b16 %v3857, %v3856
    %v3915 = vpack.c.b16 %v3859, %v3858
    %v3916 = vpack.c.b16 %v3861, %v3860
    %v3917 = vpack.c.b16 %v3863, %v3862
    %v3918 = vpack.c.b16 %v3865, %v3864
    %v3919 = vpack.c.b16 %v3867, %v3866
    %v3920 = vpack.c.b16 %v3869, %v3868
    %v3921 = vpack.c.b16 %v3871, %v3870
    %v3922 = vpack.c.b16 %v3873, %v3872
    %v3923 = vpack.c.b16 %v3875, %v3874
    %v3924 = vpack.c.b16 %v3877, %v3876
    %v3925 = vpack.c.b16 %v3879, %v3878
    %v3926 = vpack.c.b16 %v3881, %v3880
    %v3927 = vpack.c.b16 %v3883, %v3882
    %v3928 = vpack.c.b16 %v3885, %v3884
    %v3929 = vpack.c.b16 %v3887, %v3886
    %v3930 = vpack.c.b16 %v3889, %v3888
    %v3931 = vpack.c.b16 %v3891, %v3890
    %v3932 = vpack.c.b16 %v3893, %v3892
    %v3933 = vpack.c.b16 %v3895, %v3894
    %v3934 = vpack.c.b16 %v3897, %v3896
    %v3935 = vpack.c.b16 %v3899, %v3898
    %v3936 = vpack.c.b16 %v3901, %v3900
    %v3937 = vpack.c.b16 %v3903, %v3902
    %v3938 = vpack.c.b16 %v3905, %v3904
    %v3939 = vpack.c.b16 %v3907, %v3906
    %3972 = vmatprep.subr.bf16.mxu0 0
    %3973 = vmatpush1.bf16.msra.mxu0 %v3908
    %3974 = vmatprep.subr.bf16.mxu0 0
    %3975 = vmatpush1.bf16.msra.mxu0 %v3909
    %3976 = vmatprep.subr.bf16.mxu0 0
    %3977 = vmatpush1.bf16.msra.mxu0 %v3910
    %3978 = vmatprep.subr.bf16.mxu0 0
    %3979 = vmatpush1.bf16.msra.mxu0 %v3911
    %3980 = vmatprep.subr.bf16.mxu0 0
    %3981 = vmatpush1.bf16.msra.mxu0 %v3912
    %3982 = vmatprep.subr.bf16.mxu0 0
    %3983 = vmatpush1.bf16.msra.mxu0 %v3913
    %3984 = vmatprep.subr.bf16.mxu0 0
    %3985 = vmatpush1.bf16.msra.mxu0 %v3914
    %3986 = vmatprep.subr.bf16.mxu0 0
    %3987 = vmatpush1.bf16.msra.mxu0 %v3915
    %3988 = vmatprep.subr.bf16.mxu0 0
    %3989 = vmatpush1.bf16.msra.mxu0 %v3916
    %3990 = vmatprep.subr.bf16.mxu0 0
    %3991 = vmatpush1.bf16.msra.mxu0 %v3917
    %3992 = vmatprep.subr.bf16.mxu0 0
    %3993 = vmatpush1.bf16.msra.mxu0 %v3918
    %3994 = vmatprep.subr.bf16.mxu0 0
    %3995 = vmatpush1.bf16.msra.mxu0 %v3919
    %3996 = vmatprep.subr.bf16.mxu0 0
    %3997 = vmatpush1.bf16.msra.mxu0 %v3920
    %3998 = vmatprep.subr.bf16.mxu0 0
    %3999 = vmatpush1.bf16.msra.mxu0 %v3921
    %4000 = vmatprep.subr.bf16.mxu0 0
    %4001 = vmatpush1.bf16.msra.mxu0 %v3922
    %4002 = vmatprep.subr.bf16.mxu0 0
    %4003 = vmatpush1.bf16.msra.mxu0 %v3923
    %4004 = vmatprep.mubr.bf16.mxu0 %v3771
    %4005 = vmatmul.mubr.bf16.gmra.mrb[0].mxu0 %v3770
    %v4006 = vpop.f32.mrb[0].mxu0
    %v4007 = vadd.f32 %v3778, %v4006
    %v4008 = vpop.f32.mrb[0].mxu0
    %v4009 = vpop.f32.mrb[0].mxu0
    %v4010 = vadd.f32 %v3778, %v4009
    %v4011 = vpop.f32.mrb[0].mxu0
    %4012 = vdwg.mxu0
    %4013 = vmatprep.subr.bf16.mxu0 0
    %4014 = vmatpush1.bf16.msra.mxu0 %v3924
    %4015 = vmatprep.subr.bf16.mxu0 0
    %4016 = vmatpush1.bf16.msra.mxu0 %v3925
    %4017 = vmatprep.subr.bf16.mxu0 0
    %4018 = vmatpush1.bf16.msra.mxu0 %v3926
    %4019 = vmatprep.subr.bf16.mxu0 0
    %4020 = vmatpush1.bf16.msra.mxu0 %v3927
    %4021 = vmatprep.subr.bf16.mxu0 0
    %4022 = vmatpush1.bf16.msra.mxu0 %v3928
    %4023 = vmatprep.subr.bf16.mxu0 0
    %4024 = vmatpush1.bf16.msra.mxu0 %v3929
    %4025 = vmatprep.subr.bf16.mxu0 0
    %4026 = vmatpush1.bf16.msra.mxu0 %v3930
    %4027 = vmatprep.subr.bf16.mxu0 0
    %4028 = vmatpush1.bf16.msra.mxu0 %v3931
    %4029 = vmatprep.subr.bf16.mxu0 0
    %4030 = vmatpush1.bf16.msra.mxu0 %v3932
    %4031 = vmatprep.subr.bf16.mxu0 0
    %4032 = vmatpush1.bf16.msra.mxu0 %v3933
    %4033 = vmatprep.subr.bf16.mxu0 0
    %4034 = vmatpush1.bf16.msra.mxu0 %v3934
    %4035 = vmatprep.subr.bf16.mxu0 0
    %4036 = vmatpush1.bf16.msra.mxu0 %v3935
    %4037 = vmatprep.subr.bf16.mxu0 0
    %4038 = vmatpush1.bf16.msra.mxu0 %v3936
    %4039 = vmatprep.subr.bf16.mxu0 0
    %4040 = vmatpush1.bf16.msra.mxu0 %v3937
    %4041 = vmatprep.subr.bf16.mxu0 0
    %4042 = vmatpush1.bf16.msra.mxu0 %v3938
    %4043 = vmatprep.subr.bf16.mxu0 0
    %4044 = vmatpush1.bf16.msra.mxu0 %v3939
    %4045 = vmatprep.mubr.bf16.mxu0 %v3773
    %4046 = vmatmul.mubr.bf16.gmra.mrb[0].mxu0 %v3772
    %v4047 = vpop.f32.mrb[0].mxu0
    %v4048 = vadd.f32 %v4007, %v4047
    %v4049 = vpop.f32.mrb[0].mxu0
    %v4050 = vpop.f32.mrb[0].mxu0
    %v4051 = vadd.f32 %v4010, %v4050
    %v4052 = vpop.f32.mrb[0].mxu0
    %4053 = vdwg.mxu0
    %v4054 = vadd.f32 %v4048, %v3428
    %v4055 = vadd.f32 %v4051, %v3429
    %4056 = vadd.xlane.f32.xlu0 %v4054
    %v4057 = vpop.xlane.xlu0 %4056
    %4058 = vadd.xlane.f32.xlu0 %v4055
    %v4059 = vpop.xlane.xlu0 %4058
    %v4060 = vmul.f32 %v4057, %v511
    %v4061 = vmul.f32 %v4059, %v511
    %v4062 = vsub.f32 %v4054, %v4060
    %v4063 = vsub.f32 %v4055, %v4061
    %v4064 = vmul.f32 %v4062, %v4062
    %v4065 = vmul.f32 %v4063, %v4063
    %4066 = vadd.xlane.f32.xlu0 %v4064
    %v4067 = vpop.xlane.xlu0 %4066
    %4068 = vadd.xlane.f32.xlu0 %v4065
    %v4069 = vpop.xlane.xlu0 %4068
    %v4070 = vmul.f32 %v4067, %v511
    %v4071 = vmul.f32 %v4069, %v511
    %v4072 = vadd.f32 %v4070, 1e-12
    %v4073 = vadd.f32 %v4071, 1e-12
    %v4074 = vrsqrt.pop %v4072
    %v4075 = vrsqrt.pop %v4073
    %v4076 = vmul.f32 %v4062, %v4074
    %v4077 = vmul.f32 %v4063, %v4075
    %v4079 = vlaneseq
    %v4080 = vshrl.u32 %v4079, 7
    %v4081 = vsub.s32 0, %v4080
    %v4082 = vrot.slane %v2487, %v4081
    %v4084 = vmul.f32 %v4076, %v4082
    %v4085 = vmul.f32 %v4077, %v4082
    %v4087 = vlaneseq
    %v4088 = vshrl.u32 %v4087, 7
    %v4089 = vsub.s32 0, %v4088
    %v4090 = vrot.slane %v2488, %v4089
    %v4092 = vadd.f32 %v4084, %v4090
    %v4093 = vadd.f32 %v4085, %v4090
    %v4094 = vld [vmem:[#allocation43] sm:$0xf]
    %v4095 = vld [vmem:[#allocation43 + $0x4] sm:$0xf]
    %v4096 = vld [vmem:[#allocation43 + $0x8] sm:$0xf]
    %v4097 = vld [vmem:[#allocation43 + $0xc] sm:$0xf]
    %v4098 = vld [vmem:[#allocation43 + $0x10] sm:$0xf]
    %v4099 = vld [vmem:[#allocation43 + $0x14] sm:$0xf]
    %v4100 = vld [vmem:[#allocation43 + $0x18] sm:$0xf]
    %v4101 = vld [vmem:[#allocation43 + $0x1c] sm:$0xf]
    %v4102 = vld [vmem:[#allocation43 + $0x20] sm:$0xf]
    %v4103 = vld [vmem:[#allocation43 + $0x24] sm:$0xf]
    %v4104 = vld [vmem:[#allocation43 + $0x28] sm:$0xf]
    %v4105 = vld [vmem:[#allocation43 + $0x2c] sm:$0xf]
    %v4106 = vld [vmem:[#allocation43 + $0x30] sm:$0xf]
    %v4107 = vld [vmem:[#allocation43 + $0x34] sm:$0xf]
    %v4108 = vld [vmem:[#allocation43 + $0x38] sm:$0xf]
    %v4109 = vld [vmem:[#allocation43 + $0x3c] sm:$0xf]
    %v4110 = vld [vmem:[#allocation44] sm:$0x1]
    %v4111 = vpack.c.bf16 %v4092, %v4092
    %v4112 = vpack.c.bf16 %v4093, %v4093
    %v4114 = vlaneseq
    %v4115 = vshrl.u32 %v4114, 7
    %v4116 = vsub.s32 0, %v4115
    %v4117 = vrot.slane %v4110, %v4116
    %v4121 = vunpack.c.l.b16 %v4111
    %v4122 = vunpack.c.l.b16 %v4112
    %v4123 = vrot.slane %v4122, 7
    %vm4124 = vcmask 1041409
    %v4125 = vsel %vm4124, %v4123, %v4121
    %v4126 = vpack.c.b16 %v4125, %v4125
    %v4144 = vunpack.c.l.b16 %v4094
    %v4145 = vunpack.c.l.b16 %v4095
    %v4146 = vunpack.c.l.b16 %v4096
    %v4147 = vunpack.c.l.b16 %v4097
    %v4148 = vunpack.c.l.b16 %v4098
    %v4149 = vunpack.c.l.b16 %v4099
    %v4150 = vunpack.c.l.b16 %v4100
    %v4151 = vunpack.c.l.b16 %v4101
    %v4152 = vunpack.c.l.b16 %v4102
    %v4153 = vunpack.c.l.b16 %v4103
    %v4154 = vunpack.c.l.b16 %v4104
    %v4155 = vunpack.c.l.b16 %v4105
    %v4156 = vunpack.c.l.b16 %v4106
    %v4157 = vunpack.c.l.b16 %v4107
    %v4158 = vunpack.c.l.b16 %v4108
    %v4159 = vunpack.c.l.b16 %v4109
    %v4160 = vpack.c.b16 %v4145, %v4144
    %v4161 = vpack.c.b16 %v4147, %v4146
    %v4162 = vpack.c.b16 %v4149, %v4148
    %v4163 = vpack.c.b16 %v4151, %v4150
    %v4164 = vpack.c.b16 %v4153, %v4152
    %v4165 = vpack.c.b16 %v4155, %v4154
    %v4166 = vpack.c.b16 %v4157, %v4156
    %v4167 = vpack.c.b16 %v4159, %v4158
    %4176 = vmatprep.subr.bf16.mxu0 0
    %4177 = vmatpush1.bf16.msra.mxu0 %v4160
    %4178 = vmatprep.subr.bf16.mxu0 0
    %4179 = vmatpush1.bf16.msra.mxu0 %v4161
    %4180 = vmatprep.subr.bf16.mxu0 0
    %4181 = vmatpush1.bf16.msra.mxu0 %v4162
    %4182 = vmatprep.subr.bf16.mxu0 0
    %4183 = vmatpush1.bf16.msra.mxu0 %v4163
    %4184 = vmatprep.subr.bf16.mxu0 0
    %4185 = vmatpush1.bf16.msra.mxu0 %v4164
    %4186 = vmatprep.subr.bf16.mxu0 0
    %4187 = vmatpush1.bf16.msra.mxu0 %v4165
    %4188 = vmatprep.subr.bf16.mxu0 0
    %4189 = vmatpush1.bf16.msra.mxu0 %v4166
    %4190 = vmatprep.subr.bf16.mxu0 0
    %4191 = vmatpush1.bf16.msra.mxu0 %v4167
    %4192 = vmatprep.subr.bf16.mxu0 0
    %4193 = vmatpush1.bf16.msra.mxu0 0
    %4194 = vmatprep.subr.bf16.mxu0 0
    %4195 = vmatpush1.bf16.msra.mxu0 0
    %4196 = vmatprep.subr.bf16.mxu0 0
    %4197 = vmatpush1.bf16.msra.mxu0 0
    %4198 = vmatprep.subr.bf16.mxu0 0
    %4199 = vmatpush1.bf16.msra.mxu0 0
    %4200 = vmatprep.subr.bf16.mxu0 0
    %4201 = vmatpush1.bf16.msra.mxu0 0
    %4202 = vmatprep.subr.bf16.mxu0 0
    %4203 = vmatpush1.bf16.msra.mxu0 0
    %4204 = vmatprep.subr.bf16.mxu0 0
    %4205 = vmatpush1.bf16.msra.mxu0 0
    %4206 = vmatprep.subr.bf16.mxu0 0
    %4207 = vmatpush1.bf16.msra.mxu0 0
    %4208 = vmatprep.mubr.bf16.mxu0 0
    %4209 = vmatmul.mubr.bf16.gmra.mrb[0].mxu0 %v4126
    %v4210 = vpop.f32.mrb[0].mxu0
    %v4211 = vadd.f32 %v4117, %v4210
    %v4212 = vpop.f32.mrb[0].mxu0
    %v4213 = vpop.f32.mrb[0].mxu0
    %v4214 = vpop.f32.mrb[0].mxu0
    %4215 = vdwg.mxu0
    %4216 = vst [vmem:[#allocation46] sm:$0x3] %v4211
    // Predicated region
    $region234: #{light_lyric_processor.1} parent=1 // pred_check
      _
    $region235: #{light_lyric_processor.1} parent=1 // pred_check_branch
      %4218 = sbr.rel (0) target = $region237
    $region236: #{light_lyric_processor.1} parent=1 // pred_region
      %s4220 = ssub.s32 32, 32
      %4221 = vsyncadd [#allocation4], %s4220
      %s4223 = sshll.u32 [#allocation46], 4
      %s4224 = int_to_ptr.vmem [resolvable:$true] %s4223
      %4226 = dma.vmem_to_hbm [thread:$0]  %s4224, 32, %s61, [#allocation4]
    $region237: #{light_lyric_processor.1} parent=1 // pred_fallthru
      _
    // Predicated region
    $region238: #{light_lyric_processor.1} parent=1 // pred_check
      _
    $region239: #{light_lyric_processor.1} parent=1 // pred_check_branch
      %4228 = sbr.rel (0) target = $region241
    $region240: #{light_lyric_processor.1} parent=1 // pred_region
      %4229 = dma.done [#allocation4], 32
    $region241: #{light_lyric_processor.1} parent=1 // pred_fallthru
      _
    %4230 = vsyncpa [#allocation3], 1
    %4231 = vsyncpa [#allocation6], 1
    %4232 = vsyncpa [#allocation9], 1
    %4233 = vsyncpa [#allocation12], 1
    %4234 = vsyncpa [#allocation15], 1
    %4235 = vsyncpa [#allocation18], 1
    %4236 = vsyncpa [#allocation21], 1
    %4237 = vsyncpa [#allocation24], 1
    %4238 = vsyncpa [#allocation27], 1
    %4239 = vsyncpa [#allocation30], 1
    %4240 = vsyncpa [#allocation33], 1
    %4241 = vsyncpa [#allocation36], 1
    %4242 = vsyncpa [#allocation39], 1
    %4243 = vsyncpa [#allocation42], 1
    %4244 = vsyncpa [#allocation45], 1
    %4245 = vsyncpa [#allocation4], 1

</llo_original>
